<compile_context>
chip_gen: v7x
topology: tpu7x:2x2x1
jax: 0.10.0
libtpu: 0.0.40
codegen_flags: <defaults>
</compile_context>

<pallas_src>
import jax
import jax.numpy as jnp
from jax import lax
from jax.experimental import pallas as pl
from jax.experimental.pallas import tpu as pltpu


def _round_up(x, m):
    return ((x + m - 1) // m) * m


def _itemsize(dt):
    return jnp.dtype(dt).itemsize


def _vmem_capacity_bytes():
    try:
        return int(pltpu.get_tpu_info().vmem_capacity_bytes)
    except Exception:
        return 64 * 1024 * 1024  # conservative default (v7x per-core VMEM)


# ---------------------------------------------------------------------------
# Kernels
# ---------------------------------------------------------------------------

def _matmul_bias_kernel(x_ref, w_ref, b_ref, o_ref):
    # x_ref: (tm, Kpad)  w_ref: (Kpad, E)  b_ref: (1, E) f32  o_ref: (tm, E)
    acc = jnp.dot(x_ref[...], w_ref[...], preferred_element_type=jnp.float32)
    o_ref[...] = (acc + b_ref[...]).astype(o_ref.dtype)


def _make_fused_kernel(C, TI, P, gw, K, compute_dtype):
    rows = TI * gw

    def kernel(x_ref, w_ref, b_ref, o_ref):
        # x_ref: (C, TI*P, W) raw NCHW slab  w_ref: (K, E)  b_ref: (1, E)  o_ref: (rows, E)
        xb = x_ref[...]
        if xb.dtype != compute_dtype:
            xb = xb.astype(compute_dtype)  # cast before the relayout -> half the bytes moved
        # im2col in VMEM: (c, r*P+ph, j*P+pw) -> (r, j, c, ph, pw) -> (rows, K)
        patches = (
            xb.reshape(C, TI, P, gw, P)
            .transpose(1, 3, 0, 2, 4)
            .reshape(rows, K)
        )
        acc = jnp.dot(patches, w_ref[...], preferred_element_type=jnp.float32)
        o_ref[...] = (acc + b_ref[...]).astype(o_ref.dtype)

    return kernel


# ---------------------------------------------------------------------------
# Tile-size heuristics (VMEM-budget and megacore aware)
# ---------------------------------------------------------------------------

def _fused_footprint(C, TI, P, gw, E, K, x_bytes, cd_bytes, out_bytes):
    rows = TI * gw
    x_blk = C * TI * P * _round_up(gw * P, 128) * x_bytes       # one pipeline buffer
    relayout_tmp = (2 * rows * K + 2 * C * TI * P * gw * _round_up(P, 128)) * cd_bytes
    return (2 * x_blk                      # double-buffered activation slab
            + K * E * cd_bytes             # weight (single-buffered)
            + 2 * rows * E * out_bytes     # output tile
            + relayout_tmp + E * 4)


def _pick_ti(B, gh, gw, C, P, E, K, x_bytes, cd_bytes, out_bytes, budget,
             target_rows=256):
    divisors = [d for d in range(1, gh + 1) if gh % d == 0]
    # output block sublane (= TI*gw) must be a multiple of 8 or the full num_patches dim
    valid = [d for d in divisors if (d * gw) % 8 == 0 or d == gh]
    fit = [d for d in valid
           if _fused_footprint(C, d, P, gw, E, K, x_bytes, cd_bytes, out_bytes) <= budget]
    cands = fit if fit else [min(valid)]

    def score(d):
        rows, steps = d * gw, B * (gh // d)
        s = abs(rows - target_rows)
        if steps < 8:                      # keep both v7x TensorCores busy
            s += (8 - steps) * 64
        return s

    return min(cands, key=score)


def _pick_tm(M, Kpad, E, cd_bytes, out_bytes, budget):
    cap_rows = max(16, _round_up(M, 8))

    def footprint(t):
        return (2 * t * Kpad * cd_bytes + 2 * Kpad * E * cd_bytes
                + 2 * t * E * out_bytes + E * 4)

    tm = 16
    for cand in (512, 256, 128, 64, 32, 16):
        t = max(16, min(cand, cap_rows))
        if footprint(t) <= budget:
            tm = t
            break
    # enough grid steps for megacore when the problem is large enough
    while tm > 128 and pl.cdiv(M, tm) < 8:
        tm //= 2
    return max(16, _round_up(tm, 8))


# ---------------------------------------------------------------------------
# pallas_call wrappers
# ---------------------------------------------------------------------------

def _vit_patch_embedding_fused(x, weight, bias, P, out_dtype, compute_dtype):
    B, C, H, W = x.shape
    gh, gw = H // P, W // P
    E, K, NP = weight.shape[0], C * P * P, gh * gw

    cap = _vmem_capacity_bytes()
    TI = _pick_ti(B, gh, gw, C, P, E, K, _itemsize(x.dtype),
                  _itemsize(compute_dtype), _itemsize(out_dtype), int(0.45 * cap))
    rows = TI * gw

    w2 = weight.reshape(E, K).T.astype(compute_dtype)   # (K, E), VMEM-resident
    b2 = bias.reshape(1, E).astype(jnp.float32)

    cost = pl.CostEstimate(
        flops=2 * B * NP * K * E,
        transcendentals=0,
        bytes_accessed=(x.size * _itemsize(x.dtype)
                        + K * E * _itemsize(compute_dtype)
                        + B * NP * E * _itemsize(out_dtype) + E * 4),
    )

    out = pl.pallas_call(
        _make_fused_kernel(C, TI, P, gw, K, compute_dtype),
        out_shape=jax.ShapeDtypeStruct((B, NP, E), out_dtype),
        grid=(B, gh // TI),
        in_specs=[
            # TI patch-rows of the raw NCHW image: all channels, full width.
            pl.BlockSpec((None, C, TI * P, W), lambda b, i: (b, 0, i, 0)),
            # constant index_maps -> fetched once; single-buffered to save VMEM.
            pl.BlockSpec((K, E), lambda b, i: (0, 0), pipeline_mode=pl.Buffered(1)),
            pl.BlockSpec((1, E), lambda b, i: (0, 0), pipeline_mode=pl.Buffered(1)),
        ],
        out_specs=pl.BlockSpec((None, rows, E), lambda b, i: (b, i, 0)),
        compiler_params=pltpu.CompilerParams(
            dimension_semantics=("parallel", "parallel"),
            vmem_limit_bytes=int(min(0.85 * cap, 100 * 1024 * 1024)),
        ),
        cost_estimate=cost,
    )(x, w2, b2)
    # sync here so any residual lowering/runtime issue triggers the prepass fallback
    return jax.block_until_ready(out)


def _vit_patch_embedding_prepass(x, weight, bias, P, out_dtype, compute_dtype, tm=None):
    B, C, H, W = x.shape
    gh, gw = H // P, W // P
    E, K, NP = weight.shape[0], C * P * P, gh * gw
    M = B * NP

    # lane-align K with zero padding (256 preferred on 256-wide MXUs when cheap)
    align = 256 if (_round_up(K, 256) - K) * 20 <= K else 128
    Kpad = _round_up(K, align)

    # Patchify as an XLA pass: (B,C,gh,P,gw,P) -> (B,gh,gw,C,P,P) -> (M, K).
    # The fused path above avoids this extra HBM round-trip.
    xp = x.reshape(B, C, gh, P, gw, P).transpose(0, 2, 4, 1, 3, 5).reshape(M, K)
    xp = xp.astype(compute_dtype)
    w2 = weight.reshape(E, K).T.astype(compute_dtype)
    if Kpad != K:
        xp = jnp.pad(xp, ((0, 0), (0, Kpad - K)))
        w2 = jnp.pad(w2, ((0, Kpad - K), (0, 0)))
    b2 = bias.reshape(1, E).astype(jnp.float32)

    cap = _vmem_capacity_bytes()
    if tm is None:
        tm = _pick_tm(M, Kpad, E, _itemsize(compute_dtype), _itemsize(out_dtype),
                      int(0.45 * cap))
    tm = max(16, _round_up(tm, 8))

    cost = pl.CostEstimate(
        flops=2 * M * Kpad * E,
        transcendentals=0,
        bytes_accessed=(x.size * _itemsize(x.dtype)              # separate patchify pass
                        + 2 * M * Kpad * _itemsize(compute_dtype)
                        + Kpad * E * _itemsize(compute_dtype)
                        + M * E * _itemsize(out_dtype) + E * 4),
    )

    out = pl.pallas_call(
        _matmul_bias_kernel,
        out_shape=jax.ShapeDtypeStruct((M, E), out_dtype),
        grid=(pl.cdiv(M, tm),),
        in_specs=[
            pl.BlockSpec((tm, Kpad), lambda i: (i, 0)),    # streamed patch rows
            pl.BlockSpec((Kpad, E), lambda i: (0, 0)),     # resident weight
            pl.BlockSpec((1, E), lambda i: (0, 0)),        # resident bias
        ],
        out_specs=pl.BlockSpec((tm, E), lambda i: (i, 0)),
        compiler_params=pltpu.CompilerParams(
            dimension_semantics=("parallel",),
            vmem_limit_bytes=int(min(0.85 * cap, 100 * 1024 * 1024)),
            allow_input_fusion=[0],
        ),
        cost_estimate=cost,
    )(xp, w2, b2)
    return out.reshape(B, NP, E)


def vit_patch_embedding(x, weight, bias, patch_size, *, out_dtype=jnp.bfloat16,
                        compute_dtype=jnp.bfloat16, fuse_patchify=True, tm=None):
    """Pallas ViTPatchEmbedding.forward: proj(x).flatten(2).transpose(1, 2).

    Args:
      x:      (B, C, H, W) NCHW, like the PyTorch module.
      weight: (E, C, P, P) Conv2d weight;  bias: (E,).
      out_dtype / compute_dtype: output / MXU dtypes (f32 accumulation always;
        use float32 for both for a parity path).
      fuse_patchify: prefer the in-kernel im2col path (falls back to the XLA
        patchify + matmul kernel if Mosaic rejects the in-VMEM relayout).
        Intended to be called eagerly so the fallback can engage; under jit use
        fuse_patchify=False if the fused path is not supported by the jaxlib.

    Returns: (B, num_patches, E).
    """
    _, _, H, W = x.shape
    P = patch_size
    if H % P != 0 or W % P != 0:
        # TODO(synk): bilinear F.interpolate resize branch (input size != module
        # img_size) is not implemented; the divisible path matches the module.
        raise ValueError(f"Image dims {(H, W)} must be divisible by patch size {P}.")
    if fuse_patchify:
        try:
            return _vit_patch_embedding_fused(x, weight, bias, P, out_dtype, compute_dtype)
        except Exception:
            # Mosaic on this jaxlib could not lower the in-kernel im2col relayout
            # (or the tile did not fit VMEM) -> fall back to the prepass kernel.
            pass
    return _vit_patch_embedding_prepass(x, weight, bias, P, out_dtype, compute_dtype, tm=tm)


# ---------------------------------------------------------------------------
# Reference + self-test
# ---------------------------------------------------------------------------

def _reference(x, weight, bias, patch_size):
    """Pure-JAX f32 reference using a strided conv (matches torch.nn.Conv2d)."""
    y = lax.conv_general_dilated(
        x, weight,
        window_strides=(patch_size, patch_size),
        padding="VALID",
        dimension_numbers=("NCHW", "OIHW", "NCHW"),
    ) + bias.reshape(1, -1, 1, 1)
    B, E, gh, gw = y.shape
    return y.reshape(B, E, gh * gw).transpose(0, 2, 1)


if __name__ == "__main__":
    # Small shapes consistent with the module: patch_size=24, in_chans=9 kept,
    # spatial / embed_dim shrunk.  grid = (4, 3) -> 12 patches per image.
    B, C, H, W, P, E = 2, 9, 96, 72, 24, 256

    key = jax.random.PRNGKey(0)
    kx, kw, kb = jax.random.split(key, 3)
    x = jax.random.normal(kx, (B, C, H, W), dtype=jnp.float32)
    fan_in = C * P * P
    weight = jax.random.normal(kw, (E, C, P, P), dtype=jnp.float32) / jnp.sqrt(fan_in)
    bias = jax.random.normal(kb, (E,), dtype=jnp.float32) * 0.01

    ref = _reference(x, weight, bias, P)
    num_patches = (H // P) * (W // P)

    # Default path: fused in-kernel patchify (auto-fallback to the prepass kernel).
    out = jax.block_until_ready(vit_patch_embedding(x, weight, bias, P))
    assert out.shape == (B, num_patches, E), out.shape
    # bf16 MXU inputs / bf16 output with f32 accumulation -> relaxed tolerance.
    assert jnp.allclose(out.astype(jnp.float32), ref, atol=5e-2, rtol=5e-2), \
        float(jnp.max(jnp.abs(out.astype(jnp.float32) - ref)))

    # Explicit prepass path with a small row tile -> multi-step grid + clipped tail.
    out_pp = jax.block_until_ready(
        vit_patch_embedding(x, weight, bias, P, fuse_patchify=False, tm=16))
    assert out_pp.shape == (B, num_patches, E), out_pp.shape
    assert jnp.allclose(out_pp.astype(jnp.float32), ref, atol=5e-2, rtol=5e-2), \
        float(jnp.max(jnp.abs(out_pp.astype(jnp.float32) - ref)))

    print("KERNEL_OK")
</pallas_src>

<mosaic_0001>
module attributes {stable_mosaic.version = 11 : i64} {
  func.func @kernel(%arg0: i32, %arg1: i32, %arg2: memref<1x9x96x72xf32, #tpu.memory_space<vmem>>, %arg3: memref<5184x256xbf16, #tpu.memory_space<vmem>>, %arg4: memref<1x256xf32, #tpu.memory_space<vmem>>, %arg5: memref<1x12x256xbf16, #tpu.memory_space<vmem>>) attributes {dimension_semantics = [#tpu.dimension_semantics<parallel>, #tpu.dimension_semantics<parallel>], iteration_bounds = array<i64: 2, 1>, scalar_prefetch = 0 : i64, scratch_operands = 0 : i64, tpu.core_type = #tpu.core_type<tc>, window_params = [{transform_indices = @transform_0, window_bounds = array<i64: 1, 9, 96, 72>}, {pipeline_mode = #tpu.pipeline_mode<synchronous>, transform_indices = @transform_1, window_bounds = array<i64: 5184, 256>}, {pipeline_mode = #tpu.pipeline_mode<synchronous>, transform_indices = @transform_2, window_bounds = array<i64: 1, 256>}, {transform_indices = @transform_3, window_bounds = array<i64: 1, 12, 256>}]} {
    %c0 = arith.constant 0 : index
    %c0_0 = arith.constant 0 : index
    %c0_1 = arith.constant 0 : index
    %c0_2 = arith.constant 0 : index
    %0 = vector.load %arg2[%c0, %c0_0, %c0_1, %c0_2] : memref<1x9x96x72xf32, #tpu.memory_space<vmem>>, vector<1x9x96x72xf32>
    %1 = vector.shape_cast %0 : vector<1x9x96x72xf32> to vector<9x96x72xf32>
    %2 = arith.truncf %1 : vector<9x96x72xf32> to vector<9x96x72xbf16>
    %3 = vector.shape_cast %2 : vector<9x96x72xbf16> to vector<9x4x24x3x24xbf16>
    %4 = tpu.transpose %3, [1, 3, 0, 2, 4] : vector<9x4x24x3x24xbf16> -> vector<4x3x9x24x24xbf16>
    %5 = vector.shape_cast %4 : vector<4x3x9x24x24xbf16> to vector<12x5184xbf16>
    %c0_3 = arith.constant 0 : index
    %c0_4 = arith.constant 0 : index
    %6 = vector.load %arg3[%c0_3, %c0_4] : memref<5184x256xbf16, #tpu.memory_space<vmem>>, vector<5184x256xbf16>
    %cst = arith.constant dense<0.000000e+00> : vector<12x256xf32>
    %7 = tpu.matmul %5, %6, %cst {dimension_numbers = #tpu.dot_dimension_numbers<[1], [0], [0], [1], [0, 0, 1, 1], [], []>} : vector<12x5184xbf16>, vector<5184x256xbf16>, vector<12x256xf32> -> vector<12x256xf32>
    %c0_5 = arith.constant 0 : index
    %c0_6 = arith.constant 0 : index
    %8 = vector.load %arg4[%c0_5, %c0_6] : memref<1x256xf32, #tpu.memory_space<vmem>>, vector<1x256xf32>
    %9 = vector.broadcast %8 : vector<1x256xf32> to vector<12x256xf32>
    %10 = arith.addf %7, %9 : vector<12x256xf32>
    %11 = arith.truncf %10 : vector<12x256xf32> to vector<12x256xbf16>
    %c0_7 = arith.constant 0 : index
    %c0_8 = arith.constant 0 : index
    %c0_9 = arith.constant 0 : index
    %12 = vector.load %arg5[%c0_7, %c0_8, %c0_9] : memref<1x12x256xbf16, #tpu.memory_space<vmem>>, vector<1x12x256xbf16>
    %13 = vector.shape_cast %12 : vector<1x12x256xbf16> to vector<12x256xbf16>
    %14 = vector.shape_cast %11 : vector<12x256xbf16> to vector<1x12x256xbf16>
    tpu.vector_store %arg5[%c0_7, %c0_8, %c0_9], %14 {strides = array<i32>} : memref<1x12x256xbf16, #tpu.memory_space<vmem>>, vector<1x12x256xbf16>,
    return
  }
  func.func @transform_0(%arg0: i32, %arg1: i32) -> (i32, i32, i32, i32) {
    %c0_i32 = arith.constant 0 : i32
    %c0_i32_0 = arith.constant 0 : i32
    %c0_i32_1 = arith.constant 0 : i32
    return %arg0, %c0_i32, %arg1, %c0_i32_0 : i32, i32, i32, i32
  }
  func.func @transform_1(%arg0: i32, %arg1: i32) -> (i32, i32) {
    %c0_i32 = arith.constant 0 : i32
    %c0_i32_0 = arith.constant 0 : i32
    %c0_i32_1 = arith.constant 0 : i32
    return %c0_i32, %c0_i32_0 : i32, i32
  }
  func.func @transform_2(%arg0: i32, %arg1: i32) -> (i32, i32) {
    %c0_i32 = arith.constant 0 : i32
    %c0_i32_0 = arith.constant 0 : i32
    %c0_i32_1 = arith.constant 0 : i32
    return %c0_i32, %c0_i32_0 : i32, i32
  }
  func.func @transform_3(%arg0: i32, %arg1: i32) -> (i32, i32, i32) {
    %c0_i32 = arith.constant 0 : i32
    %c0_i32_0 = arith.constant 0 : i32
    return %arg0, %arg1, %c0_i32 : i32, i32, i32
  }
}

module attributes {stable_mosaic.version = 11 : i64} {
  func.func @_matmul_bias_kernel(%arg0: i32, %arg1: memref<24x5376xbf16, #tpu.memory_space<vmem>>, %arg2: memref<5376x256xbf16, #tpu.memory_space<vmem>>, %arg3: memref<1x256xf32, #tpu.memory_space<vmem>>, %arg4: memref<24x256xbf16, #tpu.memory_space<vmem>>) attributes {dimension_semantics = [#tpu.dimension_semantics<parallel>], iteration_bounds = array<i64: 1>, scalar_prefetch = 0 : i64, scratch_operands = 0 : i64, tpu.core_type = #tpu.core_type<tc>, window_params = [{transform_indices = @transform_0, window_bounds = array<i64: 24, 5376>}, {pipeline_mode = #tpu.pipeline_mode<synchronous>, transform_indices = @transform_1, window_bounds = array<i64: 5376, 256>}, {pipeline_mode = #tpu.pipeline_mode<synchronous>, transform_indices = @transform_2, window_bounds = array<i64: 1, 256>}, {transform_indices = @transform_3, window_bounds = array<i64: 24, 256>}]} {
    %c0 = arith.constant 0 : index
    %c0_0 = arith.constant 0 : index
    %0 = vector.load %arg1[%c0, %c0_0] : memref<24x5376xbf16, #tpu.memory_space<vmem>>, vector<24x5376xbf16>
    %c0_1 = arith.constant 0 : index
    %c0_2 = arith.constant 0 : index
    %1 = vector.load %arg2[%c0_1, %c0_2] : memref<5376x256xbf16, #tpu.memory_space<vmem>>, vector<5376x256xbf16>
    %cst = arith.constant dense<0.000000e+00> : vector<24x256xf32>
    %2 = tpu.matmul %0, %1, %cst {dimension_numbers = #tpu.dot_dimension_numbers<[1], [0], [0], [1], [0, 0, 1, 1], [], []>} : vector<24x5376xbf16>, vector<5376x256xbf16>, vector<24x256xf32> -> vector<24x256xf32>
    %c0_3 = arith.constant 0 : index
    %c0_4 = arith.constant 0 : index
    %3 = vector.load %arg3[%c0_3, %c0_4] : memref<1x256xf32, #tpu.memory_space<vmem>>, vector<1x256xf32>
    %4 = vector.broadcast %3 : vector<1x256xf32> to vector<24x256xf32>
    %5 = arith.addf %2, %4 : vector<24x256xf32>
    %6 = arith.truncf %5 : vector<24x256xf32> to vector<24x256xbf16>
    %c0_5 = arith.constant 0 : index
    %c0_6 = arith.constant 0 : index
    %7 = vector.load %arg4[%c0_5, %c0_6] : memref<24x256xbf16, #tpu.memory_space<vmem>>, vector<24x256xbf16>
    tpu.vector_store %arg4[%c0_5, %c0_6], %6 {strides = array<i32>} : memref<24x256xbf16, #tpu.memory_space<vmem>>, vector<24x256xbf16>,
    return
  }
  func.func @transform_0(%arg0: i32) -> (i32, i32) {
    %c0_i32 = arith.constant 0 : i32
    %c0_i32_0 = arith.constant 0 : i32
    return %arg0, %c0_i32 : i32, i32
  }
  func.func @transform_1(%arg0: i32) -> (i32, i32) {
    %c0_i32 = arith.constant 0 : i32
    %c0_i32_0 = arith.constant 0 : i32
    %c0_i32_1 = arith.constant 0 : i32
    return %c0_i32, %c0_i32_0 : i32, i32
  }
  func.func @transform_2(%arg0: i32) -> (i32, i32) {
    %c0_i32 = arith.constant 0 : i32
    %c0_i32_0 = arith.constant 0 : i32
    %c0_i32_1 = arith.constant 0 : i32
    return %c0_i32, %c0_i32_0 : i32, i32
  }
  func.func @transform_3(%arg0: i32) -> (i32, i32) {
    %c0_i32 = arith.constant 0 : i32
    %c0_i32_0 = arith.constant 0 : i32
    return %arg0, %c0_i32 : i32, i32
  }
}

</mosaic_0001>

<llo_original>
// kernel: tpu_custom_call.1
$region0: #{tpu_custom_call.1}
  #allocation0 [shape = 'u32[]', space=smem, size = 0x4, offset = 0x4, fixed_abs, tag = 'smem constant byte address 0x4 - core index']
  #allocation1 [shape = 'u32[144,128]{1,0:T(1,128)}', space=vmem, size = 0x12000, scoped, tag = 'internal scratch']
  %s0 = inlined_call_operand.hbm [shape: bf16[24,5376], index: 0, kind: input, shape index: {}]
  %s1 = inlined_call_operand.hbm [shape: bf16[5376,256], index: 1, kind: input, shape index: {}]
  %s2 = inlined_call_operand.hbm [shape: f32[1,256], index: 2, kind: input, shape index: {}]
  %s3 = inlined_call_operand.hbm [shape: bf16[24,256], index: 3, kind: output, shape index: {}]
  %s4 = sld [smem:[#allocation0]]
  $region34: #{tpu_custom_call.1} parent=0
    _
  %s6 = ssub.s32 1, %s4
  %s7 = scalar_select 0, %s6, %s4
  $region1: #{tpu_custom_call.1} parent=0
    #allocation2 [shape = 'u8[258048]{0}', space=vmem, size = 0x3f000, scoped, tag = 'input window, operand 0, single buffered']
    #allocation3 [shape = 's32[1]{0}', space=sflag, size = 0x4, scoped, tag = 'scoped memory for tpu_custom_call.1']
    #allocation4 [shape = 's32[1]{0}', space=sflag, size = 0x4, scoped, tag = 'scoped memory for tpu_custom_call.1']
    #allocation5 [shape = 'u8[2752512]{0}', space=vmem, size = 0x2a0000, scoped, tag = 'input window, operand 1, single buffered']
    #allocation6 [shape = 's32[1]{0}', space=sflag, size = 0x4, scoped, tag = 'scoped memory for tpu_custom_call.1']
    #allocation7 [shape = 'u8[1024]{0}', space=vmem, size = 0x400, scoped, tag = 'input window, operand 2, single buffered']
    #allocation8 [shape = 'u8[12288]{0}', space=vmem, size = 0x3000, scoped, tag = 'output window, operand 0, single buffered']
    %8 = vsyncpa [#allocation3], 0
    %9 = vsyncpa [#allocation6], 0
    %10 = vsyncpa [#allocation4], 0
    // Predicated region
    $region2: #{tpu_custom_call.1} parent=1 // pred_check
      _
    $region3: #{tpu_custom_call.1} parent=1 // pred_check_branch
      %12 = sbr.rel (0) target = $region5
    $region4: #{tpu_custom_call.1} parent=1 // pred_region
      %s14 = ssub.s32 8064, 8064
      %15 = vsyncadd [#allocation3], %s14
      %s16 = sshll.u32 [#allocation2], 4
      %s17 = int_to_ptr.vmem [resolvable:$true] %s16
      %22 = dma.hbm_to_vmem [thread:$0]  %s0, 8064, %s17, [#allocation3], 2688, 2688, 168
    $region5: #{tpu_custom_call.1} parent=1 // pred_fallthru
      _
    // Predicated region
    $region6: #{tpu_custom_call.1} parent=1 // pred_check
      _
    $region7: #{tpu_custom_call.1} parent=1 // pred_check_branch
      %24 = sbr.rel (0) target = $region9
    $region8: #{tpu_custom_call.1} parent=1 // pred_region
      %s26 = ssub.s32 86016, 86016
      %27 = vsyncadd [#allocation6], %s26
      %s28 = sshll.u32 [#allocation5], 4
      %s29 = int_to_ptr.vmem [resolvable:$true] %s28
      %34 = dma.hbm_to_vmem [thread:$0]  %s1, 86016, %s29, [#allocation6], 128, 128, 8
    $region9: #{tpu_custom_call.1} parent=1 // pred_fallthru
      _
    // Predicated region
    $region10: #{tpu_custom_call.1} parent=1 // pred_check
      _
    $region11: #{tpu_custom_call.1} parent=1 // pred_check_branch
      %36 = sbr.rel (0) target = $region13
    $region12: #{tpu_custom_call.1} parent=1 // pred_region
      %s38 = ssub.s32 32, 32
      %39 = vsyncadd [#allocation6], %s38
      %s41 = sshll.u32 [#allocation7], 4
      %s42 = int_to_ptr.vmem [resolvable:$true] %s41
      %44 = dma.hbm_to_vmem [thread:$0]  %s2, 32, %s42, [#allocation6]
    $region13: #{tpu_custom_call.1} parent=1 // pred_fallthru
      _
    // Predicated region
    $region14: #{tpu_custom_call.1} parent=1 // pred_check
      _
    $region15: #{tpu_custom_call.1} parent=1 // pred_check_branch
      %46 = sbr.rel (0) target = $region17
    $region16: #{tpu_custom_call.1} parent=1 // pred_region
      %47 = dma.done [#allocation3], 8064
    $region17: #{tpu_custom_call.1} parent=1 // pred_fallthru
      _
    // Predicated region
    $region18: #{tpu_custom_call.1} parent=1 // pred_check
      _
    $region19: #{tpu_custom_call.1} parent=1 // pred_check_branch
      %49 = sbr.rel (0) target = $region21
    $region20: #{tpu_custom_call.1} parent=1 // pred_region
      %50 = dma.done [#allocation6], 86016
    $region21: #{tpu_custom_call.1} parent=1 // pred_fallthru
      _
    // Predicated region
    $region22: #{tpu_custom_call.1} parent=1 // pred_check
      _
    $region23: #{tpu_custom_call.1} parent=1 // pred_check_branch
      %52 = sbr.rel (0) target = $region25
    $region24: #{tpu_custom_call.1} parent=1 // pred_region
      %53 = dma.done [#allocation6], 32
    $region25: #{tpu_custom_call.1} parent=1 // pred_fallthru
      _
    %v54 = vld [vmem:[#allocation2] sm:$0xff]
    %v55 = vld [vmem:[#allocation2 + $0x8] sm:$0xff]
    %v56 = vld [vmem:[#allocation2 + $0x10] sm:$0xff]
    %v57 = vld [vmem:[#allocation2 + $0x18] sm:$0xff]
    %v58 = vld [vmem:[#allocation2 + $0x20] sm:$0xff]
    %v59 = vld [vmem:[#allocation2 + $0x28] sm:$0xff]
    %v60 = vld [vmem:[#allocation2 + $0x30] sm:$0xff]
    %v61 = vld [vmem:[#allocation2 + $0x38] sm:$0xff]
    %v62 = vld [vmem:[#allocation2 + $0x40] sm:$0xff]
    %v63 = vld [vmem:[#allocation2 + $0x48] sm:$0xff]
    %v64 = vld [vmem:[#allocation2 + $0x50] sm:$0xff]
    %v65 = vld [vmem:[#allocation2 + $0x58] sm:$0xff]
    %v66 = vld [vmem:[#allocation2 + $0x60] sm:$0xff]
    %v67 = vld [vmem:[#allocation2 + $0x68] sm:$0xff]
    %v68 = vld [vmem:[#allocation2 + $0x70] sm:$0xff]
    %v69 = vld [vmem:[#allocation2 + $0x78] sm:$0xff]
    %v70 = vld [vmem:[#allocation2 + $0x80] sm:$0xff]
    %v71 = vld [vmem:[#allocation2 + $0x88] sm:$0xff]
    %v72 = vld [vmem:[#allocation2 + $0x90] sm:$0xff]
    %v73 = vld [vmem:[#allocation2 + $0x98] sm:$0xff]
    %v74 = vld [vmem:[#allocation2 + $0xa0] sm:$0xff]
    %v75 = vld [vmem:[#allocation2 + $0xa8] sm:$0xff]
    %v76 = vld [vmem:[#allocation2 + $0xb0] sm:$0xff]
    %v77 = vld [vmem:[#allocation2 + $0xb8] sm:$0xff]
    %v78 = vld [vmem:[#allocation2 + $0xc0] sm:$0xff]
    %v79 = vld [vmem:[#allocation2 + $0xc8] sm:$0xff]
    %v80 = vld [vmem:[#allocation2 + $0xd0] sm:$0xff]
    %v81 = vld [vmem:[#allocation2 + $0xd8] sm:$0xff]
    %v82 = vld [vmem:[#allocation2 + $0xe0] sm:$0xff]
    %v83 = vld [vmem:[#allocation2 + $0xe8] sm:$0xff]
    %v84 = vld [vmem:[#allocation2 + $0xf0] sm:$0xff]
    %v85 = vld [vmem:[#allocation2 + $0xf8] sm:$0xff]
    %v86 = vld [vmem:[#allocation2 + $0x100] sm:$0xff]
    %v87 = vld [vmem:[#allocation2 + $0x108] sm:$0xff]
    %v88 = vld [vmem:[#allocation2 + $0x110] sm:$0xff]
    %v89 = vld [vmem:[#allocation2 + $0x118] sm:$0xff]
    %v90 = vld [vmem:[#allocation2 + $0x120] sm:$0xff]
    %v91 = vld [vmem:[#allocation2 + $0x128] sm:$0xff]
    %v92 = vld [vmem:[#allocation2 + $0x130] sm:$0xff]
    %v93 = vld [vmem:[#allocation2 + $0x138] sm:$0xff]
    %v94 = vld [vmem:[#allocation2 + $0x140] sm:$0xff]
    %v95 = vld [vmem:[#allocation2 + $0x148] sm:$0xff]
    %v96 = vld [vmem:[#allocation2 + $0x150] sm:$0xff]
    %v97 = vld [vmem:[#allocation2 + $0x158] sm:$0xff]
    %v98 = vld [vmem:[#allocation2 + $0x160] sm:$0xff]
    %v99 = vld [vmem:[#allocation2 + $0x168] sm:$0xff]
    %v100 = vld [vmem:[#allocation2 + $0x170] sm:$0xff]
    %v101 = vld [vmem:[#allocation2 + $0x178] sm:$0xff]
    %v102 = vld [vmem:[#allocation2 + $0x180] sm:$0xff]
    %v103 = vld [vmem:[#allocation2 + $0x188] sm:$0xff]
    %v104 = vld [vmem:[#allocation2 + $0x190] sm:$0xff]
    %v105 = vld [vmem:[#allocation2 + $0x198] sm:$0xff]
    %v106 = vld [vmem:[#allocation2 + $0x1a0] sm:$0xff]
    %v107 = vld [vmem:[#allocation2 + $0x1a8] sm:$0xff]
    %v108 = vld [vmem:[#allocation2 + $0x1b0] sm:$0xff]
    %v109 = vld [vmem:[#allocation2 + $0x1b8] sm:$0xff]
    %v110 = vld [vmem:[#allocation2 + $0x1c0] sm:$0xff]
    %v111 = vld [vmem:[#allocation2 + $0x1c8] sm:$0xff]
    %v112 = vld [vmem:[#allocation2 + $0x1d0] sm:$0xff]
    %v113 = vld [vmem:[#allocation2 + $0x1d8] sm:$0xff]
    %v114 = vld [vmem:[#allocation2 + $0x1e0] sm:$0xff]
    %v115 = vld [vmem:[#allocation2 + $0x1e8] sm:$0xff]
    %v116 = vld [vmem:[#allocation2 + $0x1f0] sm:$0xff]
    %v117 = vld [vmem:[#allocation5] sm:$0xff]
    %v118 = vld [vmem:[#allocation5 + $0x8] sm:$0xff]
    %v119 = vld [vmem:[#allocation5 + $0x10] sm:$0xff]
    %v120 = vld [vmem:[#allocation5 + $0x18] sm:$0xff]
    %v121 = vld [vmem:[#allocation5 + $0x20] sm:$0xff]
    %v122 = vld [vmem:[#allocation5 + $0x28] sm:$0xff]
    %v123 = vld [vmem:[#allocation5 + $0x30] sm:$0xff]
    %v124 = vld [vmem:[#allocation5 + $0x38] sm:$0xff]
    %v125 = vld [vmem:[#allocation5 + $0x40] sm:$0xff]
    %v126 = vld [vmem:[#allocation5 + $0x48] sm:$0xff]
    %v127 = vld [vmem:[#allocation5 + $0x50] sm:$0xff]
    %v128 = vld [vmem:[#allocation5 + $0x58] sm:$0xff]
    %v129 = vld [vmem:[#allocation5 + $0x60] sm:$0xff]
    %v130 = vld [vmem:[#allocation5 + $0x68] sm:$0xff]
    %v131 = vld [vmem:[#allocation5 + $0x70] sm:$0xff]
    %v132 = vld [vmem:[#allocation5 + $0x78] sm:$0xff]
    %v133 = vld [vmem:[#allocation5 + $0x80] sm:$0xff]
    %v134 = vld [vmem:[#allocation5 + $0x88] sm:$0xff]
    %v135 = vld [vmem:[#allocation5 + $0x90] sm:$0xff]
    %v136 = vld [vmem:[#allocation5 + $0x98] sm:$0xff]
    %v137 = vld [vmem:[#allocation5 + $0xa0] sm:$0xff]
    %v138 = vld [vmem:[#allocation5 + $0xa8] sm:$0xff]
    %v139 = vld [vmem:[#allocation5 + $0xb0] sm:$0xff]
    %v140 = vld [vmem:[#allocation5 + $0xb8] sm:$0xff]
    %v141 = vld [vmem:[#allocation5 + $0xc0] sm:$0xff]
    %v142 = vld [vmem:[#allocation5 + $0xc8] sm:$0xff]
    %v143 = vld [vmem:[#allocation5 + $0xd0] sm:$0xff]
    %v144 = vld [vmem:[#allocation5 + $0xd8] sm:$0xff]
    %v145 = vld [vmem:[#allocation5 + $0xe0] sm:$0xff]
    %v146 = vld [vmem:[#allocation5 + $0xe8] sm:$0xff]
    %v147 = vld [vmem:[#allocation5 + $0xf0] sm:$0xff]
    %v148 = vld [vmem:[#allocation5 + $0xf8] sm:$0xff]
    %v149 = vld [vmem:[#allocation5 + $0x100] sm:$0xff]
    %v150 = vld [vmem:[#allocation5 + $0x108] sm:$0xff]
    %v151 = vld [vmem:[#allocation5 + $0x110] sm:$0xff]
    %v152 = vld [vmem:[#allocation5 + $0x118] sm:$0xff]
    %v153 = vld [vmem:[#allocation5 + $0x120] sm:$0xff]
    %v154 = vld [vmem:[#allocation5 + $0x128] sm:$0xff]
    %v155 = vld [vmem:[#allocation5 + $0x130] sm:$0xff]
    %v156 = vld [vmem:[#allocation5 + $0x138] sm:$0xff]
    %v157 = vld [vmem:[#allocation5 + $0x140] sm:$0xff]
    %v158 = vld [vmem:[#allocation5 + $0x148] sm:$0xff]
    %v159 = vld [vmem:[#allocation5 + $0x150] sm:$0xff]
    %v160 = vld [vmem:[#allocation5 + $0x158] sm:$0xff]
    %v161 = vld [vmem:[#allocation5 + $0x160] sm:$0xff]
    %v162 = vld [vmem:[#allocation5 + $0x168] sm:$0xff]
    %v163 = vld [vmem:[#allocation5 + $0x170] sm:$0xff]
    %v164 = vld [vmem:[#allocation5 + $0x178] sm:$0xff]
    %v165 = vld [vmem:[#allocation5 + $0x180] sm:$0xff]
    %v166 = vld [vmem:[#allocation5 + $0x188] sm:$0xff]
    %v167 = vld [vmem:[#allocation5 + $0x190] sm:$0xff]
    %v168 = vld [vmem:[#allocation5 + $0x198] sm:$0xff]
    %v169 = vld [vmem:[#allocation5 + $0x1a0] sm:$0xff]
    %v170 = vld [vmem:[#allocation5 + $0x1a8] sm:$0xff]
    %v171 = vld [vmem:[#allocation5 + $0x1b0] sm:$0xff]
    %v172 = vld [vmem:[#allocation5 + $0x1b8] sm:$0xff]
    %v173 = vld [vmem:[#allocation5 + $0x1c0] sm:$0xff]
    %v174 = vld [vmem:[#allocation5 + $0x1c8] sm:$0xff]
    %v175 = vld [vmem:[#allocation5 + $0x1d0] sm:$0xff]
    %v176 = vld [vmem:[#allocation5 + $0x1d8] sm:$0xff]
    %v177 = vld [vmem:[#allocation5 + $0x1e0] sm:$0xff]
    %v178 = vld [vmem:[#allocation5 + $0x1e8] sm:$0xff]
    %v179 = vld [vmem:[#allocation5 + $0x1f0] sm:$0xff]
    %v180 = vld [vmem:[#allocation5 + $0x1f8] sm:$0xff]
    %v181 = vld [vmem:[#allocation5 + $0x200] sm:$0xff]
    %v182 = vld [vmem:[#allocation5 + $0x208] sm:$0xff]
    %v183 = vld [vmem:[#allocation5 + $0x210] sm:$0xff]
    %v184 = vld [vmem:[#allocation5 + $0x218] sm:$0xff]
    %v185 = vld [vmem:[#allocation5 + $0x220] sm:$0xff]
    %v186 = vld [vmem:[#allocation5 + $0x228] sm:$0xff]
    %v187 = vld [vmem:[#allocation5 + $0x230] sm:$0xff]
    %v188 = vld [vmem:[#allocation5 + $0x238] sm:$0xff]
    %v189 = vld [vmem:[#allocation5 + $0x240] sm:$0xff]
    %v190 = vld [vmem:[#allocation5 + $0x248] sm:$0xff]
    %v191 = vld [vmem:[#allocation5 + $0x250] sm:$0xff]
    %v192 = vld [vmem:[#allocation5 + $0x258] sm:$0xff]
    %v193 = vld [vmem:[#allocation5 + $0x260] sm:$0xff]
    %v194 = vld [vmem:[#allocation5 + $0x268] sm:$0xff]
    %v195 = vld [vmem:[#allocation5 + $0x270] sm:$0xff]
    %v196 = vld [vmem:[#allocation5 + $0x278] sm:$0xff]
    %v197 = vld [vmem:[#allocation5 + $0x280] sm:$0xff]
    %v198 = vld [vmem:[#allocation5 + $0x288] sm:$0xff]
    %v199 = vld [vmem:[#allocation5 + $0x290] sm:$0xff]
    %v200 = vld [vmem:[#allocation5 + $0x298] sm:$0xff]
    %v201 = vld [vmem:[#allocation5 + $0x2a0] sm:$0xff]
    %v202 = vld [vmem:[#allocation5 + $0x2a8] sm:$0xff]
    %v203 = vld [vmem:[#allocation5 + $0x2b0] sm:$0xff]
    %v204 = vld [vmem:[#allocation5 + $0x2b8] sm:$0xff]
    %v205 = vld [vmem:[#allocation5 + $0x2c0] sm:$0xff]
    %v206 = vld [vmem:[#allocation5 + $0x2c8] sm:$0xff]
    %v207 = vld [vmem:[#allocation5 + $0x2d0] sm:$0xff]
    %v208 = vld [vmem:[#allocation5 + $0x2d8] sm:$0xff]
    %v209 = vld [vmem:[#allocation5 + $0x2e0] sm:$0xff]
    %v210 = vld [vmem:[#allocation5 + $0x2e8] sm:$0xff]
    %v211 = vld [vmem:[#allocation5 + $0x2f0] sm:$0xff]
    %v212 = vld [vmem:[#allocation5 + $0x2f8] sm:$0xff]
    %v213 = vld [vmem:[#allocation5 + $0x300] sm:$0xff]
    %v214 = vld [vmem:[#allocation5 + $0x308] sm:$0xff]
    %v215 = vld [vmem:[#allocation5 + $0x310] sm:$0xff]
    %v216 = vld [vmem:[#allocation5 + $0x318] sm:$0xff]
    %v217 = vld [vmem:[#allocation5 + $0x320] sm:$0xff]
    %v218 = vld [vmem:[#allocation5 + $0x328] sm:$0xff]
    %v219 = vld [vmem:[#allocation5 + $0x330] sm:$0xff]
    %v220 = vld [vmem:[#allocation5 + $0x338] sm:$0xff]
    %v221 = vld [vmem:[#allocation5 + $0x340] sm:$0xff]
    %v222 = vld [vmem:[#allocation5 + $0x348] sm:$0xff]
    %v223 = vld [vmem:[#allocation5 + $0x350] sm:$0xff]
    %v224 = vld [vmem:[#allocation5 + $0x358] sm:$0xff]
    %v225 = vld [vmem:[#allocation5 + $0x360] sm:$0xff]
    %v226 = vld [vmem:[#allocation5 + $0x368] sm:$0xff]
    %v227 = vld [vmem:[#allocation5 + $0x370] sm:$0xff]
    %v228 = vld [vmem:[#allocation5 + $0x378] sm:$0xff]
    %v229 = vld [vmem:[#allocation5 + $0x380] sm:$0xff]
    %v230 = vld [vmem:[#allocation5 + $0x388] sm:$0xff]
    %v231 = vld [vmem:[#allocation5 + $0x390] sm:$0xff]
    %v232 = vld [vmem:[#allocation5 + $0x398] sm:$0xff]
    %v233 = vld [vmem:[#allocation5 + $0x3a0] sm:$0xff]
    %v234 = vld [vmem:[#allocation5 + $0x3a8] sm:$0xff]
    %v235 = vld [vmem:[#allocation5 + $0x3b0] sm:$0xff]
    %v236 = vld [vmem:[#allocation5 + $0x3b8] sm:$0xff]
    %v237 = vld [vmem:[#allocation5 + $0x3c0] sm:$0xff]
    %v238 = vld [vmem:[#allocation5 + $0x3c8] sm:$0xff]
    %v239 = vld [vmem:[#allocation5 + $0x3d0] sm:$0xff]
    %v240 = vld [vmem:[#allocation5 + $0x3d8] sm:$0xff]
    %v241 = vld [vmem:[#allocation5 + $0x3e0] sm:$0xff]
    %v242 = vld [vmem:[#allocation5 + $0x3e8] sm:$0xff]
    %v243 = vld [vmem:[#allocation5 + $0x3f0] sm:$0xff]
    %v244 = vld [vmem:[#allocation5 + $0x3f8] sm:$0xff]
    %v245 = vld [vmem:[#allocation5 + $0x400] sm:$0xff]
    %v246 = vld [vmem:[#allocation5 + $0x408] sm:$0xff]
    %v247 = vld [vmem:[#allocation5 + $0x410] sm:$0xff]
    %v248 = vld [vmem:[#allocation5 + $0x418] sm:$0xff]
    %v249 = vld [vmem:[#allocation5 + $0x420] sm:$0xff]
    %v250 = vld [vmem:[#allocation5 + $0x428] sm:$0xff]
    %v251 = vld [vmem:[#allocation5 + $0x430] sm:$0xff]
    %v252 = vld [vmem:[#allocation5 + $0x438] sm:$0xff]
    %v253 = vld [vmem:[#allocation5 + $0x440] sm:$0xff]
    %v254 = vld [vmem:[#allocation5 + $0x448] sm:$0xff]
    %v255 = vld [vmem:[#allocation5 + $0x450] sm:$0xff]
    %v256 = vld [vmem:[#allocation5 + $0x458] sm:$0xff]
    %v257 = vld [vmem:[#allocation5 + $0x460] sm:$0xff]
    %v258 = vld [vmem:[#allocation5 + $0x468] sm:$0xff]
    %v259 = vld [vmem:[#allocation5 + $0x470] sm:$0xff]
    %v260 = vld [vmem:[#allocation5 + $0x478] sm:$0xff]
    %v261 = vld [vmem:[#allocation5 + $0x480] sm:$0xff]
    %v262 = vld [vmem:[#allocation5 + $0x488] sm:$0xff]
    %v263 = vld [vmem:[#allocation5 + $0x490] sm:$0xff]
    %v264 = vld [vmem:[#allocation5 + $0x498] sm:$0xff]
    %v265 = vld [vmem:[#allocation5 + $0x4a0] sm:$0xff]
    %v266 = vld [vmem:[#allocation5 + $0x4a8] sm:$0xff]
    %v267 = vld [vmem:[#allocation5 + $0x4b0] sm:$0xff]
    %v268 = vld [vmem:[#allocation5 + $0x4b8] sm:$0xff]
    %v269 = vld [vmem:[#allocation5 + $0x4c0] sm:$0xff]
    %v270 = vld [vmem:[#allocation5 + $0x4c8] sm:$0xff]
    %v271 = vld [vmem:[#allocation5 + $0x4d0] sm:$0xff]
    %v272 = vld [vmem:[#allocation5 + $0x4d8] sm:$0xff]
    %v273 = vld [vmem:[#allocation5 + $0x4e0] sm:$0xff]
    %v274 = vld [vmem:[#allocation5 + $0x4e8] sm:$0xff]
    %v275 = vld [vmem:[#allocation5 + $0x4f0] sm:$0xff]
    %v276 = vld [vmem:[#allocation5 + $0x4f8] sm:$0xff]
    %v277 = vld [vmem:[#allocation5 + $0x500] sm:$0xff]
    %v278 = vld [vmem:[#allocation5 + $0x508] sm:$0xff]
    %v279 = vld [vmem:[#allocation5 + $0x510] sm:$0xff]
    %v280 = vld [vmem:[#allocation5 + $0x518] sm:$0xff]
    %v281 = vld [vmem:[#allocation5 + $0x520] sm:$0xff]
    %v282 = vld [vmem:[#allocation5 + $0x528] sm:$0xff]
    %v283 = vld [vmem:[#allocation5 + $0x530] sm:$0xff]
    %v284 = vld [vmem:[#allocation5 + $0x538] sm:$0xff]
    %v285 = vld [vmem:[#allocation5 + $0x540] sm:$0xff]
    %v286 = vld [vmem:[#allocation5 + $0x548] sm:$0xff]
    %v287 = vld [vmem:[#allocation5 + $0x550] sm:$0xff]
    %v288 = vld [vmem:[#allocation5 + $0x558] sm:$0xff]
    %v289 = vld [vmem:[#allocation5 + $0x560] sm:$0xff]
    %v290 = vld [vmem:[#allocation5 + $0x568] sm:$0xff]
    %v291 = vld [vmem:[#allocation5 + $0x570] sm:$0xff]
    %v292 = vld [vmem:[#allocation5 + $0x578] sm:$0xff]
    %v293 = vld [vmem:[#allocation5 + $0x580] sm:$0xff]
    %v294 = vld [vmem:[#allocation5 + $0x588] sm:$0xff]
    %v295 = vld [vmem:[#allocation5 + $0x590] sm:$0xff]
    %v296 = vld [vmem:[#allocation5 + $0x598] sm:$0xff]
    %v297 = vld [vmem:[#allocation5 + $0x5a0] sm:$0xff]
    %v298 = vld [vmem:[#allocation5 + $0x5a8] sm:$0xff]
    %v299 = vld [vmem:[#allocation5 + $0x5b0] sm:$0xff]
    %v300 = vld [vmem:[#allocation5 + $0x5b8] sm:$0xff]
    %v301 = vld [vmem:[#allocation5 + $0x5c0] sm:$0xff]
    %v302 = vld [vmem:[#allocation5 + $0x5c8] sm:$0xff]
    %v303 = vld [vmem:[#allocation5 + $0x5d0] sm:$0xff]
    %v304 = vld [vmem:[#allocation5 + $0x5d8] sm:$0xff]
    %v305 = vld [vmem:[#allocation5 + $0x5e0] sm:$0xff]
    %v306 = vld [vmem:[#allocation5 + $0x5e8] sm:$0xff]
    %v307 = vld [vmem:[#allocation5 + $0x5f0] sm:$0xff]
    %v308 = vld [vmem:[#allocation5 + $0x5f8] sm:$0xff]
    %v309 = vld [vmem:[#allocation5 + $0x600] sm:$0xff]
    %v310 = vld [vmem:[#allocation5 + $0x608] sm:$0xff]
    %v311 = vld [vmem:[#allocation5 + $0x610] sm:$0xff]
    %v312 = vld [vmem:[#allocation5 + $0x618] sm:$0xff]
    %v313 = vld [vmem:[#allocation5 + $0x620] sm:$0xff]
    %v314 = vld [vmem:[#allocation5 + $0x628] sm:$0xff]
    %v315 = vld [vmem:[#allocation5 + $0x630] sm:$0xff]
    %v316 = vld [vmem:[#allocation5 + $0x638] sm:$0xff]
    %v317 = vld [vmem:[#allocation5 + $0x640] sm:$0xff]
    %v318 = vld [vmem:[#allocation5 + $0x648] sm:$0xff]
    %v319 = vld [vmem:[#allocation5 + $0x650] sm:$0xff]
    %v320 = vld [vmem:[#allocation5 + $0x658] sm:$0xff]
    %v321 = vld [vmem:[#allocation5 + $0x660] sm:$0xff]
    %v322 = vld [vmem:[#allocation5 + $0x668] sm:$0xff]
    %v323 = vld [vmem:[#allocation5 + $0x670] sm:$0xff]
    %v324 = vld [vmem:[#allocation5 + $0x678] sm:$0xff]
    %v325 = vld [vmem:[#allocation5 + $0x680] sm:$0xff]
    %v326 = vld [vmem:[#allocation5 + $0x688] sm:$0xff]
    %v327 = vld [vmem:[#allocation5 + $0x690] sm:$0xff]
    %v328 = vld [vmem:[#allocation5 + $0x698] sm:$0xff]
    %v329 = vld [vmem:[#allocation5 + $0x6a0] sm:$0xff]
    %v330 = vld [vmem:[#allocation5 + $0x6a8] sm:$0xff]
    %v331 = vld [vmem:[#allocation5 + $0x6b0] sm:$0xff]
    %v332 = vld [vmem:[#allocation5 + $0x6b8] sm:$0xff]
    %v333 = vld [vmem:[#allocation5 + $0x6c0] sm:$0xff]
    %v334 = vld [vmem:[#allocation5 + $0x6c8] sm:$0xff]
    %v335 = vld [vmem:[#allocation5 + $0x6d0] sm:$0xff]
    %v336 = vld [vmem:[#allocation5 + $0x6d8] sm:$0xff]
    %v337 = vld [vmem:[#allocation5 + $0x6e0] sm:$0xff]
    %v338 = vld [vmem:[#allocation5 + $0x6e8] sm:$0xff]
    %v339 = vld [vmem:[#allocation5 + $0x6f0] sm:$0xff]
    %v340 = vld [vmem:[#allocation5 + $0x6f8] sm:$0xff]
    %v341 = vld [vmem:[#allocation5 + $0x700] sm:$0xff]
    %v342 = vld [vmem:[#allocation5 + $0x708] sm:$0xff]
    %v343 = vld [vmem:[#allocation5 + $0x710] sm:$0xff]
    %v344 = vld [vmem:[#allocation5 + $0x718] sm:$0xff]
    %v345 = vld [vmem:[#allocation5 + $0x720] sm:$0xff]
    %v346 = vld [vmem:[#allocation5 + $0x728] sm:$0xff]
    %v347 = vld [vmem:[#allocation5 + $0x730] sm:$0xff]
    %v348 = vld [vmem:[#allocation5 + $0x738] sm:$0xff]
    %v349 = vld [vmem:[#allocation5 + $0x740] sm:$0xff]
    %v350 = vld [vmem:[#allocation5 + $0x748] sm:$0xff]
    %v351 = vld [vmem:[#allocation5 + $0x750] sm:$0xff]
    %v352 = vld [vmem:[#allocation5 + $0x758] sm:$0xff]
    %v353 = vld [vmem:[#allocation5 + $0x760] sm:$0xff]
    %v354 = vld [vmem:[#allocation5 + $0x768] sm:$0xff]
    %v355 = vld [vmem:[#allocation5 + $0x770] sm:$0xff]
    %v356 = vld [vmem:[#allocation5 + $0x778] sm:$0xff]
    %v357 = vld [vmem:[#allocation5 + $0x780] sm:$0xff]
    %v358 = vld [vmem:[#allocation5 + $0x788] sm:$0xff]
    %v359 = vld [vmem:[#allocation5 + $0x790] sm:$0xff]
    %v360 = vld [vmem:[#allocation5 + $0x798] sm:$0xff]
    %v361 = vld [vmem:[#allocation5 + $0x7a0] sm:$0xff]
    %v362 = vld [vmem:[#allocation5 + $0x7a8] sm:$0xff]
    %v363 = vld [vmem:[#allocation5 + $0x7b0] sm:$0xff]
    %v364 = vld [vmem:[#allocation5 + $0x7b8] sm:$0xff]
    %v365 = vld [vmem:[#allocation5 + $0x7c0] sm:$0xff]
    %v366 = vld [vmem:[#allocation5 + $0x7c8] sm:$0xff]
    %v367 = vld [vmem:[#allocation5 + $0x7d0] sm:$0xff]
    %v368 = vld [vmem:[#allocation5 + $0x7d8] sm:$0xff]
    %v369 = vld [vmem:[#allocation5 + $0x7e0] sm:$0xff]
    %v370 = vld [vmem:[#allocation5 + $0x7e8] sm:$0xff]
    %v371 = vld [vmem:[#allocation5 + $0x7f0] sm:$0xff]
    %v372 = vld [vmem:[#allocation5 + $0x7f8] sm:$0xff]
    %v373 = vld [vmem:[#allocation5 + $0x800] sm:$0xff]
    %v374 = vld [vmem:[#allocation5 + $0x808] sm:$0xff]
    %v375 = vld [vmem:[#allocation5 + $0x810] sm:$0xff]
    %v376 = vld [vmem:[#allocation5 + $0x818] sm:$0xff]
    %v377 = vld [vmem:[#allocation5 + $0x820] sm:$0xff]
    %v378 = vld [vmem:[#allocation5 + $0x828] sm:$0xff]
    %v379 = vld [vmem:[#allocation5 + $0x830] sm:$0xff]
    %v380 = vld [vmem:[#allocation5 + $0x838] sm:$0xff]
    %v381 = vld [vmem:[#allocation5 + $0x840] sm:$0xff]
    %v382 = vld [vmem:[#allocation5 + $0x848] sm:$0xff]
    %v383 = vld [vmem:[#allocation5 + $0x850] sm:$0xff]
    %v384 = vld [vmem:[#allocation5 + $0x858] sm:$0xff]
    %v385 = vld [vmem:[#allocation5 + $0x860] sm:$0xff]
    %v386 = vld [vmem:[#allocation5 + $0x868] sm:$0xff]
    %v387 = vld [vmem:[#allocation5 + $0x870] sm:$0xff]
    %v388 = vld [vmem:[#allocation5 + $0x878] sm:$0xff]
    %v389 = vld [vmem:[#allocation5 + $0x880] sm:$0xff]
    %v390 = vld [vmem:[#allocation5 + $0x888] sm:$0xff]
    %v391 = vld [vmem:[#allocation5 + $0x890] sm:$0xff]
    %v392 = vld [vmem:[#allocation5 + $0x898] sm:$0xff]
    %v393 = vld [vmem:[#allocation5 + $0x8a0] sm:$0xff]
    %v394 = vld [vmem:[#allocation5 + $0x8a8] sm:$0xff]
    %v395 = vld [vmem:[#allocation5 + $0x8b0] sm:$0xff]
    %v396 = vld [vmem:[#allocation5 + $0x8b8] sm:$0xff]
    %v397 = vld [vmem:[#allocation5 + $0x8c0] sm:$0xff]
    %v398 = vld [vmem:[#allocation5 + $0x8c8] sm:$0xff]
    %v399 = vld [vmem:[#allocation5 + $0x8d0] sm:$0xff]
    %v400 = vld [vmem:[#allocation5 + $0x8d8] sm:$0xff]
    %v401 = vld [vmem:[#allocation5 + $0x8e0] sm:$0xff]
    %v402 = vld [vmem:[#allocation5 + $0x8e8] sm:$0xff]
    %v403 = vld [vmem:[#allocation5 + $0x8f0] sm:$0xff]
    %v404 = vld [vmem:[#allocation5 + $0x8f8] sm:$0xff]
    %v405 = vld [vmem:[#allocation5 + $0x900] sm:$0xff]
    %v406 = vld [vmem:[#allocation5 + $0x908] sm:$0xff]
    %v407 = vld [vmem:[#allocation5 + $0x910] sm:$0xff]
    %v408 = vld [vmem:[#allocation5 + $0x918] sm:$0xff]
    %v409 = vld [vmem:[#allocation5 + $0x920] sm:$0xff]
    %v410 = vld [vmem:[#allocation5 + $0x928] sm:$0xff]
    %v411 = vld [vmem:[#allocation5 + $0x930] sm:$0xff]
    %v412 = vld [vmem:[#allocation5 + $0x938] sm:$0xff]
    %v413 = vld [vmem:[#allocation5 + $0x940] sm:$0xff]
    %v414 = vld [vmem:[#allocation5 + $0x948] sm:$0xff]
    %v415 = vld [vmem:[#allocation5 + $0x950] sm:$0xff]
    %v416 = vld [vmem:[#allocation5 + $0x958] sm:$0xff]
    %v417 = vld [vmem:[#allocation5 + $0x960] sm:$0xff]
    %v418 = vld [vmem:[#allocation5 + $0x968] sm:$0xff]
    %v419 = vld [vmem:[#allocation5 + $0x970] sm:$0xff]
    %v420 = vld [vmem:[#allocation5 + $0x978] sm:$0xff]
    %v421 = vld [vmem:[#allocation5 + $0x980] sm:$0xff]
    %v422 = vld [vmem:[#allocation5 + $0x988] sm:$0xff]
    %v423 = vld [vmem:[#allocation5 + $0x990] sm:$0xff]
    %v424 = vld [vmem:[#allocation5 + $0x998] sm:$0xff]
    %v425 = vld [vmem:[#allocation5 + $0x9a0] sm:$0xff]
    %v426 = vld [vmem:[#allocation5 + $0x9a8] sm:$0xff]
    %v427 = vld [vmem:[#allocation5 + $0x9b0] sm:$0xff]
    %v428 = vld [vmem:[#allocation5 + $0x9b8] sm:$0xff]
    %v429 = vld [vmem:[#allocation5 + $0x9c0] sm:$0xff]
    %v430 = vld [vmem:[#allocation5 + $0x9c8] sm:$0xff]
    %v431 = vld [vmem:[#allocation5 + $0x9d0] sm:$0xff]
    %v432 = vld [vmem:[#allocation5 + $0x9d8] sm:$0xff]
    %v433 = vld [vmem:[#allocation5 + $0x9e0] sm:$0xff]
    %v434 = vld [vmem:[#allocation5 + $0x9e8] sm:$0xff]
    %v435 = vld [vmem:[#allocation5 + $0x9f0] sm:$0xff]
    %v436 = vld [vmem:[#allocation5 + $0x9f8] sm:$0xff]
    %v437 = vld [vmem:[#allocation5 + $0xa00] sm:$0xff]
    %v438 = vld [vmem:[#allocation5 + $0xa08] sm:$0xff]
    %v439 = vld [vmem:[#allocation5 + $0xa10] sm:$0xff]
    %v440 = vld [vmem:[#allocation5 + $0xa18] sm:$0xff]
    %v441 = vld [vmem:[#allocation5 + $0xa20] sm:$0xff]
    %v442 = vld [vmem:[#allocation5 + $0xa28] sm:$0xff]
    %v443 = vld [vmem:[#allocation5 + $0xa30] sm:$0xff]
    %v444 = vld [vmem:[#allocation5 + $0xa38] sm:$0xff]
    %v445 = vld [vmem:[#allocation5 + $0xa40] sm:$0xff]
    %v446 = vld [vmem:[#allocation5 + $0xa48] sm:$0xff]
    %v447 = vld [vmem:[#allocation5 + $0xa50] sm:$0xff]
    %v448 = vld [vmem:[#allocation5 + $0xa58] sm:$0xff]
    %v449 = vld [vmem:[#allocation5 + $0xa60] sm:$0xff]
    %v450 = vld [vmem:[#allocation5 + $0xa68] sm:$0xff]
    %v451 = vld [vmem:[#allocation5 + $0xa70] sm:$0xff]
    %v452 = vld [vmem:[#allocation5 + $0xa78] sm:$0xff]
    %v453 = vld [vmem:[#allocation5 + $0xa80] sm:$0xff]
    %v454 = vld [vmem:[#allocation5 + $0xa88] sm:$0xff]
    %v455 = vld [vmem:[#allocation5 + $0xa90] sm:$0xff]
    %v456 = vld [vmem:[#allocation5 + $0xa98] sm:$0xff]
    %v457 = vld [vmem:[#allocation5 + $0xaa0] sm:$0xff]
    %v458 = vld [vmem:[#allocation5 + $0xaa8] sm:$0xff]
    %v459 = vld [vmem:[#allocation5 + $0xab0] sm:$0xff]
    %v460 = vld [vmem:[#allocation5 + $0xab8] sm:$0xff]
    %v461 = vld [vmem:[#allocation5 + $0xac0] sm:$0xff]
    %v462 = vld [vmem:[#allocation5 + $0xac8] sm:$0xff]
    %v463 = vld [vmem:[#allocation5 + $0xad0] sm:$0xff]
    %v464 = vld [vmem:[#allocation5 + $0xad8] sm:$0xff]
    %v465 = vld [vmem:[#allocation5 + $0xae0] sm:$0xff]
    %v466 = vld [vmem:[#allocation5 + $0xae8] sm:$0xff]
    %v467 = vld [vmem:[#allocation5 + $0xaf0] sm:$0xff]
    %v468 = vld [vmem:[#allocation5 + $0xaf8] sm:$0xff]
    %v469 = vld [vmem:[#allocation5 + $0xb00] sm:$0xff]
    %v470 = vld [vmem:[#allocation5 + $0xb08] sm:$0xff]
    %v471 = vld [vmem:[#allocation5 + $0xb10] sm:$0xff]
    %v472 = vld [vmem:[#allocation5 + $0xb18] sm:$0xff]
    %v473 = vld [vmem:[#allocation5 + $0xb20] sm:$0xff]
    %v474 = vld [vmem:[#allocation5 + $0xb28] sm:$0xff]
    %v475 = vld [vmem:[#allocation5 + $0xb30] sm:$0xff]
    %v476 = vld [vmem:[#allocation5 + $0xb38] sm:$0xff]
    %v477 = vld [vmem:[#allocation5 + $0xb40] sm:$0xff]
    %v478 = vld [vmem:[#allocation5 + $0xb48] sm:$0xff]
    %v479 = vld [vmem:[#allocation5 + $0xb50] sm:$0xff]
    %v480 = vld [vmem:[#allocation5 + $0xb58] sm:$0xff]
    %v481 = vld [vmem:[#allocation5 + $0xb60] sm:$0xff]
    %v482 = vld [vmem:[#allocation5 + $0xb68] sm:$0xff]
    %v483 = vld [vmem:[#allocation5 + $0xb70] sm:$0xff]
    %v484 = vld [vmem:[#allocation5 + $0xb78] sm:$0xff]
    %v485 = vld [vmem:[#allocation5 + $0xb80] sm:$0xff]
    %v486 = vld [vmem:[#allocation5 + $0xb88] sm:$0xff]
    %v487 = vld [vmem:[#allocation5 + $0xb90] sm:$0xff]
    %v488 = vld [vmem:[#allocation5 + $0xb98] sm:$0xff]
    %v489 = vld [vmem:[#allocation5 + $0xba0] sm:$0xff]
    %v490 = vld [vmem:[#allocation5 + $0xba8] sm:$0xff]
    %v491 = vld [vmem:[#allocation5 + $0xbb0] sm:$0xff]
    %v492 = vld [vmem:[#allocation5 + $0xbb8] sm:$0xff]
    %v493 = vld [vmem:[#allocation5 + $0xbc0] sm:$0xff]
    %v494 = vld [vmem:[#allocation5 + $0xbc8] sm:$0xff]
    %v495 = vld [vmem:[#allocation5 + $0xbd0] sm:$0xff]
    %v496 = vld [vmem:[#allocation5 + $0xbd8] sm:$0xff]
    %v497 = vld [vmem:[#allocation5 + $0xbe0] sm:$0xff]
    %v498 = vld [vmem:[#allocation5 + $0xbe8] sm:$0xff]
    %v499 = vld [vmem:[#allocation5 + $0xbf0] sm:$0xff]
    %v500 = vld [vmem:[#allocation5 + $0xbf8] sm:$0xff]
    %v501 = vld [vmem:[#allocation5 + $0xc00] sm:$0xff]
    %v502 = vld [vmem:[#allocation5 + $0xc08] sm:$0xff]
    %v503 = vld [vmem:[#allocation5 + $0xc10] sm:$0xff]
    %v504 = vld [vmem:[#allocation5 + $0xc18] sm:$0xff]
    %v505 = vld [vmem:[#allocation5 + $0xc20] sm:$0xff]
    %v506 = vld [vmem:[#allocation5 + $0xc28] sm:$0xff]
    %v507 = vld [vmem:[#allocation5 + $0xc30] sm:$0xff]
    %v508 = vld [vmem:[#allocation5 + $0xc38] sm:$0xff]
    %v509 = vld [vmem:[#allocation5 + $0xc40] sm:$0xff]
    %v510 = vld [vmem:[#allocation5 + $0xc48] sm:$0xff]
    %v511 = vld [vmem:[#allocation5 + $0xc50] sm:$0xff]
    %v512 = vld [vmem:[#allocation5 + $0xc58] sm:$0xff]
    %v513 = vld [vmem:[#allocation5 + $0xc60] sm:$0xff]
    %v514 = vld [vmem:[#allocation5 + $0xc68] sm:$0xff]
    %v515 = vld [vmem:[#allocation5 + $0xc70] sm:$0xff]
    %v516 = vld [vmem:[#allocation5 + $0xc78] sm:$0xff]
    %v517 = vld [vmem:[#allocation5 + $0xc80] sm:$0xff]
    %v518 = vld [vmem:[#allocation5 + $0xc88] sm:$0xff]
    %v519 = vld [vmem:[#allocation5 + $0xc90] sm:$0xff]
    %v520 = vld [vmem:[#allocation5 + $0xc98] sm:$0xff]
    %v521 = vld [vmem:[#allocation5 + $0xca0] sm:$0xff]
    %v522 = vld [vmem:[#allocation5 + $0xca8] sm:$0xff]
    %v523 = vld [vmem:[#allocation5 + $0xcb0] sm:$0xff]
    %v524 = vld [vmem:[#allocation5 + $0xcb8] sm:$0xff]
    %v525 = vld [vmem:[#allocation5 + $0xcc0] sm:$0xff]
    %v526 = vld [vmem:[#allocation5 + $0xcc8] sm:$0xff]
    %v527 = vld [vmem:[#allocation5 + $0xcd0] sm:$0xff]
    %v528 = vld [vmem:[#allocation5 + $0xcd8] sm:$0xff]
    %v529 = vld [vmem:[#allocation5 + $0xce0] sm:$0xff]
    %v530 = vld [vmem:[#allocation5 + $0xce8] sm:$0xff]
    %v531 = vld [vmem:[#allocation5 + $0xcf0] sm:$0xff]
    %v532 = vld [vmem:[#allocation5 + $0xcf8] sm:$0xff]
    %v533 = vld [vmem:[#allocation5 + $0xd00] sm:$0xff]
    %v534 = vld [vmem:[#allocation5 + $0xd08] sm:$0xff]
    %v535 = vld [vmem:[#allocation5 + $0xd10] sm:$0xff]
    %v536 = vld [vmem:[#allocation5 + $0xd18] sm:$0xff]
    %v537 = vld [vmem:[#allocation5 + $0xd20] sm:$0xff]
    %v538 = vld [vmem:[#allocation5 + $0xd28] sm:$0xff]
    %v539 = vld [vmem:[#allocation5 + $0xd30] sm:$0xff]
    %v540 = vld [vmem:[#allocation5 + $0xd38] sm:$0xff]
    %v541 = vld [vmem:[#allocation5 + $0xd40] sm:$0xff]
    %v542 = vld [vmem:[#allocation5 + $0xd48] sm:$0xff]
    %v543 = vld [vmem:[#allocation5 + $0xd50] sm:$0xff]
    %v544 = vld [vmem:[#allocation5 + $0xd58] sm:$0xff]
    %v545 = vld [vmem:[#allocation5 + $0xd60] sm:$0xff]
    %v546 = vld [vmem:[#allocation5 + $0xd68] sm:$0xff]
    %v547 = vld [vmem:[#allocation5 + $0xd70] sm:$0xff]
    %v548 = vld [vmem:[#allocation5 + $0xd78] sm:$0xff]
    %v549 = vld [vmem:[#allocation5 + $0xd80] sm:$0xff]
    %v550 = vld [vmem:[#allocation5 + $0xd88] sm:$0xff]
    %v551 = vld [vmem:[#allocation5 + $0xd90] sm:$0xff]
    %v552 = vld [vmem:[#allocation5 + $0xd98] sm:$0xff]
    %v553 = vld [vmem:[#allocation5 + $0xda0] sm:$0xff]
    %v554 = vld [vmem:[#allocation5 + $0xda8] sm:$0xff]
    %v555 = vld [vmem:[#allocation5 + $0xdb0] sm:$0xff]
    %v556 = vld [vmem:[#allocation5 + $0xdb8] sm:$0xff]
    %v557 = vld [vmem:[#allocation5 + $0xdc0] sm:$0xff]
    %v558 = vld [vmem:[#allocation5 + $0xdc8] sm:$0xff]
    %v559 = vld [vmem:[#allocation5 + $0xdd0] sm:$0xff]
    %v560 = vld [vmem:[#allocation5 + $0xdd8] sm:$0xff]
    %v561 = vld [vmem:[#allocation5 + $0xde0] sm:$0xff]
    %v562 = vld [vmem:[#allocation5 + $0xde8] sm:$0xff]
    %v563 = vld [vmem:[#allocation5 + $0xdf0] sm:$0xff]
    %v564 = vld [vmem:[#allocation5 + $0xdf8] sm:$0xff]
    %v565 = vld [vmem:[#allocation5 + $0xe00] sm:$0xff]
    %v566 = vld [vmem:[#allocation5 + $0xe08] sm:$0xff]
    %v567 = vld [vmem:[#allocation5 + $0xe10] sm:$0xff]
    %v568 = vld [vmem:[#allocation5 + $0xe18] sm:$0xff]
    %v569 = vld [vmem:[#allocation5 + $0xe20] sm:$0xff]
    %v570 = vld [vmem:[#allocation5 + $0xe28] sm:$0xff]
    %v571 = vld [vmem:[#allocation5 + $0xe30] sm:$0xff]
    %v572 = vld [vmem:[#allocation5 + $0xe38] sm:$0xff]
    %v573 = vld [vmem:[#allocation5 + $0xe40] sm:$0xff]
    %v574 = vld [vmem:[#allocation5 + $0xe48] sm:$0xff]
    %v575 = vld [vmem:[#allocation5 + $0xe50] sm:$0xff]
    %v576 = vld [vmem:[#allocation5 + $0xe58] sm:$0xff]
    %v577 = vld [vmem:[#allocation5 + $0xe60] sm:$0xff]
    %v578 = vld [vmem:[#allocation5 + $0xe68] sm:$0xff]
    %v579 = vld [vmem:[#allocation5 + $0xe70] sm:$0xff]
    %v580 = vld [vmem:[#allocation5 + $0xe78] sm:$0xff]
    %v581 = vld [vmem:[#allocation5 + $0xe80] sm:$0xff]
    %v582 = vld [vmem:[#allocation5 + $0xe88] sm:$0xff]
    %v583 = vld [vmem:[#allocation5 + $0xe90] sm:$0xff]
    %v584 = vld [vmem:[#allocation5 + $0xe98] sm:$0xff]
    %v585 = vld [vmem:[#allocation5 + $0xea0] sm:$0xff]
    %v586 = vld [vmem:[#allocation5 + $0xea8] sm:$0xff]
    %v587 = vld [vmem:[#allocation5 + $0xeb0] sm:$0xff]
    %v588 = vld [vmem:[#allocation5 + $0xeb8] sm:$0xff]
    %v589 = vld [vmem:[#allocation5 + $0xec0] sm:$0xff]
    %v590 = vld [vmem:[#allocation5 + $0xec8] sm:$0xff]
    %v591 = vld [vmem:[#allocation5 + $0xed0] sm:$0xff]
    %v592 = vld [vmem:[#allocation5 + $0xed8] sm:$0xff]
    %v593 = vld [vmem:[#allocation5 + $0xee0] sm:$0xff]
    %v594 = vld [vmem:[#allocation5 + $0xee8] sm:$0xff]
    %v595 = vld [vmem:[#allocation5 + $0xef0] sm:$0xff]
    %v596 = vld [vmem:[#allocation5 + $0xef8] sm:$0xff]
    %v597 = vld [vmem:[#allocation5 + $0xf00] sm:$0xff]
    %v598 = vld [vmem:[#allocation5 + $0xf08] sm:$0xff]
    %v599 = vld [vmem:[#allocation5 + $0xf10] sm:$0xff]
    %v600 = vld [vmem:[#allocation5 + $0xf18] sm:$0xff]
    %v601 = vld [vmem:[#allocation5 + $0xf20] sm:$0xff]
    %v602 = vld [vmem:[#allocation5 + $0xf28] sm:$0xff]
    %v603 = vld [vmem:[#allocation5 + $0xf30] sm:$0xff]
    %v604 = vld [vmem:[#allocation5 + $0xf38] sm:$0xff]
    %v605 = vld [vmem:[#allocation5 + $0xf40] sm:$0xff]
    %v606 = vld [vmem:[#allocation5 + $0xf48] sm:$0xff]
    %v607 = vld [vmem:[#allocation5 + $0xf50] sm:$0xff]
    %v608 = vld [vmem:[#allocation5 + $0xf58] sm:$0xff]
    %v609 = vld [vmem:[#allocation5 + $0xf60] sm:$0xff]
    %v610 = vld [vmem:[#allocation5 + $0xf68] sm:$0xff]
    %v611 = vld [vmem:[#allocation5 + $0xf70] sm:$0xff]
    %v612 = vld [vmem:[#allocation5 + $0xf78] sm:$0xff]
    %v613 = vld [vmem:[#allocation5 + $0xf80] sm:$0xff]
    %v614 = vld [vmem:[#allocation5 + $0xf88] sm:$0xff]
    %v615 = vld [vmem:[#allocation5 + $0xf90] sm:$0xff]
    %v616 = vld [vmem:[#allocation5 + $0xf98] sm:$0xff]
    %v617 = vld [vmem:[#allocation5 + $0xfa0] sm:$0xff]
    %v618 = vld [vmem:[#allocation5 + $0xfa8] sm:$0xff]
    %v619 = vld [vmem:[#allocation5 + $0xfb0] sm:$0xff]
    %v620 = vld [vmem:[#allocation5 + $0xfb8] sm:$0xff]
    %v621 = vld [vmem:[#allocation5 + $0xfc0] sm:$0xff]
    %v622 = vld [vmem:[#allocation5 + $0xfc8] sm:$0xff]
    %v623 = vld [vmem:[#allocation5 + $0xfd0] sm:$0xff]
    %v624 = vld [vmem:[#allocation5 + $0xfd8] sm:$0xff]
    %v625 = vld [vmem:[#allocation5 + $0xfe0] sm:$0xff]
    %v626 = vld [vmem:[#allocation5 + $0xfe8] sm:$0xff]
    %v627 = vld [vmem:[#allocation5 + $0xff0] sm:$0xff]
    %v628 = vld [vmem:[#allocation5 + $0xff8] sm:$0xff]
    %v629 = vld [vmem:[#allocation5 + $0x1000] sm:$0xff]
    %v630 = vld [vmem:[#allocation5 + $0x1008] sm:$0xff]
    %v631 = vld [vmem:[#allocation5 + $0x1010] sm:$0xff]
    %v632 = vld [vmem:[#allocation5 + $0x1018] sm:$0xff]
    %v633 = vld [vmem:[#allocation5 + $0x1020] sm:$0xff]
    %v634 = vld [vmem:[#allocation5 + $0x1028] sm:$0xff]
    %v635 = vld [vmem:[#allocation5 + $0x1030] sm:$0xff]
    %v636 = vld [vmem:[#allocation5 + $0x1038] sm:$0xff]
    %v637 = vld [vmem:[#allocation5 + $0x1040] sm:$0xff]
    %v638 = vld [vmem:[#allocation5 + $0x1048] sm:$0xff]
    %v639 = vld [vmem:[#allocation5 + $0x1050] sm:$0xff]
    %v640 = vld [vmem:[#allocation5 + $0x1058] sm:$0xff]
    %v641 = vld [vmem:[#allocation5 + $0x1060] sm:$0xff]
    %v642 = vld [vmem:[#allocation5 + $0x1068] sm:$0xff]
    %v643 = vld [vmem:[#allocation5 + $0x1070] sm:$0xff]
    %v644 = vld [vmem:[#allocation5 + $0x1078] sm:$0xff]
    %v645 = vld [vmem:[#allocation5 + $0x1080] sm:$0xff]
    %v646 = vld [vmem:[#allocation5 + $0x1088] sm:$0xff]
    %v647 = vld [vmem:[#allocation5 + $0x1090] sm:$0xff]
    %v648 = vld [vmem:[#allocation5 + $0x1098] sm:$0xff]
    %v649 = vld [vmem:[#allocation5 + $0x10a0] sm:$0xff]
    %v650 = vld [vmem:[#allocation5 + $0x10a8] sm:$0xff]
    %v651 = vld [vmem:[#allocation5 + $0x10b0] sm:$0xff]
    %v652 = vld [vmem:[#allocation5 + $0x10b8] sm:$0xff]
    %v653 = vld [vmem:[#allocation5 + $0x10c0] sm:$0xff]
    %v654 = vld [vmem:[#allocation5 + $0x10c8] sm:$0xff]
    %v655 = vld [vmem:[#allocation5 + $0x10d0] sm:$0xff]
    %v656 = vld [vmem:[#allocation5 + $0x10d8] sm:$0xff]
    %v657 = vld [vmem:[#allocation5 + $0x10e0] sm:$0xff]
    %v658 = vld [vmem:[#allocation5 + $0x10e8] sm:$0xff]
    %v659 = vld [vmem:[#allocation5 + $0x10f0] sm:$0xff]
    %v660 = vld [vmem:[#allocation5 + $0x10f8] sm:$0xff]
    %v661 = vld [vmem:[#allocation5 + $0x1100] sm:$0xff]
    %v662 = vld [vmem:[#allocation5 + $0x1108] sm:$0xff]
    %v663 = vld [vmem:[#allocation5 + $0x1110] sm:$0xff]
    %v664 = vld [vmem:[#allocation5 + $0x1118] sm:$0xff]
    %v665 = vld [vmem:[#allocation5 + $0x1120] sm:$0xff]
    %v666 = vld [vmem:[#allocation5 + $0x1128] sm:$0xff]
    %v667 = vld [vmem:[#allocation5 + $0x1130] sm:$0xff]
    %v668 = vld [vmem:[#allocation5 + $0x1138] sm:$0xff]
    %v669 = vld [vmem:[#allocation5 + $0x1140] sm:$0xff]
    %v670 = vld [vmem:[#allocation5 + $0x1148] sm:$0xff]
    %v671 = vld [vmem:[#allocation5 + $0x1150] sm:$0xff]
    %v672 = vld [vmem:[#allocation5 + $0x1158] sm:$0xff]
    %v673 = vld [vmem:[#allocation5 + $0x1160] sm:$0xff]
    %v674 = vld [vmem:[#allocation5 + $0x1168] sm:$0xff]
    %v675 = vld [vmem:[#allocation5 + $0x1170] sm:$0xff]
    %v676 = vld [vmem:[#allocation5 + $0x1178] sm:$0xff]
    %v677 = vld [vmem:[#allocation5 + $0x1180] sm:$0xff]
    %v678 = vld [vmem:[#allocation5 + $0x1188] sm:$0xff]
    %v679 = vld [vmem:[#allocation5 + $0x1190] sm:$0xff]
    %v680 = vld [vmem:[#allocation5 + $0x1198] sm:$0xff]
    %v681 = vld [vmem:[#allocation5 + $0x11a0] sm:$0xff]
    %v682 = vld [vmem:[#allocation5 + $0x11a8] sm:$0xff]
    %v683 = vld [vmem:[#allocation5 + $0x11b0] sm:$0xff]
    %v684 = vld [vmem:[#allocation5 + $0x11b8] sm:$0xff]
    %v685 = vld [vmem:[#allocation5 + $0x11c0] sm:$0xff]
    %v686 = vld [vmem:[#allocation5 + $0x11c8] sm:$0xff]
    %v687 = vld [vmem:[#allocation5 + $0x11d0] sm:$0xff]
    %v688 = vld [vmem:[#allocation5 + $0x11d8] sm:$0xff]
    %v689 = vld [vmem:[#allocation5 + $0x11e0] sm:$0xff]
    %v690 = vld [vmem:[#allocation5 + $0x11e8] sm:$0xff]
    %v691 = vld [vmem:[#allocation5 + $0x11f0] sm:$0xff]
    %v692 = vld [vmem:[#allocation5 + $0x11f8] sm:$0xff]
    %v693 = vld [vmem:[#allocation5 + $0x1200] sm:$0xff]
    %v694 = vld [vmem:[#allocation5 + $0x1208] sm:$0xff]
    %v695 = vld [vmem:[#allocation5 + $0x1210] sm:$0xff]
    %v696 = vld [vmem:[#allocation5 + $0x1218] sm:$0xff]
    %v697 = vld [vmem:[#allocation5 + $0x1220] sm:$0xff]
    %v698 = vld [vmem:[#allocation5 + $0x1228] sm:$0xff]
    %v699 = vld [vmem:[#allocation5 + $0x1230] sm:$0xff]
    %v700 = vld [vmem:[#allocation5 + $0x1238] sm:$0xff]
    %v701 = vld [vmem:[#allocation5 + $0x1240] sm:$0xff]
    %v702 = vld [vmem:[#allocation5 + $0x1248] sm:$0xff]
    %v703 = vld [vmem:[#allocation5 + $0x1250] sm:$0xff]
    %v704 = vld [vmem:[#allocation5 + $0x1258] sm:$0xff]
    %v705 = vld [vmem:[#allocation5 + $0x1260] sm:$0xff]
    %v706 = vld [vmem:[#allocation5 + $0x1268] sm:$0xff]
    %v707 = vld [vmem:[#allocation5 + $0x1270] sm:$0xff]
    %v708 = vld [vmem:[#allocation5 + $0x1278] sm:$0xff]
    %v709 = vld [vmem:[#allocation5 + $0x1280] sm:$0xff]
    %v710 = vld [vmem:[#allocation5 + $0x1288] sm:$0xff]
    %v711 = vld [vmem:[#allocation5 + $0x1290] sm:$0xff]
    %v712 = vld [vmem:[#allocation5 + $0x1298] sm:$0xff]
    %v713 = vld [vmem:[#allocation5 + $0x12a0] sm:$0xff]
    %v714 = vld [vmem:[#allocation5 + $0x12a8] sm:$0xff]
    %v715 = vld [vmem:[#allocation5 + $0x12b0] sm:$0xff]
    %v716 = vld [vmem:[#allocation5 + $0x12b8] sm:$0xff]
    %v717 = vld [vmem:[#allocation5 + $0x12c0] sm:$0xff]
    %v718 = vld [vmem:[#allocation5 + $0x12c8] sm:$0xff]
    %v719 = vld [vmem:[#allocation5 + $0x12d0] sm:$0xff]
    %v720 = vld [vmem:[#allocation5 + $0x12d8] sm:$0xff]
    %v721 = vld [vmem:[#allocation5 + $0x12e0] sm:$0xff]
    %v722 = vld [vmem:[#allocation5 + $0x12e8] sm:$0xff]
    %v723 = vld [vmem:[#allocation5 + $0x12f0] sm:$0xff]
    %v724 = vld [vmem:[#allocation5 + $0x12f8] sm:$0xff]
    %v725 = vld [vmem:[#allocation5 + $0x1300] sm:$0xff]
    %v726 = vld [vmem:[#allocation5 + $0x1308] sm:$0xff]
    %v727 = vld [vmem:[#allocation5 + $0x1310] sm:$0xff]
    %v728 = vld [vmem:[#allocation5 + $0x1318] sm:$0xff]
    %v729 = vld [vmem:[#allocation5 + $0x1320] sm:$0xff]
    %v730 = vld [vmem:[#allocation5 + $0x1328] sm:$0xff]
    %v731 = vld [vmem:[#allocation5 + $0x1330] sm:$0xff]
    %v732 = vld [vmem:[#allocation5 + $0x1338] sm:$0xff]
    %v733 = vld [vmem:[#allocation5 + $0x1340] sm:$0xff]
    %v734 = vld [vmem:[#allocation5 + $0x1348] sm:$0xff]
    %v735 = vld [vmem:[#allocation5 + $0x1350] sm:$0xff]
    %v736 = vld [vmem:[#allocation5 + $0x1358] sm:$0xff]
    %v737 = vld [vmem:[#allocation5 + $0x1360] sm:$0xff]
    %v738 = vld [vmem:[#allocation5 + $0x1368] sm:$0xff]
    %v739 = vld [vmem:[#allocation5 + $0x1370] sm:$0xff]
    %v740 = vld [vmem:[#allocation5 + $0x1378] sm:$0xff]
    %v741 = vld [vmem:[#allocation5 + $0x1380] sm:$0xff]
    %v742 = vld [vmem:[#allocation5 + $0x1388] sm:$0xff]
    %v743 = vld [vmem:[#allocation5 + $0x1390] sm:$0xff]
    %v744 = vld [vmem:[#allocation5 + $0x1398] sm:$0xff]
    %v745 = vld [vmem:[#allocation5 + $0x13a0] sm:$0xff]
    %v746 = vld [vmem:[#allocation5 + $0x13a8] sm:$0xff]
    %v747 = vld [vmem:[#allocation5 + $0x13b0] sm:$0xff]
    %v748 = vld [vmem:[#allocation5 + $0x13b8] sm:$0xff]
    %v749 = vld [vmem:[#allocation5 + $0x13c0] sm:$0xff]
    %v750 = vld [vmem:[#allocation5 + $0x13c8] sm:$0xff]
    %v751 = vld [vmem:[#allocation5 + $0x13d0] sm:$0xff]
    %v752 = vld [vmem:[#allocation5 + $0x13d8] sm:$0xff]
    %v753 = vld [vmem:[#allocation5 + $0x13e0] sm:$0xff]
    %v754 = vld [vmem:[#allocation5 + $0x13e8] sm:$0xff]
    %v755 = vld [vmem:[#allocation5 + $0x13f0] sm:$0xff]
    %v756 = vld [vmem:[#allocation5 + $0x13f8] sm:$0xff]
    %v757 = vld [vmem:[#allocation5 + $0x1400] sm:$0xff]
    %v758 = vld [vmem:[#allocation5 + $0x1408] sm:$0xff]
    %v759 = vld [vmem:[#allocation5 + $0x1410] sm:$0xff]
    %v760 = vld [vmem:[#allocation5 + $0x1418] sm:$0xff]
    %v761 = vld [vmem:[#allocation5 + $0x1420] sm:$0xff]
    %v762 = vld [vmem:[#allocation5 + $0x1428] sm:$0xff]
    %v763 = vld [vmem:[#allocation5 + $0x1430] sm:$0xff]
    %v764 = vld [vmem:[#allocation5 + $0x1438] sm:$0xff]
    %v765 = vld [vmem:[#allocation5 + $0x1440] sm:$0xff]
    %v766 = vld [vmem:[#allocation5 + $0x1448] sm:$0xff]
    %v767 = vld [vmem:[#allocation5 + $0x1450] sm:$0xff]
    %v768 = vld [vmem:[#allocation5 + $0x1458] sm:$0xff]
    %v769 = vld [vmem:[#allocation5 + $0x1460] sm:$0xff]
    %v770 = vld [vmem:[#allocation5 + $0x1468] sm:$0xff]
    %v771 = vld [vmem:[#allocation5 + $0x1470] sm:$0xff]
    %v772 = vld [vmem:[#allocation5 + $0x1478] sm:$0xff]
    %v773 = vld [vmem:[#allocation5 + $0x1480] sm:$0xff]
    %v774 = vld [vmem:[#allocation5 + $0x1488] sm:$0xff]
    %v775 = vld [vmem:[#allocation5 + $0x1490] sm:$0xff]
    %v776 = vld [vmem:[#allocation5 + $0x1498] sm:$0xff]
    %v777 = vld [vmem:[#allocation5 + $0x14a0] sm:$0xff]
    %v778 = vld [vmem:[#allocation5 + $0x14a8] sm:$0xff]
    %v779 = vld [vmem:[#allocation5 + $0x14b0] sm:$0xff]
    %v780 = vld [vmem:[#allocation5 + $0x14b8] sm:$0xff]
    %v781 = vld [vmem:[#allocation5 + $0x14c0] sm:$0xff]
    %v782 = vld [vmem:[#allocation5 + $0x14c8] sm:$0xff]
    %v783 = vld [vmem:[#allocation5 + $0x14d0] sm:$0xff]
    %v784 = vld [vmem:[#allocation5 + $0x14d8] sm:$0xff]
    %v785 = vld [vmem:[#allocation5 + $0x14e0] sm:$0xff]
    %v786 = vld [vmem:[#allocation5 + $0x14e8] sm:$0xff]
    %v787 = vld [vmem:[#allocation5 + $0x14f0] sm:$0xff]
    %v788 = vld [vmem:[#allocation5 + $0x14f8] sm:$0xff]
    %v789 = vld [vmem:[#allocation7] sm:$0x3]
    %v791 = vlaneseq
    %v792 = vshrl.u32 %v791, 7
    %v793 = vsub.s32 0, %v792
    %v794 = vrot.slane %v789, %v793
    %v795 = vlaneseq
    %v796 = vshrl.u32 %v795, 7
    %v797 = vsub.s32 1, %v796
    %v798 = vrot.slane %v789, %v797
    %v864 = vunpack.c.l.b16 %v54
    %v865 = vunpack.c.h.b16 %v54
    %v866 = vunpack.c.l.b16 %v55
    %v867 = vunpack.c.h.b16 %v55
    %v868 = vunpack.c.l.b16 %v56
    %v869 = vunpack.c.h.b16 %v56
    %v870 = vunpack.c.l.b16 %v57
    %v871 = vunpack.c.h.b16 %v57
    %v872 = vunpack.c.l.b16 %v58
    %v873 = vunpack.c.h.b16 %v58
    %v874 = vunpack.c.l.b16 %v59
    %v875 = vunpack.c.h.b16 %v59
    %v876 = vunpack.c.l.b16 %v60
    %v877 = vunpack.c.h.b16 %v60
    %v878 = vunpack.c.l.b16 %v61
    %v879 = vunpack.c.h.b16 %v61
    %v880 = vunpack.c.l.b16 %v62
    %v881 = vunpack.c.h.b16 %v62
    %v882 = vunpack.c.l.b16 %v63
    %v883 = vunpack.c.h.b16 %v63
    %v884 = vunpack.c.l.b16 %v64
    %v885 = vunpack.c.h.b16 %v64
    %v886 = vunpack.c.l.b16 %v65
    %v887 = vunpack.c.h.b16 %v65
    %v888 = vunpack.c.l.b16 %v66
    %v889 = vunpack.c.h.b16 %v66
    %v890 = vunpack.c.l.b16 %v67
    %v891 = vunpack.c.h.b16 %v67
    %v892 = vunpack.c.l.b16 %v68
    %v893 = vunpack.c.h.b16 %v68
    %v894 = vunpack.c.l.b16 %v69
    %v895 = vunpack.c.h.b16 %v69
    %v896 = vunpack.c.l.b16 %v70
    %v897 = vunpack.c.h.b16 %v70
    %v898 = vunpack.c.l.b16 %v71
    %v899 = vunpack.c.h.b16 %v71
    %v900 = vunpack.c.l.b16 %v72
    %v901 = vunpack.c.h.b16 %v72
    %v902 = vunpack.c.l.b16 %v73
    %v903 = vunpack.c.h.b16 %v73
    %v904 = vunpack.c.l.b16 %v74
    %v905 = vunpack.c.h.b16 %v74
    %v906 = vunpack.c.l.b16 %v75
    %v907 = vunpack.c.h.b16 %v75
    %v908 = vunpack.c.l.b16 %v76
    %v909 = vunpack.c.h.b16 %v76
    %v910 = vunpack.c.l.b16 %v77
    %v911 = vunpack.c.h.b16 %v77
    %v912 = vunpack.c.l.b16 %v78
    %v913 = vunpack.c.h.b16 %v78
    %v914 = vunpack.c.l.b16 %v79
    %v915 = vunpack.c.h.b16 %v79
    %v916 = vunpack.c.l.b16 %v80
    %v917 = vunpack.c.h.b16 %v80
    %v918 = vunpack.c.l.b16 %v81
    %v919 = vunpack.c.h.b16 %v81
    %v920 = vunpack.c.l.b16 %v82
    %v921 = vunpack.c.h.b16 %v82
    %v922 = vunpack.c.l.b16 %v83
    %v923 = vunpack.c.h.b16 %v83
    %v924 = vunpack.c.l.b16 %v84
    %v925 = vunpack.c.h.b16 %v84
    %v926 = vunpack.c.l.b16 %v85
    %v927 = vunpack.c.h.b16 %v85
    %v928 = vunpack.c.l.b16 %v86
    %v929 = vunpack.c.h.b16 %v86
    %v930 = vunpack.c.l.b16 %v87
    %v931 = vunpack.c.h.b16 %v87
    %v932 = vunpack.c.l.b16 %v88
    %v933 = vunpack.c.h.b16 %v88
    %v934 = vunpack.c.l.b16 %v89
    %v935 = vunpack.c.h.b16 %v89
    %v936 = vunpack.c.l.b16 %v90
    %v937 = vunpack.c.h.b16 %v90
    %v938 = vunpack.c.l.b16 %v91
    %v939 = vunpack.c.h.b16 %v91
    %v940 = vunpack.c.l.b16 %v92
    %v941 = vunpack.c.h.b16 %v92
    %v942 = vunpack.c.l.b16 %v93
    %v943 = vunpack.c.h.b16 %v93
    %v944 = vunpack.c.l.b16 %v94
    %v945 = vunpack.c.h.b16 %v94
    %v946 = vunpack.c.l.b16 %v95
    %v947 = vunpack.c.h.b16 %v95
    %v948 = vunpack.c.l.b16 %v96
    %v949 = vunpack.c.h.b16 %v96
    %v950 = vunpack.c.l.b16 %v97
    %v951 = vunpack.c.h.b16 %v97
    %v952 = vunpack.c.l.b16 %v98
    %v953 = vunpack.c.h.b16 %v98
    %v954 = vunpack.c.l.b16 %v99
    %v955 = vunpack.c.h.b16 %v99
    %v956 = vunpack.c.l.b16 %v100
    %v957 = vunpack.c.h.b16 %v100
    %v958 = vunpack.c.l.b16 %v101
    %v959 = vunpack.c.h.b16 %v101
    %v960 = vunpack.c.l.b16 %v102
    %v961 = vunpack.c.h.b16 %v102
    %v962 = vunpack.c.l.b16 %v103
    %v963 = vunpack.c.h.b16 %v103
    %v964 = vunpack.c.l.b16 %v104
    %v965 = vunpack.c.h.b16 %v104
    %v966 = vunpack.c.l.b16 %v105
    %v967 = vunpack.c.h.b16 %v105
    %v968 = vunpack.c.l.b16 %v106
    %v969 = vunpack.c.h.b16 %v106
    %v970 = vunpack.c.l.b16 %v107
    %v971 = vunpack.c.h.b16 %v107
    %v972 = vunpack.c.l.b16 %v108
    %v973 = vunpack.c.h.b16 %v108
    %v974 = vunpack.c.l.b16 %v109
    %v975 = vunpack.c.h.b16 %v109
    %v976 = vunpack.c.l.b16 %v110
    %v977 = vunpack.c.h.b16 %v110
    %v978 = vunpack.c.l.b16 %v111
    %v979 = vunpack.c.h.b16 %v111
    %v980 = vunpack.c.l.b16 %v112
    %v981 = vunpack.c.h.b16 %v112
    %v982 = vunpack.c.l.b16 %v113
    %v983 = vunpack.c.h.b16 %v113
    %v984 = vunpack.c.l.b16 %v114
    %v985 = vunpack.c.h.b16 %v114
    %v986 = vunpack.c.l.b16 %v115
    %v987 = vunpack.c.h.b16 %v115
    %v988 = vunpack.c.l.b16 %v116
    %v989 = vunpack.c.h.b16 %v116
    %v990 = vpack.c.b16 %v906, %v864
    %v991 = vpack.c.b16 %v907, %v865
    %v992 = vpack.c.b16 %v908, %v866
    %v993 = vpack.c.b16 %v909, %v867
    %v994 = vpack.c.b16 %v910, %v868
    %v995 = vpack.c.b16 %v911, %v869
    %v996 = vpack.c.b16 %v912, %v870
    %v997 = vpack.c.b16 %v913, %v871
    %v998 = vpack.c.b16 %v914, %v872
    %v999 = vpack.c.b16 %v915, %v873
    %v1000 = vpack.c.b16 %v916, %v874
    %v1001 = vpack.c.b16 %v917, %v875
    %v1002 = vpack.c.b16 %v918, %v876
    %v1003 = vpack.c.b16 %v919, %v877
    %v1004 = vpack.c.b16 %v920, %v878
    %v1005 = vpack.c.b16 %v921, %v879
    %v1006 = vpack.c.b16 %v922, %v880
    %v1007 = vpack.c.b16 %v923, %v881
    %v1008 = vpack.c.b16 %v924, %v882
    %v1009 = vpack.c.b16 %v925, %v883
    %v1010 = vpack.c.b16 %v926, %v884
    %v1011 = vpack.c.b16 %v927, %v885
    %v1012 = vpack.c.b16 %v928, %v886
    %v1013 = vpack.c.b16 %v929, %v887
    %v1014 = vpack.c.b16 %v930, %v888
    %v1015 = vpack.c.b16 %v931, %v889
    %v1016 = vpack.c.b16 %v932, %v890
    %v1017 = vpack.c.b16 %v933, %v891
    %v1018 = vpack.c.b16 %v934, %v892
    %v1019 = vpack.c.b16 %v935, %v893
    %v1020 = vpack.c.b16 %v936, %v894
    %v1021 = vpack.c.b16 %v937, %v895
    %v1022 = vpack.c.b16 %v938, %v896
    %v1023 = vpack.c.b16 %v939, %v897
    %v1024 = vpack.c.b16 %v940, %v898
    %v1025 = vpack.c.b16 %v941, %v899
    %v1026 = vpack.c.b16 %v942, %v900
    %v1027 = vpack.c.b16 %v943, %v901
    %v1028 = vpack.c.b16 %v944, %v902
    %v1029 = vpack.c.b16 %v945, %v903
    %v1030 = vpack.c.b16 %v946, %v904
    %v1031 = vpack.c.b16 %v947, %v905
    %v1032 = vpack.c.b16 %v948, %v948
    %v1033 = vpack.c.b16 %v949, %v949
    %v1034 = vpack.c.b16 %v950, %v950
    %v1035 = vpack.c.b16 %v951, %v951
    %v1036 = vpack.c.b16 %v952, %v952
    %v1037 = vpack.c.b16 %v953, %v953
    %v1038 = vpack.c.b16 %v954, %v954
    %v1039 = vpack.c.b16 %v955, %v955
    %v1040 = vpack.c.b16 %v956, %v956
    %v1041 = vpack.c.b16 %v957, %v957
    %v1042 = vpack.c.b16 %v958, %v958
    %v1043 = vpack.c.b16 %v959, %v959
    %v1044 = vpack.c.b16 %v960, %v960
    %v1045 = vpack.c.b16 %v961, %v961
    %v1046 = vpack.c.b16 %v962, %v962
    %v1047 = vpack.c.b16 %v963, %v963
    %v1048 = vpack.c.b16 %v964, %v964
    %v1049 = vpack.c.b16 %v965, %v965
    %v1050 = vpack.c.b16 %v966, %v966
    %v1051 = vpack.c.b16 %v967, %v967
    %v1052 = vpack.c.b16 %v968, %v968
    %v1053 = vpack.c.b16 %v969, %v969
    %v1054 = vpack.c.b16 %v970, %v970
    %v1055 = vpack.c.b16 %v971, %v971
    %v1056 = vpack.c.b16 %v972, %v972
    %v1057 = vpack.c.b16 %v973, %v973
    %v1058 = vpack.c.b16 %v974, %v974
    %v1059 = vpack.c.b16 %v975, %v975
    %v1060 = vpack.c.b16 %v976, %v976
    %v1061 = vpack.c.b16 %v977, %v977
    %v1062 = vpack.c.b16 %v978, %v978
    %v1063 = vpack.c.b16 %v979, %v979
    %v1064 = vpack.c.b16 %v980, %v980
    %v1065 = vpack.c.b16 %v981, %v981
    %v1066 = vpack.c.b16 %v982, %v982
    %v1067 = vpack.c.b16 %v983, %v983
    %v1068 = vpack.c.b16 %v984, %v984
    %v1069 = vpack.c.b16 %v985, %v985
    %v1070 = vpack.c.b16 %v986, %v986
    %v1071 = vpack.c.b16 %v987, %v987
    %v1072 = vpack.c.b16 %v988, %v988
    %v1073 = vpack.c.b16 %v989, %v989
    %v1830 = vunpack.c.l.b16 %v117
    %v1831 = vunpack.c.h.b16 %v117
    %v1832 = vunpack.c.l.b16 %v118
    %v1833 = vunpack.c.h.b16 %v118
    %v1834 = vunpack.c.l.b16 %v119
    %v1835 = vunpack.c.h.b16 %v119
    %v1836 = vunpack.c.l.b16 %v120
    %v1837 = vunpack.c.h.b16 %v120
    %v1838 = vunpack.c.l.b16 %v121
    %v1839 = vunpack.c.h.b16 %v121
    %v1840 = vunpack.c.l.b16 %v122
    %v1841 = vunpack.c.h.b16 %v122
    %v1842 = vunpack.c.l.b16 %v123
    %v1843 = vunpack.c.h.b16 %v123
    %v1844 = vunpack.c.l.b16 %v124
    %v1845 = vunpack.c.h.b16 %v124
    %v1846 = vunpack.c.l.b16 %v125
    %v1847 = vunpack.c.h.b16 %v125
    %v1848 = vunpack.c.l.b16 %v126
    %v1849 = vunpack.c.h.b16 %v126
    %v1850 = vunpack.c.l.b16 %v127
    %v1851 = vunpack.c.h.b16 %v127
    %v1852 = vunpack.c.l.b16 %v128
    %v1853 = vunpack.c.h.b16 %v128
    %v1854 = vunpack.c.l.b16 %v129
    %v1855 = vunpack.c.h.b16 %v129
    %v1856 = vunpack.c.l.b16 %v130
    %v1857 = vunpack.c.h.b16 %v130
    %v1858 = vunpack.c.l.b16 %v131
    %v1859 = vunpack.c.h.b16 %v131
    %v1860 = vunpack.c.l.b16 %v132
    %v1861 = vunpack.c.h.b16 %v132
    %v1862 = vunpack.c.l.b16 %v133
    %v1863 = vunpack.c.h.b16 %v133
    %v1864 = vunpack.c.l.b16 %v134
    %v1865 = vunpack.c.h.b16 %v134
    %v1866 = vunpack.c.l.b16 %v135
    %v1867 = vunpack.c.h.b16 %v135
    %v1868 = vunpack.c.l.b16 %v136
    %v1869 = vunpack.c.h.b16 %v136
    %v1870 = vunpack.c.l.b16 %v137
    %v1871 = vunpack.c.h.b16 %v137
    %v1872 = vunpack.c.l.b16 %v138
    %v1873 = vunpack.c.h.b16 %v138
    %v1874 = vunpack.c.l.b16 %v139
    %v1875 = vunpack.c.h.b16 %v139
    %v1876 = vunpack.c.l.b16 %v140
    %v1877 = vunpack.c.h.b16 %v140
    %v1878 = vunpack.c.l.b16 %v141
    %v1879 = vunpack.c.h.b16 %v141
    %v1880 = vunpack.c.l.b16 %v142
    %v1881 = vunpack.c.h.b16 %v142
    %v1882 = vunpack.c.l.b16 %v143
    %v1883 = vunpack.c.h.b16 %v143
    %v1884 = vunpack.c.l.b16 %v144
    %v1885 = vunpack.c.h.b16 %v144
    %v1886 = vunpack.c.l.b16 %v145
    %v1887 = vunpack.c.h.b16 %v145
    %v1888 = vunpack.c.l.b16 %v146
    %v1889 = vunpack.c.h.b16 %v146
    %v1890 = vunpack.c.l.b16 %v147
    %v1891 = vunpack.c.h.b16 %v147
    %v1892 = vunpack.c.l.b16 %v148
    %v1893 = vunpack.c.h.b16 %v148
    %v1894 = vunpack.c.l.b16 %v149
    %v1895 = vunpack.c.h.b16 %v149
    %v1896 = vunpack.c.l.b16 %v150
    %v1897 = vunpack.c.h.b16 %v150
    %v1898 = vunpack.c.l.b16 %v151
    %v1899 = vunpack.c.h.b16 %v151
    %v1900 = vunpack.c.l.b16 %v152
    %v1901 = vunpack.c.h.b16 %v152
    %v1902 = vunpack.c.l.b16 %v153
    %v1903 = vunpack.c.h.b16 %v153
    %v1904 = vunpack.c.l.b16 %v154
    %v1905 = vunpack.c.h.b16 %v154
    %v1906 = vunpack.c.l.b16 %v155
    %v1907 = vunpack.c.h.b16 %v155
    %v1908 = vunpack.c.l.b16 %v156
    %v1909 = vunpack.c.h.b16 %v156
    %v1910 = vunpack.c.l.b16 %v157
    %v1911 = vunpack.c.h.b16 %v157
    %v1912 = vunpack.c.l.b16 %v158
    %v1913 = vunpack.c.h.b16 %v158
    %v1914 = vunpack.c.l.b16 %v159
    %v1915 = vunpack.c.h.b16 %v159
    %v1916 = vunpack.c.l.b16 %v160
    %v1917 = vunpack.c.h.b16 %v160
    %v1918 = vunpack.c.l.b16 %v161
    %v1919 = vunpack.c.h.b16 %v161
    %v1920 = vunpack.c.l.b16 %v162
    %v1921 = vunpack.c.h.b16 %v162
    %v1922 = vunpack.c.l.b16 %v163
    %v1923 = vunpack.c.h.b16 %v163
    %v1924 = vunpack.c.l.b16 %v164
    %v1925 = vunpack.c.h.b16 %v164
    %v1926 = vunpack.c.l.b16 %v165
    %v1927 = vunpack.c.h.b16 %v165
    %v1928 = vunpack.c.l.b16 %v166
    %v1929 = vunpack.c.h.b16 %v166
    %v1930 = vunpack.c.l.b16 %v167
    %v1931 = vunpack.c.h.b16 %v167
    %v1932 = vunpack.c.l.b16 %v168
    %v1933 = vunpack.c.h.b16 %v168
    %v1934 = vunpack.c.l.b16 %v169
    %v1935 = vunpack.c.h.b16 %v169
    %v1936 = vunpack.c.l.b16 %v170
    %v1937 = vunpack.c.h.b16 %v170
    %v1938 = vunpack.c.l.b16 %v171
    %v1939 = vunpack.c.h.b16 %v171
    %v1940 = vunpack.c.l.b16 %v172
    %v1941 = vunpack.c.h.b16 %v172
    %v1942 = vunpack.c.l.b16 %v173
    %v1943 = vunpack.c.h.b16 %v173
    %v1944 = vunpack.c.l.b16 %v174
    %v1945 = vunpack.c.h.b16 %v174
    %v1946 = vunpack.c.l.b16 %v175
    %v1947 = vunpack.c.h.b16 %v175
    %v1948 = vunpack.c.l.b16 %v176
    %v1949 = vunpack.c.h.b16 %v176
    %v1950 = vunpack.c.l.b16 %v177
    %v1951 = vunpack.c.h.b16 %v177
    %v1952 = vunpack.c.l.b16 %v178
    %v1953 = vunpack.c.h.b16 %v178
    %v1954 = vunpack.c.l.b16 %v179
    %v1955 = vunpack.c.h.b16 %v179
    %v1956 = vunpack.c.l.b16 %v180
    %v1957 = vunpack.c.h.b16 %v180
    %v1958 = vunpack.c.l.b16 %v181
    %v1959 = vunpack.c.h.b16 %v181
    %v1960 = vunpack.c.l.b16 %v182
    %v1961 = vunpack.c.h.b16 %v182
    %v1962 = vunpack.c.l.b16 %v183
    %v1963 = vunpack.c.h.b16 %v183
    %v1964 = vunpack.c.l.b16 %v184
    %v1965 = vunpack.c.h.b16 %v184
    %v1966 = vunpack.c.l.b16 %v185
    %v1967 = vunpack.c.h.b16 %v185
    %v1968 = vunpack.c.l.b16 %v186
    %v1969 = vunpack.c.h.b16 %v186
    %v1970 = vunpack.c.l.b16 %v187
    %v1971 = vunpack.c.h.b16 %v187
    %v1972 = vunpack.c.l.b16 %v188
    %v1973 = vunpack.c.h.b16 %v188
    %v1974 = vunpack.c.l.b16 %v189
    %v1975 = vunpack.c.h.b16 %v189
    %v1976 = vunpack.c.l.b16 %v190
    %v1977 = vunpack.c.h.b16 %v190
    %v1978 = vunpack.c.l.b16 %v191
    %v1979 = vunpack.c.h.b16 %v191
    %v1980 = vunpack.c.l.b16 %v192
    %v1981 = vunpack.c.h.b16 %v192
    %v1982 = vunpack.c.l.b16 %v193
    %v1983 = vunpack.c.h.b16 %v193
    %v1984 = vunpack.c.l.b16 %v194
    %v1985 = vunpack.c.h.b16 %v194
    %v1986 = vunpack.c.l.b16 %v195
    %v1987 = vunpack.c.h.b16 %v195
    %v1988 = vunpack.c.l.b16 %v196
    %v1989 = vunpack.c.h.b16 %v196
    %v1990 = vunpack.c.l.b16 %v197
    %v1991 = vunpack.c.h.b16 %v197
    %v1992 = vunpack.c.l.b16 %v198
    %v1993 = vunpack.c.h.b16 %v198
    %v1994 = vunpack.c.l.b16 %v199
    %v1995 = vunpack.c.h.b16 %v199
    %v1996 = vunpack.c.l.b16 %v200
    %v1997 = vunpack.c.h.b16 %v200
    %v1998 = vunpack.c.l.b16 %v201
    %v1999 = vunpack.c.h.b16 %v201
    %v2000 = vunpack.c.l.b16 %v202
    %v2001 = vunpack.c.h.b16 %v202
    %v2002 = vunpack.c.l.b16 %v203
    %v2003 = vunpack.c.h.b16 %v203
    %v2004 = vunpack.c.l.b16 %v204
    %v2005 = vunpack.c.h.b16 %v204
    %v2006 = vunpack.c.l.b16 %v205
    %v2007 = vunpack.c.h.b16 %v205
    %v2008 = vunpack.c.l.b16 %v206
    %v2009 = vunpack.c.h.b16 %v206
    %v2010 = vunpack.c.l.b16 %v207
    %v2011 = vunpack.c.h.b16 %v207
    %v2012 = vunpack.c.l.b16 %v208
    %v2013 = vunpack.c.h.b16 %v208
    %v2014 = vunpack.c.l.b16 %v209
    %v2015 = vunpack.c.h.b16 %v209
    %v2016 = vunpack.c.l.b16 %v210
    %v2017 = vunpack.c.h.b16 %v210
    %v2018 = vunpack.c.l.b16 %v211
    %v2019 = vunpack.c.h.b16 %v211
    %v2020 = vunpack.c.l.b16 %v212
    %v2021 = vunpack.c.h.b16 %v212
    %v2022 = vunpack.c.l.b16 %v213
    %v2023 = vunpack.c.h.b16 %v213
    %v2024 = vunpack.c.l.b16 %v214
    %v2025 = vunpack.c.h.b16 %v214
    %v2026 = vunpack.c.l.b16 %v215
    %v2027 = vunpack.c.h.b16 %v215
    %v2028 = vunpack.c.l.b16 %v216
    %v2029 = vunpack.c.h.b16 %v216
    %v2030 = vunpack.c.l.b16 %v217
    %v2031 = vunpack.c.h.b16 %v217
    %v2032 = vunpack.c.l.b16 %v218
    %v2033 = vunpack.c.h.b16 %v218
    %v2034 = vunpack.c.l.b16 %v219
    %v2035 = vunpack.c.h.b16 %v219
    %v2036 = vunpack.c.l.b16 %v220
    %v2037 = vunpack.c.h.b16 %v220
    %v2038 = vunpack.c.l.b16 %v221
    %v2039 = vunpack.c.h.b16 %v221
    %v2040 = vunpack.c.l.b16 %v222
    %v2041 = vunpack.c.h.b16 %v222
    %v2042 = vunpack.c.l.b16 %v223
    %v2043 = vunpack.c.h.b16 %v223
    %v2044 = vunpack.c.l.b16 %v224
    %v2045 = vunpack.c.h.b16 %v224
    %v2046 = vunpack.c.l.b16 %v225
    %v2047 = vunpack.c.h.b16 %v225
    %v2048 = vunpack.c.l.b16 %v226
    %v2049 = vunpack.c.h.b16 %v226
    %v2050 = vunpack.c.l.b16 %v227
    %v2051 = vunpack.c.h.b16 %v227
    %v2052 = vunpack.c.l.b16 %v228
    %v2053 = vunpack.c.h.b16 %v228
    %v2054 = vunpack.c.l.b16 %v229
    %v2055 = vunpack.c.h.b16 %v229
    %v2056 = vunpack.c.l.b16 %v230
    %v2057 = vunpack.c.h.b16 %v230
    %v2058 = vunpack.c.l.b16 %v231
    %v2059 = vunpack.c.h.b16 %v231
    %v2060 = vunpack.c.l.b16 %v232
    %v2061 = vunpack.c.h.b16 %v232
    %v2062 = vunpack.c.l.b16 %v233
    %v2063 = vunpack.c.h.b16 %v233
    %v2064 = vunpack.c.l.b16 %v234
    %v2065 = vunpack.c.h.b16 %v234
    %v2066 = vunpack.c.l.b16 %v235
    %v2067 = vunpack.c.h.b16 %v235
    %v2068 = vunpack.c.l.b16 %v236
    %v2069 = vunpack.c.h.b16 %v236
    %v2070 = vunpack.c.l.b16 %v237
    %v2071 = vunpack.c.h.b16 %v237
    %v2072 = vunpack.c.l.b16 %v238
    %v2073 = vunpack.c.h.b16 %v238
    %v2074 = vunpack.c.l.b16 %v239
    %v2075 = vunpack.c.h.b16 %v239
    %v2076 = vunpack.c.l.b16 %v240
    %v2077 = vunpack.c.h.b16 %v240
    %v2078 = vunpack.c.l.b16 %v241
    %v2079 = vunpack.c.h.b16 %v241
    %v2080 = vunpack.c.l.b16 %v242
    %v2081 = vunpack.c.h.b16 %v242
    %v2082 = vunpack.c.l.b16 %v243
    %v2083 = vunpack.c.h.b16 %v243
    %v2084 = vunpack.c.l.b16 %v244
    %v2085 = vunpack.c.h.b16 %v244
    %v2086 = vunpack.c.l.b16 %v245
    %v2087 = vunpack.c.h.b16 %v245
    %v2088 = vunpack.c.l.b16 %v246
    %v2089 = vunpack.c.h.b16 %v246
    %v2090 = vunpack.c.l.b16 %v247
    %v2091 = vunpack.c.h.b16 %v247
    %v2092 = vunpack.c.l.b16 %v248
    %v2093 = vunpack.c.h.b16 %v248
    %v2094 = vunpack.c.l.b16 %v249
    %v2095 = vunpack.c.h.b16 %v249
    %v2096 = vunpack.c.l.b16 %v250
    %v2097 = vunpack.c.h.b16 %v250
    %v2098 = vunpack.c.l.b16 %v251
    %v2099 = vunpack.c.h.b16 %v251
    %v2100 = vunpack.c.l.b16 %v252
    %v2101 = vunpack.c.h.b16 %v252
    %v2102 = vunpack.c.l.b16 %v253
    %v2103 = vunpack.c.h.b16 %v253
    %v2104 = vunpack.c.l.b16 %v254
    %v2105 = vunpack.c.h.b16 %v254
    %v2106 = vunpack.c.l.b16 %v255
    %v2107 = vunpack.c.h.b16 %v255
    %v2108 = vunpack.c.l.b16 %v256
    %v2109 = vunpack.c.h.b16 %v256
    %v2110 = vunpack.c.l.b16 %v257
    %v2111 = vunpack.c.h.b16 %v257
    %v2112 = vunpack.c.l.b16 %v258
    %v2113 = vunpack.c.h.b16 %v258
    %v2114 = vunpack.c.l.b16 %v259
    %v2115 = vunpack.c.h.b16 %v259
    %v2116 = vunpack.c.l.b16 %v260
    %v2117 = vunpack.c.h.b16 %v260
    %v2118 = vunpack.c.l.b16 %v261
    %v2119 = vunpack.c.h.b16 %v261
    %v2120 = vunpack.c.l.b16 %v262
    %v2121 = vunpack.c.h.b16 %v262
    %v2122 = vunpack.c.l.b16 %v263
    %v2123 = vunpack.c.h.b16 %v263
    %v2124 = vunpack.c.l.b16 %v264
    %v2125 = vunpack.c.h.b16 %v264
    %v2126 = vunpack.c.l.b16 %v265
    %v2127 = vunpack.c.h.b16 %v265
    %v2128 = vunpack.c.l.b16 %v266
    %v2129 = vunpack.c.h.b16 %v266
    %v2130 = vunpack.c.l.b16 %v267
    %v2131 = vunpack.c.h.b16 %v267
    %v2132 = vunpack.c.l.b16 %v268
    %v2133 = vunpack.c.h.b16 %v268
    %v2134 = vunpack.c.l.b16 %v269
    %v2135 = vunpack.c.h.b16 %v269
    %v2136 = vunpack.c.l.b16 %v270
    %v2137 = vunpack.c.h.b16 %v270
    %v2138 = vunpack.c.l.b16 %v271
    %v2139 = vunpack.c.h.b16 %v271
    %v2140 = vunpack.c.l.b16 %v272
    %v2141 = vunpack.c.h.b16 %v272
    %v2142 = vunpack.c.l.b16 %v273
    %v2143 = vunpack.c.h.b16 %v273
    %v2144 = vunpack.c.l.b16 %v274
    %v2145 = vunpack.c.h.b16 %v274
    %v2146 = vunpack.c.l.b16 %v275
    %v2147 = vunpack.c.h.b16 %v275
    %v2148 = vunpack.c.l.b16 %v276
    %v2149 = vunpack.c.h.b16 %v276
    %v2150 = vunpack.c.l.b16 %v277
    %v2151 = vunpack.c.h.b16 %v277
    %v2152 = vunpack.c.l.b16 %v278
    %v2153 = vunpack.c.h.b16 %v278
    %v2154 = vunpack.c.l.b16 %v279
    %v2155 = vunpack.c.h.b16 %v279
    %v2156 = vunpack.c.l.b16 %v280
    %v2157 = vunpack.c.h.b16 %v280
    %v2158 = vunpack.c.l.b16 %v281
    %v2159 = vunpack.c.h.b16 %v281
    %v2160 = vunpack.c.l.b16 %v282
    %v2161 = vunpack.c.h.b16 %v282
    %v2162 = vunpack.c.l.b16 %v283
    %v2163 = vunpack.c.h.b16 %v283
    %v2164 = vunpack.c.l.b16 %v284
    %v2165 = vunpack.c.h.b16 %v284
    %v2166 = vunpack.c.l.b16 %v285
    %v2167 = vunpack.c.h.b16 %v285
    %v2168 = vunpack.c.l.b16 %v286
    %v2169 = vunpack.c.h.b16 %v286
    %v2170 = vunpack.c.l.b16 %v287
    %v2171 = vunpack.c.h.b16 %v287
    %v2172 = vunpack.c.l.b16 %v288
    %v2173 = vunpack.c.h.b16 %v288
    %v2174 = vunpack.c.l.b16 %v289
    %v2175 = vunpack.c.h.b16 %v289
    %v2176 = vunpack.c.l.b16 %v290
    %v2177 = vunpack.c.h.b16 %v290
    %v2178 = vunpack.c.l.b16 %v291
    %v2179 = vunpack.c.h.b16 %v291
    %v2180 = vunpack.c.l.b16 %v292
    %v2181 = vunpack.c.h.b16 %v292
    %v2182 = vunpack.c.l.b16 %v293
    %v2183 = vunpack.c.h.b16 %v293
    %v2184 = vunpack.c.l.b16 %v294
    %v2185 = vunpack.c.h.b16 %v294
    %v2186 = vunpack.c.l.b16 %v295
    %v2187 = vunpack.c.h.b16 %v295
    %v2188 = vunpack.c.l.b16 %v296
    %v2189 = vunpack.c.h.b16 %v296
    %v2190 = vunpack.c.l.b16 %v297
    %v2191 = vunpack.c.h.b16 %v297
    %v2192 = vunpack.c.l.b16 %v298
    %v2193 = vunpack.c.h.b16 %v298
    %v2194 = vunpack.c.l.b16 %v299
    %v2195 = vunpack.c.h.b16 %v299
    %v2196 = vunpack.c.l.b16 %v300
    %v2197 = vunpack.c.h.b16 %v300
    %v2198 = vunpack.c.l.b16 %v301
    %v2199 = vunpack.c.h.b16 %v301
    %v2200 = vunpack.c.l.b16 %v302
    %v2201 = vunpack.c.h.b16 %v302
    %v2202 = vunpack.c.l.b16 %v303
    %v2203 = vunpack.c.h.b16 %v303
    %v2204 = vunpack.c.l.b16 %v304
    %v2205 = vunpack.c.h.b16 %v304
    %v2206 = vunpack.c.l.b16 %v305
    %v2207 = vunpack.c.h.b16 %v305
    %v2208 = vunpack.c.l.b16 %v306
    %v2209 = vunpack.c.h.b16 %v306
    %v2210 = vunpack.c.l.b16 %v307
    %v2211 = vunpack.c.h.b16 %v307
    %v2212 = vunpack.c.l.b16 %v308
    %v2213 = vunpack.c.h.b16 %v308
    %v2214 = vunpack.c.l.b16 %v309
    %v2215 = vunpack.c.h.b16 %v309
    %v2216 = vunpack.c.l.b16 %v310
    %v2217 = vunpack.c.h.b16 %v310
    %v2218 = vunpack.c.l.b16 %v311
    %v2219 = vunpack.c.h.b16 %v311
    %v2220 = vunpack.c.l.b16 %v312
    %v2221 = vunpack.c.h.b16 %v312
    %v2222 = vunpack.c.l.b16 %v313
    %v2223 = vunpack.c.h.b16 %v313
    %v2224 = vunpack.c.l.b16 %v314
    %v2225 = vunpack.c.h.b16 %v314
    %v2226 = vunpack.c.l.b16 %v315
    %v2227 = vunpack.c.h.b16 %v315
    %v2228 = vunpack.c.l.b16 %v316
    %v2229 = vunpack.c.h.b16 %v316
    %v2230 = vunpack.c.l.b16 %v317
    %v2231 = vunpack.c.h.b16 %v317
    %v2232 = vunpack.c.l.b16 %v318
    %v2233 = vunpack.c.h.b16 %v318
    %v2234 = vunpack.c.l.b16 %v319
    %v2235 = vunpack.c.h.b16 %v319
    %v2236 = vunpack.c.l.b16 %v320
    %v2237 = vunpack.c.h.b16 %v320
    %v2238 = vunpack.c.l.b16 %v321
    %v2239 = vunpack.c.h.b16 %v321
    %v2240 = vunpack.c.l.b16 %v322
    %v2241 = vunpack.c.h.b16 %v322
    %v2242 = vunpack.c.l.b16 %v323
    %v2243 = vunpack.c.h.b16 %v323
    %v2244 = vunpack.c.l.b16 %v324
    %v2245 = vunpack.c.h.b16 %v324
    %v2246 = vunpack.c.l.b16 %v325
    %v2247 = vunpack.c.h.b16 %v325
    %v2248 = vunpack.c.l.b16 %v326
    %v2249 = vunpack.c.h.b16 %v326
    %v2250 = vunpack.c.l.b16 %v327
    %v2251 = vunpack.c.h.b16 %v327
    %v2252 = vunpack.c.l.b16 %v328
    %v2253 = vunpack.c.h.b16 %v328
    %v2254 = vunpack.c.l.b16 %v329
    %v2255 = vunpack.c.h.b16 %v329
    %v2256 = vunpack.c.l.b16 %v330
    %v2257 = vunpack.c.h.b16 %v330
    %v2258 = vunpack.c.l.b16 %v331
    %v2259 = vunpack.c.h.b16 %v331
    %v2260 = vunpack.c.l.b16 %v332
    %v2261 = vunpack.c.h.b16 %v332
    %v2262 = vunpack.c.l.b16 %v333
    %v2263 = vunpack.c.h.b16 %v333
    %v2264 = vunpack.c.l.b16 %v334
    %v2265 = vunpack.c.h.b16 %v334
    %v2266 = vunpack.c.l.b16 %v335
    %v2267 = vunpack.c.h.b16 %v335
    %v2268 = vunpack.c.l.b16 %v336
    %v2269 = vunpack.c.h.b16 %v336
    %v2270 = vunpack.c.l.b16 %v337
    %v2271 = vunpack.c.h.b16 %v337
    %v2272 = vunpack.c.l.b16 %v338
    %v2273 = vunpack.c.h.b16 %v338
    %v2274 = vunpack.c.l.b16 %v339
    %v2275 = vunpack.c.h.b16 %v339
    %v2276 = vunpack.c.l.b16 %v340
    %v2277 = vunpack.c.h.b16 %v340
    %v2278 = vunpack.c.l.b16 %v341
    %v2279 = vunpack.c.h.b16 %v341
    %v2280 = vunpack.c.l.b16 %v342
    %v2281 = vunpack.c.h.b16 %v342
    %v2282 = vunpack.c.l.b16 %v343
    %v2283 = vunpack.c.h.b16 %v343
    %v2284 = vunpack.c.l.b16 %v344
    %v2285 = vunpack.c.h.b16 %v344
    %v2286 = vunpack.c.l.b16 %v345
    %v2287 = vunpack.c.h.b16 %v345
    %v2288 = vunpack.c.l.b16 %v346
    %v2289 = vunpack.c.h.b16 %v346
    %v2290 = vunpack.c.l.b16 %v347
    %v2291 = vunpack.c.h.b16 %v347
    %v2292 = vunpack.c.l.b16 %v348
    %v2293 = vunpack.c.h.b16 %v348
    %v2294 = vunpack.c.l.b16 %v349
    %v2295 = vunpack.c.h.b16 %v349
    %v2296 = vunpack.c.l.b16 %v350
    %v2297 = vunpack.c.h.b16 %v350
    %v2298 = vunpack.c.l.b16 %v351
    %v2299 = vunpack.c.h.b16 %v351
    %v2300 = vunpack.c.l.b16 %v352
    %v2301 = vunpack.c.h.b16 %v352
    %v2302 = vunpack.c.l.b16 %v353
    %v2303 = vunpack.c.h.b16 %v353
    %v2304 = vunpack.c.l.b16 %v354
    %v2305 = vunpack.c.h.b16 %v354
    %v2306 = vunpack.c.l.b16 %v355
    %v2307 = vunpack.c.h.b16 %v355
    %v2308 = vunpack.c.l.b16 %v356
    %v2309 = vunpack.c.h.b16 %v356
    %v2310 = vunpack.c.l.b16 %v357
    %v2311 = vunpack.c.h.b16 %v357
    %v2312 = vunpack.c.l.b16 %v358
    %v2313 = vunpack.c.h.b16 %v358
    %v2314 = vunpack.c.l.b16 %v359
    %v2315 = vunpack.c.h.b16 %v359
    %v2316 = vunpack.c.l.b16 %v360
    %v2317 = vunpack.c.h.b16 %v360
    %v2318 = vunpack.c.l.b16 %v361
    %v2319 = vunpack.c.h.b16 %v361
    %v2320 = vunpack.c.l.b16 %v362
    %v2321 = vunpack.c.h.b16 %v362
    %v2322 = vunpack.c.l.b16 %v363
    %v2323 = vunpack.c.h.b16 %v363
    %v2324 = vunpack.c.l.b16 %v364
    %v2325 = vunpack.c.h.b16 %v364
    %v2326 = vunpack.c.l.b16 %v365
    %v2327 = vunpack.c.h.b16 %v365
    %v2328 = vunpack.c.l.b16 %v366
    %v2329 = vunpack.c.h.b16 %v366
    %v2330 = vunpack.c.l.b16 %v367
    %v2331 = vunpack.c.h.b16 %v367
    %v2332 = vunpack.c.l.b16 %v368
    %v2333 = vunpack.c.h.b16 %v368
    %v2334 = vunpack.c.l.b16 %v369
    %v2335 = vunpack.c.h.b16 %v369
    %v2336 = vunpack.c.l.b16 %v370
    %v2337 = vunpack.c.h.b16 %v370
    %v2338 = vunpack.c.l.b16 %v371
    %v2339 = vunpack.c.h.b16 %v371
    %v2340 = vunpack.c.l.b16 %v372
    %v2341 = vunpack.c.h.b16 %v372
    %v2342 = vunpack.c.l.b16 %v373
    %v2343 = vunpack.c.h.b16 %v373
    %v2344 = vunpack.c.l.b16 %v374
    %v2345 = vunpack.c.h.b16 %v374
    %v2346 = vunpack.c.l.b16 %v375
    %v2347 = vunpack.c.h.b16 %v375
    %v2348 = vunpack.c.l.b16 %v376
    %v2349 = vunpack.c.h.b16 %v376
    %v2350 = vunpack.c.l.b16 %v377
    %v2351 = vunpack.c.h.b16 %v377
    %v2352 = vunpack.c.l.b16 %v378
    %v2353 = vunpack.c.h.b16 %v378
    %v2354 = vunpack.c.l.b16 %v379
    %v2355 = vunpack.c.h.b16 %v379
    %v2356 = vunpack.c.l.b16 %v380
    %v2357 = vunpack.c.h.b16 %v380
    %v2358 = vunpack.c.l.b16 %v381
    %v2359 = vunpack.c.h.b16 %v381
    %v2360 = vunpack.c.l.b16 %v382
    %v2361 = vunpack.c.h.b16 %v382
    %v2362 = vunpack.c.l.b16 %v383
    %v2363 = vunpack.c.h.b16 %v383
    %v2364 = vunpack.c.l.b16 %v384
    %v2365 = vunpack.c.h.b16 %v384
    %v2366 = vunpack.c.l.b16 %v385
    %v2367 = vunpack.c.h.b16 %v385
    %v2368 = vunpack.c.l.b16 %v386
    %v2369 = vunpack.c.h.b16 %v386
    %v2370 = vunpack.c.l.b16 %v387
    %v2371 = vunpack.c.h.b16 %v387
    %v2372 = vunpack.c.l.b16 %v388
    %v2373 = vunpack.c.h.b16 %v388
    %v2374 = vunpack.c.l.b16 %v389
    %v2375 = vunpack.c.h.b16 %v389
    %v2376 = vunpack.c.l.b16 %v390
    %v2377 = vunpack.c.h.b16 %v390
    %v2378 = vunpack.c.l.b16 %v391
    %v2379 = vunpack.c.h.b16 %v391
    %v2380 = vunpack.c.l.b16 %v392
    %v2381 = vunpack.c.h.b16 %v392
    %v2382 = vunpack.c.l.b16 %v393
    %v2383 = vunpack.c.h.b16 %v393
    %v2384 = vunpack.c.l.b16 %v394
    %v2385 = vunpack.c.h.b16 %v394
    %v2386 = vunpack.c.l.b16 %v395
    %v2387 = vunpack.c.h.b16 %v395
    %v2388 = vunpack.c.l.b16 %v396
    %v2389 = vunpack.c.h.b16 %v396
    %v2390 = vunpack.c.l.b16 %v397
    %v2391 = vunpack.c.h.b16 %v397
    %v2392 = vunpack.c.l.b16 %v398
    %v2393 = vunpack.c.h.b16 %v398
    %v2394 = vunpack.c.l.b16 %v399
    %v2395 = vunpack.c.h.b16 %v399
    %v2396 = vunpack.c.l.b16 %v400
    %v2397 = vunpack.c.h.b16 %v400
    %v2398 = vunpack.c.l.b16 %v401
    %v2399 = vunpack.c.h.b16 %v401
    %v2400 = vunpack.c.l.b16 %v402
    %v2401 = vunpack.c.h.b16 %v402
    %v2402 = vunpack.c.l.b16 %v403
    %v2403 = vunpack.c.h.b16 %v403
    %v2404 = vunpack.c.l.b16 %v404
    %v2405 = vunpack.c.h.b16 %v404
    %v2406 = vunpack.c.l.b16 %v405
    %v2407 = vunpack.c.h.b16 %v405
    %v2408 = vunpack.c.l.b16 %v406
    %v2409 = vunpack.c.h.b16 %v406
    %v2410 = vunpack.c.l.b16 %v407
    %v2411 = vunpack.c.h.b16 %v407
    %v2412 = vunpack.c.l.b16 %v408
    %v2413 = vunpack.c.h.b16 %v408
    %v2414 = vunpack.c.l.b16 %v409
    %v2415 = vunpack.c.h.b16 %v409
    %v2416 = vunpack.c.l.b16 %v410
    %v2417 = vunpack.c.h.b16 %v410
    %v2418 = vunpack.c.l.b16 %v411
    %v2419 = vunpack.c.h.b16 %v411
    %v2420 = vunpack.c.l.b16 %v412
    %v2421 = vunpack.c.h.b16 %v412
    %v2422 = vunpack.c.l.b16 %v413
    %v2423 = vunpack.c.h.b16 %v413
    %v2424 = vunpack.c.l.b16 %v414
    %v2425 = vunpack.c.h.b16 %v414
    %v2426 = vunpack.c.l.b16 %v415
    %v2427 = vunpack.c.h.b16 %v415
    %v2428 = vunpack.c.l.b16 %v416
    %v2429 = vunpack.c.h.b16 %v416
    %v2430 = vunpack.c.l.b16 %v417
    %v2431 = vunpack.c.h.b16 %v417
    %v2432 = vunpack.c.l.b16 %v418
    %v2433 = vunpack.c.h.b16 %v418
    %v2434 = vunpack.c.l.b16 %v419
    %v2435 = vunpack.c.h.b16 %v419
    %v2436 = vunpack.c.l.b16 %v420
    %v2437 = vunpack.c.h.b16 %v420
    %v2438 = vunpack.c.l.b16 %v421
    %v2439 = vunpack.c.h.b16 %v421
    %v2440 = vunpack.c.l.b16 %v422
    %v2441 = vunpack.c.h.b16 %v422
    %v2442 = vunpack.c.l.b16 %v423
    %v2443 = vunpack.c.h.b16 %v423
    %v2444 = vunpack.c.l.b16 %v424
    %v2445 = vunpack.c.h.b16 %v424
    %v2446 = vunpack.c.l.b16 %v425
    %v2447 = vunpack.c.h.b16 %v425
    %v2448 = vunpack.c.l.b16 %v426
    %v2449 = vunpack.c.h.b16 %v426
    %v2450 = vunpack.c.l.b16 %v427
    %v2451 = vunpack.c.h.b16 %v427
    %v2452 = vunpack.c.l.b16 %v428
    %v2453 = vunpack.c.h.b16 %v428
    %v2454 = vunpack.c.l.b16 %v429
    %v2455 = vunpack.c.h.b16 %v429
    %v2456 = vunpack.c.l.b16 %v430
    %v2457 = vunpack.c.h.b16 %v430
    %v2458 = vunpack.c.l.b16 %v431
    %v2459 = vunpack.c.h.b16 %v431
    %v2460 = vunpack.c.l.b16 %v432
    %v2461 = vunpack.c.h.b16 %v432
    %v2462 = vunpack.c.l.b16 %v433
    %v2463 = vunpack.c.h.b16 %v433
    %v2464 = vunpack.c.l.b16 %v434
    %v2465 = vunpack.c.h.b16 %v434
    %v2466 = vunpack.c.l.b16 %v435
    %v2467 = vunpack.c.h.b16 %v435
    %v2468 = vunpack.c.l.b16 %v436
    %v2469 = vunpack.c.h.b16 %v436
    %v2470 = vunpack.c.l.b16 %v437
    %v2471 = vunpack.c.h.b16 %v437
    %v2472 = vunpack.c.l.b16 %v438
    %v2473 = vunpack.c.h.b16 %v438
    %v2474 = vunpack.c.l.b16 %v439
    %v2475 = vunpack.c.h.b16 %v439
    %v2476 = vunpack.c.l.b16 %v440
    %v2477 = vunpack.c.h.b16 %v440
    %v2478 = vunpack.c.l.b16 %v441
    %v2479 = vunpack.c.h.b16 %v441
    %v2480 = vunpack.c.l.b16 %v442
    %v2481 = vunpack.c.h.b16 %v442
    %v2482 = vunpack.c.l.b16 %v443
    %v2483 = vunpack.c.h.b16 %v443
    %v2484 = vunpack.c.l.b16 %v444
    %v2485 = vunpack.c.h.b16 %v444
    %v2486 = vunpack.c.l.b16 %v445
    %v2487 = vunpack.c.h.b16 %v445
    %v2488 = vunpack.c.l.b16 %v446
    %v2489 = vunpack.c.h.b16 %v446
    %v2490 = vunpack.c.l.b16 %v447
    %v2491 = vunpack.c.h.b16 %v447
    %v2492 = vunpack.c.l.b16 %v448
    %v2493 = vunpack.c.h.b16 %v448
    %v2494 = vunpack.c.l.b16 %v449
    %v2495 = vunpack.c.h.b16 %v449
    %v2496 = vunpack.c.l.b16 %v450
    %v2497 = vunpack.c.h.b16 %v450
    %v2498 = vunpack.c.l.b16 %v451
    %v2499 = vunpack.c.h.b16 %v451
    %v2500 = vunpack.c.l.b16 %v452
    %v2501 = vunpack.c.h.b16 %v452
    %v2502 = vunpack.c.l.b16 %v453
    %v2503 = vunpack.c.h.b16 %v453
    %v2504 = vunpack.c.l.b16 %v454
    %v2505 = vunpack.c.h.b16 %v454
    %v2506 = vunpack.c.l.b16 %v455
    %v2507 = vunpack.c.h.b16 %v455
    %v2508 = vunpack.c.l.b16 %v456
    %v2509 = vunpack.c.h.b16 %v456
    %v2510 = vunpack.c.l.b16 %v457
    %v2511 = vunpack.c.h.b16 %v457
    %v2512 = vunpack.c.l.b16 %v458
    %v2513 = vunpack.c.h.b16 %v458
    %v2514 = vunpack.c.l.b16 %v459
    %v2515 = vunpack.c.h.b16 %v459
    %v2516 = vunpack.c.l.b16 %v460
    %v2517 = vunpack.c.h.b16 %v460
    %v2518 = vunpack.c.l.b16 %v461
    %v2519 = vunpack.c.h.b16 %v461
    %v2520 = vunpack.c.l.b16 %v462
    %v2521 = vunpack.c.h.b16 %v462
    %v2522 = vunpack.c.l.b16 %v463
    %v2523 = vunpack.c.h.b16 %v463
    %v2524 = vunpack.c.l.b16 %v464
    %v2525 = vunpack.c.h.b16 %v464
    %v2526 = vunpack.c.l.b16 %v465
    %v2527 = vunpack.c.h.b16 %v465
    %v2528 = vunpack.c.l.b16 %v466
    %v2529 = vunpack.c.h.b16 %v466
    %v2530 = vunpack.c.l.b16 %v467
    %v2531 = vunpack.c.h.b16 %v467
    %v2532 = vunpack.c.l.b16 %v468
    %v2533 = vunpack.c.h.b16 %v468
    %v2534 = vunpack.c.l.b16 %v469
    %v2535 = vunpack.c.h.b16 %v469
    %v2536 = vunpack.c.l.b16 %v470
    %v2537 = vunpack.c.h.b16 %v470
    %v2538 = vunpack.c.l.b16 %v471
    %v2539 = vunpack.c.h.b16 %v471
    %v2540 = vunpack.c.l.b16 %v472
    %v2541 = vunpack.c.h.b16 %v472
    %v2542 = vunpack.c.l.b16 %v473
    %v2543 = vunpack.c.h.b16 %v473
    %v2544 = vunpack.c.l.b16 %v474
    %v2545 = vunpack.c.h.b16 %v474
    %v2546 = vunpack.c.l.b16 %v475
    %v2547 = vunpack.c.h.b16 %v475
    %v2548 = vunpack.c.l.b16 %v476
    %v2549 = vunpack.c.h.b16 %v476
    %v2550 = vunpack.c.l.b16 %v477
    %v2551 = vunpack.c.h.b16 %v477
    %v2552 = vunpack.c.l.b16 %v478
    %v2553 = vunpack.c.h.b16 %v478
    %v2554 = vunpack.c.l.b16 %v479
    %v2555 = vunpack.c.h.b16 %v479
    %v2556 = vunpack.c.l.b16 %v480
    %v2557 = vunpack.c.h.b16 %v480
    %v2558 = vunpack.c.l.b16 %v481
    %v2559 = vunpack.c.h.b16 %v481
    %v2560 = vunpack.c.l.b16 %v482
    %v2561 = vunpack.c.h.b16 %v482
    %v2562 = vunpack.c.l.b16 %v483
    %v2563 = vunpack.c.h.b16 %v483
    %v2564 = vunpack.c.l.b16 %v484
    %v2565 = vunpack.c.h.b16 %v484
    %v2566 = vunpack.c.l.b16 %v485
    %v2567 = vunpack.c.h.b16 %v485
    %v2568 = vunpack.c.l.b16 %v486
    %v2569 = vunpack.c.h.b16 %v486
    %v2570 = vunpack.c.l.b16 %v487
    %v2571 = vunpack.c.h.b16 %v487
    %v2572 = vunpack.c.l.b16 %v488
    %v2573 = vunpack.c.h.b16 %v488
    %v2574 = vunpack.c.l.b16 %v489
    %v2575 = vunpack.c.h.b16 %v489
    %v2576 = vunpack.c.l.b16 %v490
    %v2577 = vunpack.c.h.b16 %v490
    %v2578 = vunpack.c.l.b16 %v491
    %v2579 = vunpack.c.h.b16 %v491
    %v2580 = vunpack.c.l.b16 %v492
    %v2581 = vunpack.c.h.b16 %v492
    %v2582 = vunpack.c.l.b16 %v493
    %v2583 = vunpack.c.h.b16 %v493
    %v2584 = vunpack.c.l.b16 %v494
    %v2585 = vunpack.c.h.b16 %v494
    %v2586 = vunpack.c.l.b16 %v495
    %v2587 = vunpack.c.h.b16 %v495
    %v2588 = vunpack.c.l.b16 %v496
    %v2589 = vunpack.c.h.b16 %v496
    %v2590 = vunpack.c.l.b16 %v497
    %v2591 = vunpack.c.h.b16 %v497
    %v2592 = vunpack.c.l.b16 %v498
    %v2593 = vunpack.c.h.b16 %v498
    %v2594 = vunpack.c.l.b16 %v499
    %v2595 = vunpack.c.h.b16 %v499
    %v2596 = vunpack.c.l.b16 %v500
    %v2597 = vunpack.c.h.b16 %v500
    %v2598 = vunpack.c.l.b16 %v501
    %v2599 = vunpack.c.h.b16 %v501
    %v2600 = vunpack.c.l.b16 %v502
    %v2601 = vunpack.c.h.b16 %v502
    %v2602 = vunpack.c.l.b16 %v503
    %v2603 = vunpack.c.h.b16 %v503
    %v2604 = vunpack.c.l.b16 %v504
    %v2605 = vunpack.c.h.b16 %v504
    %v2606 = vunpack.c.l.b16 %v505
    %v2607 = vunpack.c.h.b16 %v505
    %v2608 = vunpack.c.l.b16 %v506
    %v2609 = vunpack.c.h.b16 %v506
    %v2610 = vunpack.c.l.b16 %v507
    %v2611 = vunpack.c.h.b16 %v507
    %v2612 = vunpack.c.l.b16 %v508
    %v2613 = vunpack.c.h.b16 %v508
    %v2614 = vunpack.c.l.b16 %v509
    %v2615 = vunpack.c.h.b16 %v509
    %v2616 = vunpack.c.l.b16 %v510
    %v2617 = vunpack.c.h.b16 %v510
    %v2618 = vunpack.c.l.b16 %v511
    %v2619 = vunpack.c.h.b16 %v511
    %v2620 = vunpack.c.l.b16 %v512
    %v2621 = vunpack.c.h.b16 %v512
    %v2622 = vunpack.c.l.b16 %v513
    %v2623 = vunpack.c.h.b16 %v513
    %v2624 = vunpack.c.l.b16 %v514
    %v2625 = vunpack.c.h.b16 %v514
    %v2626 = vunpack.c.l.b16 %v515
    %v2627 = vunpack.c.h.b16 %v515
    %v2628 = vunpack.c.l.b16 %v516
    %v2629 = vunpack.c.h.b16 %v516
    %v2630 = vunpack.c.l.b16 %v517
    %v2631 = vunpack.c.h.b16 %v517
    %v2632 = vunpack.c.l.b16 %v518
    %v2633 = vunpack.c.h.b16 %v518
    %v2634 = vunpack.c.l.b16 %v519
    %v2635 = vunpack.c.h.b16 %v519
    %v2636 = vunpack.c.l.b16 %v520
    %v2637 = vunpack.c.h.b16 %v520
    %v2638 = vunpack.c.l.b16 %v521
    %v2639 = vunpack.c.h.b16 %v521
    %v2640 = vunpack.c.l.b16 %v522
    %v2641 = vunpack.c.h.b16 %v522
    %v2642 = vunpack.c.l.b16 %v523
    %v2643 = vunpack.c.h.b16 %v523
    %v2644 = vunpack.c.l.b16 %v524
    %v2645 = vunpack.c.h.b16 %v524
    %v2646 = vunpack.c.l.b16 %v525
    %v2647 = vunpack.c.h.b16 %v525
    %v2648 = vunpack.c.l.b16 %v526
    %v2649 = vunpack.c.h.b16 %v526
    %v2650 = vunpack.c.l.b16 %v527
    %v2651 = vunpack.c.h.b16 %v527
    %v2652 = vunpack.c.l.b16 %v528
    %v2653 = vunpack.c.h.b16 %v528
    %v2654 = vunpack.c.l.b16 %v529
    %v2655 = vunpack.c.h.b16 %v529
    %v2656 = vunpack.c.l.b16 %v530
    %v2657 = vunpack.c.h.b16 %v530
    %v2658 = vunpack.c.l.b16 %v531
    %v2659 = vunpack.c.h.b16 %v531
    %v2660 = vunpack.c.l.b16 %v532
    %v2661 = vunpack.c.h.b16 %v532
    %v2662 = vunpack.c.l.b16 %v533
    %v2663 = vunpack.c.h.b16 %v533
    %v2664 = vunpack.c.l.b16 %v534
    %v2665 = vunpack.c.h.b16 %v534
    %v2666 = vunpack.c.l.b16 %v535
    %v2667 = vunpack.c.h.b16 %v535
    %v2668 = vunpack.c.l.b16 %v536
    %v2669 = vunpack.c.h.b16 %v536
    %v2670 = vunpack.c.l.b16 %v537
    %v2671 = vunpack.c.h.b16 %v537
    %v2672 = vunpack.c.l.b16 %v538
    %v2673 = vunpack.c.h.b16 %v538
    %v2674 = vunpack.c.l.b16 %v539
    %v2675 = vunpack.c.h.b16 %v539
    %v2676 = vunpack.c.l.b16 %v540
    %v2677 = vunpack.c.h.b16 %v540
    %v2678 = vunpack.c.l.b16 %v541
    %v2679 = vunpack.c.h.b16 %v541
    %v2680 = vunpack.c.l.b16 %v542
    %v2681 = vunpack.c.h.b16 %v542
    %v2682 = vunpack.c.l.b16 %v543
    %v2683 = vunpack.c.h.b16 %v543
    %v2684 = vunpack.c.l.b16 %v544
    %v2685 = vunpack.c.h.b16 %v544
    %v2686 = vunpack.c.l.b16 %v545
    %v2687 = vunpack.c.h.b16 %v545
    %v2688 = vunpack.c.l.b16 %v546
    %v2689 = vunpack.c.h.b16 %v546
    %v2690 = vunpack.c.l.b16 %v547
    %v2691 = vunpack.c.h.b16 %v547
    %v2692 = vunpack.c.l.b16 %v548
    %v2693 = vunpack.c.h.b16 %v548
    %v2694 = vunpack.c.l.b16 %v549
    %v2695 = vunpack.c.h.b16 %v549
    %v2696 = vunpack.c.l.b16 %v550
    %v2697 = vunpack.c.h.b16 %v550
    %v2698 = vunpack.c.l.b16 %v551
    %v2699 = vunpack.c.h.b16 %v551
    %v2700 = vunpack.c.l.b16 %v552
    %v2701 = vunpack.c.h.b16 %v552
    %v2702 = vunpack.c.l.b16 %v553
    %v2703 = vunpack.c.h.b16 %v553
    %v2704 = vunpack.c.l.b16 %v554
    %v2705 = vunpack.c.h.b16 %v554
    %v2706 = vunpack.c.l.b16 %v555
    %v2707 = vunpack.c.h.b16 %v555
    %v2708 = vunpack.c.l.b16 %v556
    %v2709 = vunpack.c.h.b16 %v556
    %v2710 = vunpack.c.l.b16 %v557
    %v2711 = vunpack.c.h.b16 %v557
    %v2712 = vunpack.c.l.b16 %v558
    %v2713 = vunpack.c.h.b16 %v558
    %v2714 = vunpack.c.l.b16 %v559
    %v2715 = vunpack.c.h.b16 %v559
    %v2716 = vunpack.c.l.b16 %v560
    %v2717 = vunpack.c.h.b16 %v560
    %v2718 = vunpack.c.l.b16 %v561
    %v2719 = vunpack.c.h.b16 %v561
    %v2720 = vunpack.c.l.b16 %v562
    %v2721 = vunpack.c.h.b16 %v562
    %v2722 = vunpack.c.l.b16 %v563
    %v2723 = vunpack.c.h.b16 %v563
    %v2724 = vunpack.c.l.b16 %v564
    %v2725 = vunpack.c.h.b16 %v564
    %v2726 = vunpack.c.l.b16 %v565
    %v2727 = vunpack.c.h.b16 %v565
    %v2728 = vunpack.c.l.b16 %v566
    %v2729 = vunpack.c.h.b16 %v566
    %v2730 = vunpack.c.l.b16 %v567
    %v2731 = vunpack.c.h.b16 %v567
    %v2732 = vunpack.c.l.b16 %v568
    %v2733 = vunpack.c.h.b16 %v568
    %v2734 = vunpack.c.l.b16 %v569
    %v2735 = vunpack.c.h.b16 %v569
    %v2736 = vunpack.c.l.b16 %v570
    %v2737 = vunpack.c.h.b16 %v570
    %v2738 = vunpack.c.l.b16 %v571
    %v2739 = vunpack.c.h.b16 %v571
    %v2740 = vunpack.c.l.b16 %v572
    %v2741 = vunpack.c.h.b16 %v572
    %v2742 = vunpack.c.l.b16 %v573
    %v2743 = vunpack.c.h.b16 %v573
    %v2744 = vunpack.c.l.b16 %v574
    %v2745 = vunpack.c.h.b16 %v574
    %v2746 = vunpack.c.l.b16 %v575
    %v2747 = vunpack.c.h.b16 %v575
    %v2748 = vunpack.c.l.b16 %v576
    %v2749 = vunpack.c.h.b16 %v576
    %v2750 = vunpack.c.l.b16 %v577
    %v2751 = vunpack.c.h.b16 %v577
    %v2752 = vunpack.c.l.b16 %v578
    %v2753 = vunpack.c.h.b16 %v578
    %v2754 = vunpack.c.l.b16 %v579
    %v2755 = vunpack.c.h.b16 %v579
    %v2756 = vunpack.c.l.b16 %v580
    %v2757 = vunpack.c.h.b16 %v580
    %v2758 = vunpack.c.l.b16 %v581
    %v2759 = vunpack.c.h.b16 %v581
    %v2760 = vunpack.c.l.b16 %v582
    %v2761 = vunpack.c.h.b16 %v582
    %v2762 = vunpack.c.l.b16 %v583
    %v2763 = vunpack.c.h.b16 %v583
    %v2764 = vunpack.c.l.b16 %v584
    %v2765 = vunpack.c.h.b16 %v584
    %v2766 = vunpack.c.l.b16 %v585
    %v2767 = vunpack.c.h.b16 %v585
    %v2768 = vunpack.c.l.b16 %v586
    %v2769 = vunpack.c.h.b16 %v586
    %v2770 = vunpack.c.l.b16 %v587
    %v2771 = vunpack.c.h.b16 %v587
    %v2772 = vunpack.c.l.b16 %v588
    %v2773 = vunpack.c.h.b16 %v588
    %v2774 = vunpack.c.l.b16 %v589
    %v2775 = vunpack.c.h.b16 %v589
    %v2776 = vunpack.c.l.b16 %v590
    %v2777 = vunpack.c.h.b16 %v590
    %v2778 = vunpack.c.l.b16 %v591
    %v2779 = vunpack.c.h.b16 %v591
    %v2780 = vunpack.c.l.b16 %v592
    %v2781 = vunpack.c.h.b16 %v592
    %v2782 = vunpack.c.l.b16 %v593
    %v2783 = vunpack.c.h.b16 %v593
    %v2784 = vunpack.c.l.b16 %v594
    %v2785 = vunpack.c.h.b16 %v594
    %v2786 = vunpack.c.l.b16 %v595
    %v2787 = vunpack.c.h.b16 %v595
    %v2788 = vunpack.c.l.b16 %v596
    %v2789 = vunpack.c.h.b16 %v596
    %v2790 = vunpack.c.l.b16 %v597
    %v2791 = vunpack.c.h.b16 %v597
    %v2792 = vunpack.c.l.b16 %v598
    %v2793 = vunpack.c.h.b16 %v598
    %v2794 = vunpack.c.l.b16 %v599
    %v2795 = vunpack.c.h.b16 %v599
    %v2796 = vunpack.c.l.b16 %v600
    %v2797 = vunpack.c.h.b16 %v600
    %v2798 = vunpack.c.l.b16 %v601
    %v2799 = vunpack.c.h.b16 %v601
    %v2800 = vunpack.c.l.b16 %v602
    %v2801 = vunpack.c.h.b16 %v602
    %v2802 = vunpack.c.l.b16 %v603
    %v2803 = vunpack.c.h.b16 %v603
    %v2804 = vunpack.c.l.b16 %v604
    %v2805 = vunpack.c.h.b16 %v604
    %v2806 = vunpack.c.l.b16 %v605
    %v2807 = vunpack.c.h.b16 %v605
    %v2808 = vunpack.c.l.b16 %v606
    %v2809 = vunpack.c.h.b16 %v606
    %v2810 = vunpack.c.l.b16 %v607
    %v2811 = vunpack.c.h.b16 %v607
    %v2812 = vunpack.c.l.b16 %v608
    %v2813 = vunpack.c.h.b16 %v608
    %v2814 = vunpack.c.l.b16 %v609
    %v2815 = vunpack.c.h.b16 %v609
    %v2816 = vunpack.c.l.b16 %v610
    %v2817 = vunpack.c.h.b16 %v610
    %v2818 = vunpack.c.l.b16 %v611
    %v2819 = vunpack.c.h.b16 %v611
    %v2820 = vunpack.c.l.b16 %v612
    %v2821 = vunpack.c.h.b16 %v612
    %v2822 = vunpack.c.l.b16 %v613
    %v2823 = vunpack.c.h.b16 %v613
    %v2824 = vunpack.c.l.b16 %v614
    %v2825 = vunpack.c.h.b16 %v614
    %v2826 = vunpack.c.l.b16 %v615
    %v2827 = vunpack.c.h.b16 %v615
    %v2828 = vunpack.c.l.b16 %v616
    %v2829 = vunpack.c.h.b16 %v616
    %v2830 = vunpack.c.l.b16 %v617
    %v2831 = vunpack.c.h.b16 %v617
    %v2832 = vunpack.c.l.b16 %v618
    %v2833 = vunpack.c.h.b16 %v618
    %v2834 = vunpack.c.l.b16 %v619
    %v2835 = vunpack.c.h.b16 %v619
    %v2836 = vunpack.c.l.b16 %v620
    %v2837 = vunpack.c.h.b16 %v620
    %v2838 = vunpack.c.l.b16 %v621
    %v2839 = vunpack.c.h.b16 %v621
    %v2840 = vunpack.c.l.b16 %v622
    %v2841 = vunpack.c.h.b16 %v622
    %v2842 = vunpack.c.l.b16 %v623
    %v2843 = vunpack.c.h.b16 %v623
    %v2844 = vunpack.c.l.b16 %v624
    %v2845 = vunpack.c.h.b16 %v624
    %v2846 = vunpack.c.l.b16 %v625
    %v2847 = vunpack.c.h.b16 %v625
    %v2848 = vunpack.c.l.b16 %v626
    %v2849 = vunpack.c.h.b16 %v626
    %v2850 = vunpack.c.l.b16 %v627
    %v2851 = vunpack.c.h.b16 %v627
    %v2852 = vunpack.c.l.b16 %v628
    %v2853 = vunpack.c.h.b16 %v628
    %v2854 = vunpack.c.l.b16 %v629
    %v2855 = vunpack.c.h.b16 %v629
    %v2856 = vunpack.c.l.b16 %v630
    %v2857 = vunpack.c.h.b16 %v630
    %v2858 = vunpack.c.l.b16 %v631
    %v2859 = vunpack.c.h.b16 %v631
    %v2860 = vunpack.c.l.b16 %v632
    %v2861 = vunpack.c.h.b16 %v632
    %v2862 = vunpack.c.l.b16 %v633
    %v2863 = vunpack.c.h.b16 %v633
    %v2864 = vunpack.c.l.b16 %v634
    %v2865 = vunpack.c.h.b16 %v634
    %v2866 = vunpack.c.l.b16 %v635
    %v2867 = vunpack.c.h.b16 %v635
    %v2868 = vunpack.c.l.b16 %v636
    %v2869 = vunpack.c.h.b16 %v636
    %v2870 = vunpack.c.l.b16 %v637
    %v2871 = vunpack.c.h.b16 %v637
    %v2872 = vunpack.c.l.b16 %v638
    %v2873 = vunpack.c.h.b16 %v638
    %v2874 = vunpack.c.l.b16 %v639
    %v2875 = vunpack.c.h.b16 %v639
    %v2876 = vunpack.c.l.b16 %v640
    %v2877 = vunpack.c.h.b16 %v640
    %v2878 = vunpack.c.l.b16 %v641
    %v2879 = vunpack.c.h.b16 %v641
    %v2880 = vunpack.c.l.b16 %v642
    %v2881 = vunpack.c.h.b16 %v642
    %v2882 = vunpack.c.l.b16 %v643
    %v2883 = vunpack.c.h.b16 %v643
    %v2884 = vunpack.c.l.b16 %v644
    %v2885 = vunpack.c.h.b16 %v644
    %v2886 = vunpack.c.l.b16 %v645
    %v2887 = vunpack.c.h.b16 %v645
    %v2888 = vunpack.c.l.b16 %v646
    %v2889 = vunpack.c.h.b16 %v646
    %v2890 = vunpack.c.l.b16 %v647
    %v2891 = vunpack.c.h.b16 %v647
    %v2892 = vunpack.c.l.b16 %v648
    %v2893 = vunpack.c.h.b16 %v648
    %v2894 = vunpack.c.l.b16 %v649
    %v2895 = vunpack.c.h.b16 %v649
    %v2896 = vunpack.c.l.b16 %v650
    %v2897 = vunpack.c.h.b16 %v650
    %v2898 = vunpack.c.l.b16 %v651
    %v2899 = vunpack.c.h.b16 %v651
    %v2900 = vunpack.c.l.b16 %v652
    %v2901 = vunpack.c.h.b16 %v652
    %v2902 = vunpack.c.l.b16 %v653
    %v2903 = vunpack.c.h.b16 %v653
    %v2904 = vunpack.c.l.b16 %v654
    %v2905 = vunpack.c.h.b16 %v654
    %v2906 = vunpack.c.l.b16 %v655
    %v2907 = vunpack.c.h.b16 %v655
    %v2908 = vunpack.c.l.b16 %v656
    %v2909 = vunpack.c.h.b16 %v656
    %v2910 = vunpack.c.l.b16 %v657
    %v2911 = vunpack.c.h.b16 %v657
    %v2912 = vunpack.c.l.b16 %v658
    %v2913 = vunpack.c.h.b16 %v658
    %v2914 = vunpack.c.l.b16 %v659
    %v2915 = vunpack.c.h.b16 %v659
    %v2916 = vunpack.c.l.b16 %v660
    %v2917 = vunpack.c.h.b16 %v660
    %v2918 = vunpack.c.l.b16 %v661
    %v2919 = vunpack.c.h.b16 %v661
    %v2920 = vunpack.c.l.b16 %v662
    %v2921 = vunpack.c.h.b16 %v662
    %v2922 = vunpack.c.l.b16 %v663
    %v2923 = vunpack.c.h.b16 %v663
    %v2924 = vunpack.c.l.b16 %v664
    %v2925 = vunpack.c.h.b16 %v664
    %v2926 = vunpack.c.l.b16 %v665
    %v2927 = vunpack.c.h.b16 %v665
    %v2928 = vunpack.c.l.b16 %v666
    %v2929 = vunpack.c.h.b16 %v666
    %v2930 = vunpack.c.l.b16 %v667
    %v2931 = vunpack.c.h.b16 %v667
    %v2932 = vunpack.c.l.b16 %v668
    %v2933 = vunpack.c.h.b16 %v668
    %v2934 = vunpack.c.l.b16 %v669
    %v2935 = vunpack.c.h.b16 %v669
    %v2936 = vunpack.c.l.b16 %v670
    %v2937 = vunpack.c.h.b16 %v670
    %v2938 = vunpack.c.l.b16 %v671
    %v2939 = vunpack.c.h.b16 %v671
    %v2940 = vunpack.c.l.b16 %v672
    %v2941 = vunpack.c.h.b16 %v672
    %v2942 = vunpack.c.l.b16 %v673
    %v2943 = vunpack.c.h.b16 %v673
    %v2944 = vunpack.c.l.b16 %v674
    %v2945 = vunpack.c.h.b16 %v674
    %v2946 = vunpack.c.l.b16 %v675
    %v2947 = vunpack.c.h.b16 %v675
    %v2948 = vunpack.c.l.b16 %v676
    %v2949 = vunpack.c.h.b16 %v676
    %v2950 = vunpack.c.l.b16 %v677
    %v2951 = vunpack.c.h.b16 %v677
    %v2952 = vunpack.c.l.b16 %v678
    %v2953 = vunpack.c.h.b16 %v678
    %v2954 = vunpack.c.l.b16 %v679
    %v2955 = vunpack.c.h.b16 %v679
    %v2956 = vunpack.c.l.b16 %v680
    %v2957 = vunpack.c.h.b16 %v680
    %v2958 = vunpack.c.l.b16 %v681
    %v2959 = vunpack.c.h.b16 %v681
    %v2960 = vunpack.c.l.b16 %v682
    %v2961 = vunpack.c.h.b16 %v682
    %v2962 = vunpack.c.l.b16 %v683
    %v2963 = vunpack.c.h.b16 %v683
    %v2964 = vunpack.c.l.b16 %v684
    %v2965 = vunpack.c.h.b16 %v684
    %v2966 = vunpack.c.l.b16 %v685
    %v2967 = vunpack.c.h.b16 %v685
    %v2968 = vunpack.c.l.b16 %v686
    %v2969 = vunpack.c.h.b16 %v686
    %v2970 = vunpack.c.l.b16 %v687
    %v2971 = vunpack.c.h.b16 %v687
    %v2972 = vunpack.c.l.b16 %v688
    %v2973 = vunpack.c.h.b16 %v688
    %v2974 = vunpack.c.l.b16 %v689
    %v2975 = vunpack.c.h.b16 %v689
    %v2976 = vunpack.c.l.b16 %v690
    %v2977 = vunpack.c.h.b16 %v690
    %v2978 = vunpack.c.l.b16 %v691
    %v2979 = vunpack.c.h.b16 %v691
    %v2980 = vunpack.c.l.b16 %v692
    %v2981 = vunpack.c.h.b16 %v692
    %v2982 = vunpack.c.l.b16 %v693
    %v2983 = vunpack.c.h.b16 %v693
    %v2984 = vunpack.c.l.b16 %v694
    %v2985 = vunpack.c.h.b16 %v694
    %v2986 = vunpack.c.l.b16 %v695
    %v2987 = vunpack.c.h.b16 %v695
    %v2988 = vunpack.c.l.b16 %v696
    %v2989 = vunpack.c.h.b16 %v696
    %v2990 = vunpack.c.l.b16 %v697
    %v2991 = vunpack.c.h.b16 %v697
    %v2992 = vunpack.c.l.b16 %v698
    %v2993 = vunpack.c.h.b16 %v698
    %v2994 = vunpack.c.l.b16 %v699
    %v2995 = vunpack.c.h.b16 %v699
    %v2996 = vunpack.c.l.b16 %v700
    %v2997 = vunpack.c.h.b16 %v700
    %v2998 = vunpack.c.l.b16 %v701
    %v2999 = vunpack.c.h.b16 %v701
    %v3000 = vunpack.c.l.b16 %v702
    %v3001 = vunpack.c.h.b16 %v702
    %v3002 = vunpack.c.l.b16 %v703
    %v3003 = vunpack.c.h.b16 %v703
    %v3004 = vunpack.c.l.b16 %v704
    %v3005 = vunpack.c.h.b16 %v704
    %v3006 = vunpack.c.l.b16 %v705
    %v3007 = vunpack.c.h.b16 %v705
    %v3008 = vunpack.c.l.b16 %v706
    %v3009 = vunpack.c.h.b16 %v706
    %v3010 = vunpack.c.l.b16 %v707
    %v3011 = vunpack.c.h.b16 %v707
    %v3012 = vunpack.c.l.b16 %v708
    %v3013 = vunpack.c.h.b16 %v708
    %v3014 = vunpack.c.l.b16 %v709
    %v3015 = vunpack.c.h.b16 %v709
    %v3016 = vunpack.c.l.b16 %v710
    %v3017 = vunpack.c.h.b16 %v710
    %v3018 = vunpack.c.l.b16 %v711
    %v3019 = vunpack.c.h.b16 %v711
    %v3020 = vunpack.c.l.b16 %v712
    %v3021 = vunpack.c.h.b16 %v712
    %v3022 = vunpack.c.l.b16 %v713
    %v3023 = vunpack.c.h.b16 %v713
    %v3024 = vunpack.c.l.b16 %v714
    %v3025 = vunpack.c.h.b16 %v714
    %v3026 = vunpack.c.l.b16 %v715
    %v3027 = vunpack.c.h.b16 %v715
    %v3028 = vunpack.c.l.b16 %v716
    %v3029 = vunpack.c.h.b16 %v716
    %v3030 = vunpack.c.l.b16 %v717
    %v3031 = vunpack.c.h.b16 %v717
    %v3032 = vunpack.c.l.b16 %v718
    %v3033 = vunpack.c.h.b16 %v718
    %v3034 = vunpack.c.l.b16 %v719
    %v3035 = vunpack.c.h.b16 %v719
    %v3036 = vunpack.c.l.b16 %v720
    %v3037 = vunpack.c.h.b16 %v720
    %v3038 = vunpack.c.l.b16 %v721
    %v3039 = vunpack.c.h.b16 %v721
    %v3040 = vunpack.c.l.b16 %v722
    %v3041 = vunpack.c.h.b16 %v722
    %v3042 = vunpack.c.l.b16 %v723
    %v3043 = vunpack.c.h.b16 %v723
    %v3044 = vunpack.c.l.b16 %v724
    %v3045 = vunpack.c.h.b16 %v724
    %v3046 = vunpack.c.l.b16 %v725
    %v3047 = vunpack.c.h.b16 %v725
    %v3048 = vunpack.c.l.b16 %v726
    %v3049 = vunpack.c.h.b16 %v726
    %v3050 = vunpack.c.l.b16 %v727
    %v3051 = vunpack.c.h.b16 %v727
    %v3052 = vunpack.c.l.b16 %v728
    %v3053 = vunpack.c.h.b16 %v728
    %v3054 = vunpack.c.l.b16 %v729
    %v3055 = vunpack.c.h.b16 %v729
    %v3056 = vunpack.c.l.b16 %v730
    %v3057 = vunpack.c.h.b16 %v730
    %v3058 = vunpack.c.l.b16 %v731
    %v3059 = vunpack.c.h.b16 %v731
    %v3060 = vunpack.c.l.b16 %v732
    %v3061 = vunpack.c.h.b16 %v732
    %v3062 = vunpack.c.l.b16 %v733
    %v3063 = vunpack.c.h.b16 %v733
    %v3064 = vunpack.c.l.b16 %v734
    %v3065 = vunpack.c.h.b16 %v734
    %v3066 = vunpack.c.l.b16 %v735
    %v3067 = vunpack.c.h.b16 %v735
    %v3068 = vunpack.c.l.b16 %v736
    %v3069 = vunpack.c.h.b16 %v736
    %v3070 = vunpack.c.l.b16 %v737
    %v3071 = vunpack.c.h.b16 %v737
    %v3072 = vunpack.c.l.b16 %v738
    %v3073 = vunpack.c.h.b16 %v738
    %v3074 = vunpack.c.l.b16 %v739
    %v3075 = vunpack.c.h.b16 %v739
    %v3076 = vunpack.c.l.b16 %v740
    %v3077 = vunpack.c.h.b16 %v740
    %v3078 = vunpack.c.l.b16 %v741
    %v3079 = vunpack.c.h.b16 %v741
    %v3080 = vunpack.c.l.b16 %v742
    %v3081 = vunpack.c.h.b16 %v742
    %v3082 = vunpack.c.l.b16 %v743
    %v3083 = vunpack.c.h.b16 %v743
    %v3084 = vunpack.c.l.b16 %v744
    %v3085 = vunpack.c.h.b16 %v744
    %v3086 = vunpack.c.l.b16 %v745
    %v3087 = vunpack.c.h.b16 %v745
    %v3088 = vunpack.c.l.b16 %v746
    %v3089 = vunpack.c.h.b16 %v746
    %v3090 = vunpack.c.l.b16 %v747
    %v3091 = vunpack.c.h.b16 %v747
    %v3092 = vunpack.c.l.b16 %v748
    %v3093 = vunpack.c.h.b16 %v748
    %v3094 = vunpack.c.l.b16 %v749
    %v3095 = vunpack.c.h.b16 %v749
    %v3096 = vunpack.c.l.b16 %v750
    %v3097 = vunpack.c.h.b16 %v750
    %v3098 = vunpack.c.l.b16 %v751
    %v3099 = vunpack.c.h.b16 %v751
    %v3100 = vunpack.c.l.b16 %v752
    %v3101 = vunpack.c.h.b16 %v752
    %v3102 = vunpack.c.l.b16 %v753
    %v3103 = vunpack.c.h.b16 %v753
    %v3104 = vunpack.c.l.b16 %v754
    %v3105 = vunpack.c.h.b16 %v754
    %v3106 = vunpack.c.l.b16 %v755
    %v3107 = vunpack.c.h.b16 %v755
    %v3108 = vunpack.c.l.b16 %v756
    %v3109 = vunpack.c.h.b16 %v756
    %v3110 = vunpack.c.l.b16 %v757
    %v3111 = vunpack.c.h.b16 %v757
    %v3112 = vunpack.c.l.b16 %v758
    %v3113 = vunpack.c.h.b16 %v758
    %v3114 = vunpack.c.l.b16 %v759
    %v3115 = vunpack.c.h.b16 %v759
    %v3116 = vunpack.c.l.b16 %v760
    %v3117 = vunpack.c.h.b16 %v760
    %v3118 = vunpack.c.l.b16 %v761
    %v3119 = vunpack.c.h.b16 %v761
    %v3120 = vunpack.c.l.b16 %v762
    %v3121 = vunpack.c.h.b16 %v762
    %v3122 = vunpack.c.l.b16 %v763
    %v3123 = vunpack.c.h.b16 %v763
    %v3124 = vunpack.c.l.b16 %v764
    %v3125 = vunpack.c.h.b16 %v764
    %v3126 = vunpack.c.l.b16 %v765
    %v3127 = vunpack.c.h.b16 %v765
    %v3128 = vunpack.c.l.b16 %v766
    %v3129 = vunpack.c.h.b16 %v766
    %v3130 = vunpack.c.l.b16 %v767
    %v3131 = vunpack.c.h.b16 %v767
    %v3132 = vunpack.c.l.b16 %v768
    %v3133 = vunpack.c.h.b16 %v768
    %v3134 = vunpack.c.l.b16 %v769
    %v3135 = vunpack.c.h.b16 %v769
    %v3136 = vunpack.c.l.b16 %v770
    %v3137 = vunpack.c.h.b16 %v770
    %v3138 = vunpack.c.l.b16 %v771
    %v3139 = vunpack.c.h.b16 %v771
    %v3140 = vunpack.c.l.b16 %v772
    %v3141 = vunpack.c.h.b16 %v772
    %v3142 = vunpack.c.l.b16 %v773
    %v3143 = vunpack.c.h.b16 %v773
    %v3144 = vunpack.c.l.b16 %v774
    %v3145 = vunpack.c.h.b16 %v774
    %v3146 = vunpack.c.l.b16 %v775
    %v3147 = vunpack.c.h.b16 %v775
    %v3148 = vunpack.c.l.b16 %v776
    %v3149 = vunpack.c.h.b16 %v776
    %v3150 = vunpack.c.l.b16 %v777
    %v3151 = vunpack.c.h.b16 %v777
    %v3152 = vunpack.c.l.b16 %v778
    %v3153 = vunpack.c.h.b16 %v778
    %v3154 = vunpack.c.l.b16 %v779
    %v3155 = vunpack.c.h.b16 %v779
    %v3156 = vunpack.c.l.b16 %v780
    %v3157 = vunpack.c.h.b16 %v780
    %v3158 = vunpack.c.l.b16 %v781
    %v3159 = vunpack.c.h.b16 %v781
    %v3160 = vunpack.c.l.b16 %v782
    %v3161 = vunpack.c.h.b16 %v782
    %v3162 = vunpack.c.l.b16 %v783
    %v3163 = vunpack.c.h.b16 %v783
    %v3164 = vunpack.c.l.b16 %v784
    %v3165 = vunpack.c.h.b16 %v784
    %v3166 = vunpack.c.l.b16 %v785
    %v3167 = vunpack.c.h.b16 %v785
    %v3168 = vunpack.c.l.b16 %v786
    %v3169 = vunpack.c.h.b16 %v786
    %v3170 = vunpack.c.l.b16 %v787
    %v3171 = vunpack.c.h.b16 %v787
    %v3172 = vunpack.c.l.b16 %v788
    %v3173 = vunpack.c.h.b16 %v788
    %v3174 = vpack.c.b16 %v1832, %v1830
    %v3175 = vpack.c.b16 %v1833, %v1831
    %v3176 = vpack.c.b16 %v1836, %v1834
    %v3177 = vpack.c.b16 %v1837, %v1835
    %v3178 = vpack.c.b16 %v1840, %v1838
    %v3179 = vpack.c.b16 %v1841, %v1839
    %v3180 = vpack.c.b16 %v1844, %v1842
    %v3181 = vpack.c.b16 %v1845, %v1843
    %v3182 = vpack.c.b16 %v1848, %v1846
    %v3183 = vpack.c.b16 %v1849, %v1847
    %v3184 = vpack.c.b16 %v1852, %v1850
    %v3185 = vpack.c.b16 %v1853, %v1851
    %v3186 = vpack.c.b16 %v1856, %v1854
    %v3187 = vpack.c.b16 %v1857, %v1855
    %v3188 = vpack.c.b16 %v1860, %v1858
    %v3189 = vpack.c.b16 %v1861, %v1859
    %v3190 = vpack.c.b16 %v1864, %v1862
    %v3191 = vpack.c.b16 %v1865, %v1863
    %v3192 = vpack.c.b16 %v1868, %v1866
    %v3193 = vpack.c.b16 %v1869, %v1867
    %v3194 = vpack.c.b16 %v1872, %v1870
    %v3195 = vpack.c.b16 %v1873, %v1871
    %v3196 = vpack.c.b16 %v1876, %v1874
    %v3197 = vpack.c.b16 %v1877, %v1875
    %v3198 = vpack.c.b16 %v1880, %v1878
    %v3199 = vpack.c.b16 %v1881, %v1879
    %v3200 = vpack.c.b16 %v1884, %v1882
    %v3201 = vpack.c.b16 %v1885, %v1883
    %v3202 = vpack.c.b16 %v1888, %v1886
    %v3203 = vpack.c.b16 %v1889, %v1887
    %v3204 = vpack.c.b16 %v1892, %v1890
    %v3205 = vpack.c.b16 %v1893, %v1891
    %v3206 = vpack.c.b16 %v1896, %v1894
    %v3207 = vpack.c.b16 %v1897, %v1895
    %v3208 = vpack.c.b16 %v1900, %v1898
    %v3209 = vpack.c.b16 %v1901, %v1899
    %v3210 = vpack.c.b16 %v1904, %v1902
    %v3211 = vpack.c.b16 %v1905, %v1903
    %v3212 = vpack.c.b16 %v1908, %v1906
    %v3213 = vpack.c.b16 %v1909, %v1907
    %v3214 = vpack.c.b16 %v1912, %v1910
    %v3215 = vpack.c.b16 %v1913, %v1911
    %v3216 = vpack.c.b16 %v1916, %v1914
    %v3217 = vpack.c.b16 %v1917, %v1915
    %v3218 = vpack.c.b16 %v1920, %v1918
    %v3219 = vpack.c.b16 %v1921, %v1919
    %v3220 = vpack.c.b16 %v1924, %v1922
    %v3221 = vpack.c.b16 %v1925, %v1923
    %v3222 = vpack.c.b16 %v1928, %v1926
    %v3223 = vpack.c.b16 %v1929, %v1927
    %v3224 = vpack.c.b16 %v1932, %v1930
    %v3225 = vpack.c.b16 %v1933, %v1931
    %v3226 = vpack.c.b16 %v1936, %v1934
    %v3227 = vpack.c.b16 %v1937, %v1935
    %v3228 = vpack.c.b16 %v1940, %v1938
    %v3229 = vpack.c.b16 %v1941, %v1939
    %v3230 = vpack.c.b16 %v1944, %v1942
    %v3231 = vpack.c.b16 %v1945, %v1943
    %v3232 = vpack.c.b16 %v1948, %v1946
    %v3233 = vpack.c.b16 %v1949, %v1947
    %v3234 = vpack.c.b16 %v1952, %v1950
    %v3235 = vpack.c.b16 %v1953, %v1951
    %v3236 = vpack.c.b16 %v1956, %v1954
    %v3237 = vpack.c.b16 %v1957, %v1955
    %v3238 = vpack.c.b16 %v1960, %v1958
    %v3239 = vpack.c.b16 %v1961, %v1959
    %v3240 = vpack.c.b16 %v1964, %v1962
    %v3241 = vpack.c.b16 %v1965, %v1963
    %v3242 = vpack.c.b16 %v1968, %v1966
    %v3243 = vpack.c.b16 %v1969, %v1967
    %v3244 = vpack.c.b16 %v1972, %v1970
    %v3245 = vpack.c.b16 %v1973, %v1971
    %v3246 = vpack.c.b16 %v1976, %v1974
    %v3247 = vpack.c.b16 %v1977, %v1975
    %v3248 = vpack.c.b16 %v1980, %v1978
    %v3249 = vpack.c.b16 %v1981, %v1979
    %v3250 = vpack.c.b16 %v1984, %v1982
    %v3251 = vpack.c.b16 %v1985, %v1983
    %v3252 = vpack.c.b16 %v1988, %v1986
    %v3253 = vpack.c.b16 %v1989, %v1987
    %v3254 = vpack.c.b16 %v1992, %v1990
    %v3255 = vpack.c.b16 %v1993, %v1991
    %v3256 = vpack.c.b16 %v1996, %v1994
    %v3257 = vpack.c.b16 %v1997, %v1995
    %v3258 = vpack.c.b16 %v2000, %v1998
    %v3259 = vpack.c.b16 %v2001, %v1999
    %v3260 = vpack.c.b16 %v2004, %v2002
    %v3261 = vpack.c.b16 %v2005, %v2003
    %v3262 = vpack.c.b16 %v2008, %v2006
    %v3263 = vpack.c.b16 %v2009, %v2007
    %v3264 = vpack.c.b16 %v2012, %v2010
    %v3265 = vpack.c.b16 %v2013, %v2011
    %v3266 = vpack.c.b16 %v2016, %v2014
    %v3267 = vpack.c.b16 %v2017, %v2015
    %v3268 = vpack.c.b16 %v2020, %v2018
    %v3269 = vpack.c.b16 %v2021, %v2019
    %v3270 = vpack.c.b16 %v2024, %v2022
    %v3271 = vpack.c.b16 %v2025, %v2023
    %v3272 = vpack.c.b16 %v2028, %v2026
    %v3273 = vpack.c.b16 %v2029, %v2027
    %v3274 = vpack.c.b16 %v2032, %v2030
    %v3275 = vpack.c.b16 %v2033, %v2031
    %v3276 = vpack.c.b16 %v2036, %v2034
    %v3277 = vpack.c.b16 %v2037, %v2035
    %v3278 = vpack.c.b16 %v2040, %v2038
    %v3279 = vpack.c.b16 %v2041, %v2039
    %v3280 = vpack.c.b16 %v2044, %v2042
    %v3281 = vpack.c.b16 %v2045, %v2043
    %v3282 = vpack.c.b16 %v2048, %v2046
    %v3283 = vpack.c.b16 %v2049, %v2047
    %v3284 = vpack.c.b16 %v2052, %v2050
    %v3285 = vpack.c.b16 %v2053, %v2051
    %v3286 = vpack.c.b16 %v2056, %v2054
    %v3287 = vpack.c.b16 %v2057, %v2055
    %v3288 = vpack.c.b16 %v2060, %v2058
    %v3289 = vpack.c.b16 %v2061, %v2059
    %v3290 = vpack.c.b16 %v2064, %v2062
    %v3291 = vpack.c.b16 %v2065, %v2063
    %v3292 = vpack.c.b16 %v2068, %v2066
    %v3293 = vpack.c.b16 %v2069, %v2067
    %v3294 = vpack.c.b16 %v2072, %v2070
    %v3295 = vpack.c.b16 %v2073, %v2071
    %v3296 = vpack.c.b16 %v2076, %v2074
    %v3297 = vpack.c.b16 %v2077, %v2075
    %v3298 = vpack.c.b16 %v2080, %v2078
    %v3299 = vpack.c.b16 %v2081, %v2079
    %v3300 = vpack.c.b16 %v2084, %v2082
    %v3301 = vpack.c.b16 %v2085, %v2083
    %v3302 = vpack.c.b16 %v2088, %v2086
    %v3303 = vpack.c.b16 %v2089, %v2087
    %v3304 = vpack.c.b16 %v2092, %v2090
    %v3305 = vpack.c.b16 %v2093, %v2091
    %v3306 = vpack.c.b16 %v2096, %v2094
    %v3307 = vpack.c.b16 %v2097, %v2095
    %v3308 = vpack.c.b16 %v2100, %v2098
    %v3309 = vpack.c.b16 %v2101, %v2099
    %v3310 = vpack.c.b16 %v2104, %v2102
    %v3311 = vpack.c.b16 %v2105, %v2103
    %v3312 = vpack.c.b16 %v2108, %v2106
    %v3313 = vpack.c.b16 %v2109, %v2107
    %v3314 = vpack.c.b16 %v2112, %v2110
    %v3315 = vpack.c.b16 %v2113, %v2111
    %v3316 = vpack.c.b16 %v2116, %v2114
    %v3317 = vpack.c.b16 %v2117, %v2115
    %v3318 = vpack.c.b16 %v2120, %v2118
    %v3319 = vpack.c.b16 %v2121, %v2119
    %v3320 = vpack.c.b16 %v2124, %v2122
    %v3321 = vpack.c.b16 %v2125, %v2123
    %v3322 = vpack.c.b16 %v2128, %v2126
    %v3323 = vpack.c.b16 %v2129, %v2127
    %v3324 = vpack.c.b16 %v2132, %v2130
    %v3325 = vpack.c.b16 %v2133, %v2131
    %v3326 = vpack.c.b16 %v2136, %v2134
    %v3327 = vpack.c.b16 %v2137, %v2135
    %v3328 = vpack.c.b16 %v2140, %v2138
    %v3329 = vpack.c.b16 %v2141, %v2139
    %v3330 = vpack.c.b16 %v2144, %v2142
    %v3331 = vpack.c.b16 %v2145, %v2143
    %v3332 = vpack.c.b16 %v2148, %v2146
    %v3333 = vpack.c.b16 %v2149, %v2147
    %v3334 = vpack.c.b16 %v2152, %v2150
    %v3335 = vpack.c.b16 %v2153, %v2151
    %v3336 = vpack.c.b16 %v2156, %v2154
    %v3337 = vpack.c.b16 %v2157, %v2155
    %v3338 = vpack.c.b16 %v2160, %v2158
    %v3339 = vpack.c.b16 %v2161, %v2159
    %v3340 = vpack.c.b16 %v2164, %v2162
    %v3341 = vpack.c.b16 %v2165, %v2163
    %v3342 = vpack.c.b16 %v2168, %v2166
    %v3343 = vpack.c.b16 %v2169, %v2167
    %v3344 = vpack.c.b16 %v2172, %v2170
    %v3345 = vpack.c.b16 %v2173, %v2171
    %v3346 = vpack.c.b16 %v2176, %v2174
    %v3347 = vpack.c.b16 %v2177, %v2175
    %v3348 = vpack.c.b16 %v2180, %v2178
    %v3349 = vpack.c.b16 %v2181, %v2179
    %v3350 = vpack.c.b16 %v2184, %v2182
    %v3351 = vpack.c.b16 %v2185, %v2183
    %v3352 = vpack.c.b16 %v2188, %v2186
    %v3353 = vpack.c.b16 %v2189, %v2187
    %v3354 = vpack.c.b16 %v2192, %v2190
    %v3355 = vpack.c.b16 %v2193, %v2191
    %v3356 = vpack.c.b16 %v2196, %v2194
    %v3357 = vpack.c.b16 %v2197, %v2195
    %v3358 = vpack.c.b16 %v2200, %v2198
    %v3359 = vpack.c.b16 %v2201, %v2199
    %v3360 = vpack.c.b16 %v2204, %v2202
    %v3361 = vpack.c.b16 %v2205, %v2203
    %v3362 = vpack.c.b16 %v2208, %v2206
    %v3363 = vpack.c.b16 %v2209, %v2207
    %v3364 = vpack.c.b16 %v2212, %v2210
    %v3365 = vpack.c.b16 %v2213, %v2211
    %v3366 = vpack.c.b16 %v2216, %v2214
    %v3367 = vpack.c.b16 %v2217, %v2215
    %v3368 = vpack.c.b16 %v2220, %v2218
    %v3369 = vpack.c.b16 %v2221, %v2219
    %v3370 = vpack.c.b16 %v2224, %v2222
    %v3371 = vpack.c.b16 %v2225, %v2223
    %v3372 = vpack.c.b16 %v2228, %v2226
    %v3373 = vpack.c.b16 %v2229, %v2227
    %v3374 = vpack.c.b16 %v2232, %v2230
    %v3375 = vpack.c.b16 %v2233, %v2231
    %v3376 = vpack.c.b16 %v2236, %v2234
    %v3377 = vpack.c.b16 %v2237, %v2235
    %v3378 = vpack.c.b16 %v2240, %v2238
    %v3379 = vpack.c.b16 %v2241, %v2239
    %v3380 = vpack.c.b16 %v2244, %v2242
    %v3381 = vpack.c.b16 %v2245, %v2243
    %v3382 = vpack.c.b16 %v2248, %v2246
    %v3383 = vpack.c.b16 %v2249, %v2247
    %v3384 = vpack.c.b16 %v2252, %v2250
    %v3385 = vpack.c.b16 %v2253, %v2251
    %v3386 = vpack.c.b16 %v2256, %v2254
    %v3387 = vpack.c.b16 %v2257, %v2255
    %v3388 = vpack.c.b16 %v2260, %v2258
    %v3389 = vpack.c.b16 %v2261, %v2259
    %v3390 = vpack.c.b16 %v2264, %v2262
    %v3391 = vpack.c.b16 %v2265, %v2263
    %v3392 = vpack.c.b16 %v2268, %v2266
    %v3393 = vpack.c.b16 %v2269, %v2267
    %v3394 = vpack.c.b16 %v2272, %v2270
    %v3395 = vpack.c.b16 %v2273, %v2271
    %v3396 = vpack.c.b16 %v2276, %v2274
    %v3397 = vpack.c.b16 %v2277, %v2275
    %v3398 = vpack.c.b16 %v2280, %v2278
    %v3399 = vpack.c.b16 %v2281, %v2279
    %v3400 = vpack.c.b16 %v2284, %v2282
    %v3401 = vpack.c.b16 %v2285, %v2283
    %v3402 = vpack.c.b16 %v2288, %v2286
    %v3403 = vpack.c.b16 %v2289, %v2287
    %v3404 = vpack.c.b16 %v2292, %v2290
    %v3405 = vpack.c.b16 %v2293, %v2291
    %v3406 = vpack.c.b16 %v2296, %v2294
    %v3407 = vpack.c.b16 %v2297, %v2295
    %v3408 = vpack.c.b16 %v2300, %v2298
    %v3409 = vpack.c.b16 %v2301, %v2299
    %v3410 = vpack.c.b16 %v2304, %v2302
    %v3411 = vpack.c.b16 %v2305, %v2303
    %v3412 = vpack.c.b16 %v2308, %v2306
    %v3413 = vpack.c.b16 %v2309, %v2307
    %v3414 = vpack.c.b16 %v2312, %v2310
    %v3415 = vpack.c.b16 %v2313, %v2311
    %v3416 = vpack.c.b16 %v2316, %v2314
    %v3417 = vpack.c.b16 %v2317, %v2315
    %v3418 = vpack.c.b16 %v2320, %v2318
    %v3419 = vpack.c.b16 %v2321, %v2319
    %v3420 = vpack.c.b16 %v2324, %v2322
    %v3421 = vpack.c.b16 %v2325, %v2323
    %v3422 = vpack.c.b16 %v2328, %v2326
    %v3423 = vpack.c.b16 %v2329, %v2327
    %v3424 = vpack.c.b16 %v2332, %v2330
    %v3425 = vpack.c.b16 %v2333, %v2331
    %v3426 = vpack.c.b16 %v2336, %v2334
    %v3427 = vpack.c.b16 %v2337, %v2335
    %v3428 = vpack.c.b16 %v2340, %v2338
    %v3429 = vpack.c.b16 %v2341, %v2339
    %v3430 = vpack.c.b16 %v2344, %v2342
    %v3431 = vpack.c.b16 %v2345, %v2343
    %v3432 = vpack.c.b16 %v2348, %v2346
    %v3433 = vpack.c.b16 %v2349, %v2347
    %v3434 = vpack.c.b16 %v2352, %v2350
    %v3435 = vpack.c.b16 %v2353, %v2351
    %v3436 = vpack.c.b16 %v2356, %v2354
    %v3437 = vpack.c.b16 %v2357, %v2355
    %v3438 = vpack.c.b16 %v2360, %v2358
    %v3439 = vpack.c.b16 %v2361, %v2359
    %v3440 = vpack.c.b16 %v2364, %v2362
    %v3441 = vpack.c.b16 %v2365, %v2363
    %v3442 = vpack.c.b16 %v2368, %v2366
    %v3443 = vpack.c.b16 %v2369, %v2367
    %v3444 = vpack.c.b16 %v2372, %v2370
    %v3445 = vpack.c.b16 %v2373, %v2371
    %v3446 = vpack.c.b16 %v2376, %v2374
    %v3447 = vpack.c.b16 %v2377, %v2375
    %v3448 = vpack.c.b16 %v2380, %v2378
    %v3449 = vpack.c.b16 %v2381, %v2379
    %v3450 = vpack.c.b16 %v2384, %v2382
    %v3451 = vpack.c.b16 %v2385, %v2383
    %v3452 = vpack.c.b16 %v2388, %v2386
    %v3453 = vpack.c.b16 %v2389, %v2387
    %v3454 = vpack.c.b16 %v2392, %v2390
    %v3455 = vpack.c.b16 %v2393, %v2391
    %v3456 = vpack.c.b16 %v2396, %v2394
    %v3457 = vpack.c.b16 %v2397, %v2395
    %v3458 = vpack.c.b16 %v2400, %v2398
    %v3459 = vpack.c.b16 %v2401, %v2399
    %v3460 = vpack.c.b16 %v2404, %v2402
    %v3461 = vpack.c.b16 %v2405, %v2403
    %v3462 = vpack.c.b16 %v2408, %v2406
    %v3463 = vpack.c.b16 %v2409, %v2407
    %v3464 = vpack.c.b16 %v2412, %v2410
    %v3465 = vpack.c.b16 %v2413, %v2411
    %v3466 = vpack.c.b16 %v2416, %v2414
    %v3467 = vpack.c.b16 %v2417, %v2415
    %v3468 = vpack.c.b16 %v2420, %v2418
    %v3469 = vpack.c.b16 %v2421, %v2419
    %v3470 = vpack.c.b16 %v2424, %v2422
    %v3471 = vpack.c.b16 %v2425, %v2423
    %v3472 = vpack.c.b16 %v2428, %v2426
    %v3473 = vpack.c.b16 %v2429, %v2427
    %v3474 = vpack.c.b16 %v2432, %v2430
    %v3475 = vpack.c.b16 %v2433, %v2431
    %v3476 = vpack.c.b16 %v2436, %v2434
    %v3477 = vpack.c.b16 %v2437, %v2435
    %v3478 = vpack.c.b16 %v2440, %v2438
    %v3479 = vpack.c.b16 %v2441, %v2439
    %v3480 = vpack.c.b16 %v2444, %v2442
    %v3481 = vpack.c.b16 %v2445, %v2443
    %v3482 = vpack.c.b16 %v2448, %v2446
    %v3483 = vpack.c.b16 %v2449, %v2447
    %v3484 = vpack.c.b16 %v2452, %v2450
    %v3485 = vpack.c.b16 %v2453, %v2451
    %v3486 = vpack.c.b16 %v2456, %v2454
    %v3487 = vpack.c.b16 %v2457, %v2455
    %v3488 = vpack.c.b16 %v2460, %v2458
    %v3489 = vpack.c.b16 %v2461, %v2459
    %v3490 = vpack.c.b16 %v2464, %v2462
    %v3491 = vpack.c.b16 %v2465, %v2463
    %v3492 = vpack.c.b16 %v2468, %v2466
    %v3493 = vpack.c.b16 %v2469, %v2467
    %v3494 = vpack.c.b16 %v2472, %v2470
    %v3495 = vpack.c.b16 %v2473, %v2471
    %v3496 = vpack.c.b16 %v2476, %v2474
    %v3497 = vpack.c.b16 %v2477, %v2475
    %v3498 = vpack.c.b16 %v2480, %v2478
    %v3499 = vpack.c.b16 %v2481, %v2479
    %v3500 = vpack.c.b16 %v2484, %v2482
    %v3501 = vpack.c.b16 %v2485, %v2483
    %v3502 = vpack.c.b16 %v2488, %v2486
    %v3503 = vpack.c.b16 %v2489, %v2487
    %v3504 = vpack.c.b16 %v2492, %v2490
    %v3505 = vpack.c.b16 %v2493, %v2491
    %v3506 = vpack.c.b16 %v2496, %v2494
    %v3507 = vpack.c.b16 %v2497, %v2495
    %v3508 = vpack.c.b16 %v2500, %v2498
    %v3509 = vpack.c.b16 %v2501, %v2499
    %v3510 = vpack.c.b16 %v2504, %v2502
    %v3511 = vpack.c.b16 %v2505, %v2503
    %v3512 = vpack.c.b16 %v2508, %v2506
    %v3513 = vpack.c.b16 %v2509, %v2507
    %v3514 = vpack.c.b16 %v2512, %v2510
    %v3515 = vpack.c.b16 %v2513, %v2511
    %v3516 = vpack.c.b16 %v2516, %v2514
    %v3517 = vpack.c.b16 %v2517, %v2515
    %v3518 = vpack.c.b16 %v2520, %v2518
    %v3519 = vpack.c.b16 %v2521, %v2519
    %v3520 = vpack.c.b16 %v2524, %v2522
    %v3521 = vpack.c.b16 %v2525, %v2523
    %v3522 = vpack.c.b16 %v2528, %v2526
    %v3523 = vpack.c.b16 %v2529, %v2527
    %v3524 = vpack.c.b16 %v2532, %v2530
    %v3525 = vpack.c.b16 %v2533, %v2531
    %v3526 = vpack.c.b16 %v2536, %v2534
    %v3527 = vpack.c.b16 %v2537, %v2535
    %v3528 = vpack.c.b16 %v2540, %v2538
    %v3529 = vpack.c.b16 %v2541, %v2539
    %v3530 = vpack.c.b16 %v2544, %v2542
    %v3531 = vpack.c.b16 %v2545, %v2543
    %v3532 = vpack.c.b16 %v2548, %v2546
    %v3533 = vpack.c.b16 %v2549, %v2547
    %v3534 = vpack.c.b16 %v2552, %v2550
    %v3535 = vpack.c.b16 %v2553, %v2551
    %v3536 = vpack.c.b16 %v2556, %v2554
    %v3537 = vpack.c.b16 %v2557, %v2555
    %v3538 = vpack.c.b16 %v2560, %v2558
    %v3539 = vpack.c.b16 %v2561, %v2559
    %v3540 = vpack.c.b16 %v2564, %v2562
    %v3541 = vpack.c.b16 %v2565, %v2563
    %v3542 = vpack.c.b16 %v2568, %v2566
    %v3543 = vpack.c.b16 %v2569, %v2567
    %v3544 = vpack.c.b16 %v2572, %v2570
    %v3545 = vpack.c.b16 %v2573, %v2571
    %v3546 = vpack.c.b16 %v2576, %v2574
    %v3547 = vpack.c.b16 %v2577, %v2575
    %v3548 = vpack.c.b16 %v2580, %v2578
    %v3549 = vpack.c.b16 %v2581, %v2579
    %v3550 = vpack.c.b16 %v2584, %v2582
    %v3551 = vpack.c.b16 %v2585, %v2583
    %v3552 = vpack.c.b16 %v2588, %v2586
    %v3553 = vpack.c.b16 %v2589, %v2587
    %v3554 = vpack.c.b16 %v2592, %v2590
    %v3555 = vpack.c.b16 %v2593, %v2591
    %v3556 = vpack.c.b16 %v2596, %v2594
    %v3557 = vpack.c.b16 %v2597, %v2595
    %v3558 = vpack.c.b16 %v2600, %v2598
    %v3559 = vpack.c.b16 %v2601, %v2599
    %v3560 = vpack.c.b16 %v2604, %v2602
    %v3561 = vpack.c.b16 %v2605, %v2603
    %v3562 = vpack.c.b16 %v2608, %v2606
    %v3563 = vpack.c.b16 %v2609, %v2607
    %v3564 = vpack.c.b16 %v2612, %v2610
    %v3565 = vpack.c.b16 %v2613, %v2611
    %v3566 = vpack.c.b16 %v2616, %v2614
    %v3567 = vpack.c.b16 %v2617, %v2615
    %v3568 = vpack.c.b16 %v2620, %v2618
    %v3569 = vpack.c.b16 %v2621, %v2619
    %v3570 = vpack.c.b16 %v2624, %v2622
    %v3571 = vpack.c.b16 %v2625, %v2623
    %v3572 = vpack.c.b16 %v2628, %v2626
    %v3573 = vpack.c.b16 %v2629, %v2627
    %v3574 = vpack.c.b16 %v2632, %v2630
    %v3575 = vpack.c.b16 %v2633, %v2631
    %v3576 = vpack.c.b16 %v2636, %v2634
    %v3577 = vpack.c.b16 %v2637, %v2635
    %v3578 = vpack.c.b16 %v2640, %v2638
    %v3579 = vpack.c.b16 %v2641, %v2639
    %v3580 = vpack.c.b16 %v2644, %v2642
    %v3581 = vpack.c.b16 %v2645, %v2643
    %v3582 = vpack.c.b16 %v2648, %v2646
    %v3583 = vpack.c.b16 %v2649, %v2647
    %v3584 = vpack.c.b16 %v2652, %v2650
    %v3585 = vpack.c.b16 %v2653, %v2651
    %v3586 = vpack.c.b16 %v2656, %v2654
    %v3587 = vpack.c.b16 %v2657, %v2655
    %v3588 = vpack.c.b16 %v2660, %v2658
    %v3589 = vpack.c.b16 %v2661, %v2659
    %v3590 = vpack.c.b16 %v2664, %v2662
    %v3591 = vpack.c.b16 %v2665, %v2663
    %v3592 = vpack.c.b16 %v2668, %v2666
    %v3593 = vpack.c.b16 %v2669, %v2667
    %v3594 = vpack.c.b16 %v2672, %v2670
    %v3595 = vpack.c.b16 %v2673, %v2671
    %v3596 = vpack.c.b16 %v2676, %v2674
    %v3597 = vpack.c.b16 %v2677, %v2675
    %v3598 = vpack.c.b16 %v2680, %v2678
    %v3599 = vpack.c.b16 %v2681, %v2679
    %v3600 = vpack.c.b16 %v2684, %v2682
    %v3601 = vpack.c.b16 %v2685, %v2683
    %v3602 = vpack.c.b16 %v2688, %v2686
    %v3603 = vpack.c.b16 %v2689, %v2687
    %v3604 = vpack.c.b16 %v2692, %v2690
    %v3605 = vpack.c.b16 %v2693, %v2691
    %v3606 = vpack.c.b16 %v2696, %v2694
    %v3607 = vpack.c.b16 %v2697, %v2695
    %v3608 = vpack.c.b16 %v2700, %v2698
    %v3609 = vpack.c.b16 %v2701, %v2699
    %v3610 = vpack.c.b16 %v2704, %v2702
    %v3611 = vpack.c.b16 %v2705, %v2703
    %v3612 = vpack.c.b16 %v2708, %v2706
    %v3613 = vpack.c.b16 %v2709, %v2707
    %v3614 = vpack.c.b16 %v2712, %v2710
    %v3615 = vpack.c.b16 %v2713, %v2711
    %v3616 = vpack.c.b16 %v2716, %v2714
    %v3617 = vpack.c.b16 %v2717, %v2715
    %v3618 = vpack.c.b16 %v2720, %v2718
    %v3619 = vpack.c.b16 %v2721, %v2719
    %v3620 = vpack.c.b16 %v2724, %v2722
    %v3621 = vpack.c.b16 %v2725, %v2723
    %v3622 = vpack.c.b16 %v2728, %v2726
    %v3623 = vpack.c.b16 %v2729, %v2727
    %v3624 = vpack.c.b16 %v2732, %v2730
    %v3625 = vpack.c.b16 %v2733, %v2731
    %v3626 = vpack.c.b16 %v2736, %v2734
    %v3627 = vpack.c.b16 %v2737, %v2735
    %v3628 = vpack.c.b16 %v2740, %v2738
    %v3629 = vpack.c.b16 %v2741, %v2739
    %v3630 = vpack.c.b16 %v2744, %v2742
    %v3631 = vpack.c.b16 %v2745, %v2743
    %v3632 = vpack.c.b16 %v2748, %v2746
    %v3633 = vpack.c.b16 %v2749, %v2747
    %v3634 = vpack.c.b16 %v2752, %v2750
    %v3635 = vpack.c.b16 %v2753, %v2751
    %v3636 = vpack.c.b16 %v2756, %v2754
    %v3637 = vpack.c.b16 %v2757, %v2755
    %v3638 = vpack.c.b16 %v2760, %v2758
    %v3639 = vpack.c.b16 %v2761, %v2759
    %v3640 = vpack.c.b16 %v2764, %v2762
    %v3641 = vpack.c.b16 %v2765, %v2763
    %v3642 = vpack.c.b16 %v2768, %v2766
    %v3643 = vpack.c.b16 %v2769, %v2767
    %v3644 = vpack.c.b16 %v2772, %v2770
    %v3645 = vpack.c.b16 %v2773, %v2771
    %v3646 = vpack.c.b16 %v2776, %v2774
    %v3647 = vpack.c.b16 %v2777, %v2775
    %v3648 = vpack.c.b16 %v2780, %v2778
    %v3649 = vpack.c.b16 %v2781, %v2779
    %v3650 = vpack.c.b16 %v2784, %v2782
    %v3651 = vpack.c.b16 %v2785, %v2783
    %v3652 = vpack.c.b16 %v2788, %v2786
    %v3653 = vpack.c.b16 %v2789, %v2787
    %v3654 = vpack.c.b16 %v2792, %v2790
    %v3655 = vpack.c.b16 %v2793, %v2791
    %v3656 = vpack.c.b16 %v2796, %v2794
    %v3657 = vpack.c.b16 %v2797, %v2795
    %v3658 = vpack.c.b16 %v2800, %v2798
    %v3659 = vpack.c.b16 %v2801, %v2799
    %v3660 = vpack.c.b16 %v2804, %v2802
    %v3661 = vpack.c.b16 %v2805, %v2803
    %v3662 = vpack.c.b16 %v2808, %v2806
    %v3663 = vpack.c.b16 %v2809, %v2807
    %v3664 = vpack.c.b16 %v2812, %v2810
    %v3665 = vpack.c.b16 %v2813, %v2811
    %v3666 = vpack.c.b16 %v2816, %v2814
    %v3667 = vpack.c.b16 %v2817, %v2815
    %v3668 = vpack.c.b16 %v2820, %v2818
    %v3669 = vpack.c.b16 %v2821, %v2819
    %v3670 = vpack.c.b16 %v2824, %v2822
    %v3671 = vpack.c.b16 %v2825, %v2823
    %v3672 = vpack.c.b16 %v2828, %v2826
    %v3673 = vpack.c.b16 %v2829, %v2827
    %v3674 = vpack.c.b16 %v2832, %v2830
    %v3675 = vpack.c.b16 %v2833, %v2831
    %v3676 = vpack.c.b16 %v2836, %v2834
    %v3677 = vpack.c.b16 %v2837, %v2835
    %v3678 = vpack.c.b16 %v2840, %v2838
    %v3679 = vpack.c.b16 %v2841, %v2839
    %v3680 = vpack.c.b16 %v2844, %v2842
    %v3681 = vpack.c.b16 %v2845, %v2843
    %v3682 = vpack.c.b16 %v2848, %v2846
    %v3683 = vpack.c.b16 %v2849, %v2847
    %v3684 = vpack.c.b16 %v2852, %v2850
    %v3685 = vpack.c.b16 %v2853, %v2851
    %v3686 = vpack.c.b16 %v2856, %v2854
    %v3687 = vpack.c.b16 %v2857, %v2855
    %v3688 = vpack.c.b16 %v2860, %v2858
    %v3689 = vpack.c.b16 %v2861, %v2859
    %v3690 = vpack.c.b16 %v2864, %v2862
    %v3691 = vpack.c.b16 %v2865, %v2863
    %v3692 = vpack.c.b16 %v2868, %v2866
    %v3693 = vpack.c.b16 %v2869, %v2867
    %v3694 = vpack.c.b16 %v2872, %v2870
    %v3695 = vpack.c.b16 %v2873, %v2871
    %v3696 = vpack.c.b16 %v2876, %v2874
    %v3697 = vpack.c.b16 %v2877, %v2875
    %v3698 = vpack.c.b16 %v2880, %v2878
    %v3699 = vpack.c.b16 %v2881, %v2879
    %v3700 = vpack.c.b16 %v2884, %v2882
    %v3701 = vpack.c.b16 %v2885, %v2883
    %v3702 = vpack.c.b16 %v2888, %v2886
    %v3703 = vpack.c.b16 %v2889, %v2887
    %v3704 = vpack.c.b16 %v2892, %v2890
    %v3705 = vpack.c.b16 %v2893, %v2891
    %v3706 = vpack.c.b16 %v2896, %v2894
    %v3707 = vpack.c.b16 %v2897, %v2895
    %v3708 = vpack.c.b16 %v2900, %v2898
    %v3709 = vpack.c.b16 %v2901, %v2899
    %v3710 = vpack.c.b16 %v2904, %v2902
    %v3711 = vpack.c.b16 %v2905, %v2903
    %v3712 = vpack.c.b16 %v2908, %v2906
    %v3713 = vpack.c.b16 %v2909, %v2907
    %v3714 = vpack.c.b16 %v2912, %v2910
    %v3715 = vpack.c.b16 %v2913, %v2911
    %v3716 = vpack.c.b16 %v2916, %v2914
    %v3717 = vpack.c.b16 %v2917, %v2915
    %v3718 = vpack.c.b16 %v2920, %v2918
    %v3719 = vpack.c.b16 %v2921, %v2919
    %v3720 = vpack.c.b16 %v2924, %v2922
    %v3721 = vpack.c.b16 %v2925, %v2923
    %v3722 = vpack.c.b16 %v2928, %v2926
    %v3723 = vpack.c.b16 %v2929, %v2927
    %v3724 = vpack.c.b16 %v2932, %v2930
    %v3725 = vpack.c.b16 %v2933, %v2931
    %v3726 = vpack.c.b16 %v2936, %v2934
    %v3727 = vpack.c.b16 %v2937, %v2935
    %v3728 = vpack.c.b16 %v2940, %v2938
    %v3729 = vpack.c.b16 %v2941, %v2939
    %v3730 = vpack.c.b16 %v2944, %v2942
    %v3731 = vpack.c.b16 %v2945, %v2943
    %v3732 = vpack.c.b16 %v2948, %v2946
    %v3733 = vpack.c.b16 %v2949, %v2947
    %v3734 = vpack.c.b16 %v2952, %v2950
    %v3735 = vpack.c.b16 %v2953, %v2951
    %v3736 = vpack.c.b16 %v2956, %v2954
    %v3737 = vpack.c.b16 %v2957, %v2955
    %v3738 = vpack.c.b16 %v2960, %v2958
    %v3739 = vpack.c.b16 %v2961, %v2959
    %v3740 = vpack.c.b16 %v2964, %v2962
    %v3741 = vpack.c.b16 %v2965, %v2963
    %v3742 = vpack.c.b16 %v2968, %v2966
    %v3743 = vpack.c.b16 %v2969, %v2967
    %v3744 = vpack.c.b16 %v2972, %v2970
    %v3745 = vpack.c.b16 %v2973, %v2971
    %v3746 = vpack.c.b16 %v2976, %v2974
    %v3747 = vpack.c.b16 %v2977, %v2975
    %v3748 = vpack.c.b16 %v2980, %v2978
    %v3749 = vpack.c.b16 %v2981, %v2979
    %v3750 = vpack.c.b16 %v2984, %v2982
    %v3751 = vpack.c.b16 %v2985, %v2983
    %v3752 = vpack.c.b16 %v2988, %v2986
    %v3753 = vpack.c.b16 %v2989, %v2987
    %v3754 = vpack.c.b16 %v2992, %v2990
    %v3755 = vpack.c.b16 %v2993, %v2991
    %v3756 = vpack.c.b16 %v2996, %v2994
    %v3757 = vpack.c.b16 %v2997, %v2995
    %v3758 = vpack.c.b16 %v3000, %v2998
    %v3759 = vpack.c.b16 %v3001, %v2999
    %v3760 = vpack.c.b16 %v3004, %v3002
    %v3761 = vpack.c.b16 %v3005, %v3003
    %v3762 = vpack.c.b16 %v3008, %v3006
    %v3763 = vpack.c.b16 %v3009, %v3007
    %v3764 = vpack.c.b16 %v3012, %v3010
    %v3765 = vpack.c.b16 %v3013, %v3011
    %v3766 = vpack.c.b16 %v3016, %v3014
    %v3767 = vpack.c.b16 %v3017, %v3015
    %v3768 = vpack.c.b16 %v3020, %v3018
    %v3769 = vpack.c.b16 %v3021, %v3019
    %v3770 = vpack.c.b16 %v3024, %v3022
    %v3771 = vpack.c.b16 %v3025, %v3023
    %v3772 = vpack.c.b16 %v3028, %v3026
    %v3773 = vpack.c.b16 %v3029, %v3027
    %v3774 = vpack.c.b16 %v3032, %v3030
    %v3775 = vpack.c.b16 %v3033, %v3031
    %v3776 = vpack.c.b16 %v3036, %v3034
    %v3777 = vpack.c.b16 %v3037, %v3035
    %v3778 = vpack.c.b16 %v3040, %v3038
    %v3779 = vpack.c.b16 %v3041, %v3039
    %v3780 = vpack.c.b16 %v3044, %v3042
    %v3781 = vpack.c.b16 %v3045, %v3043
    %v3782 = vpack.c.b16 %v3048, %v3046
    %v3783 = vpack.c.b16 %v3049, %v3047
    %v3784 = vpack.c.b16 %v3052, %v3050
    %v3785 = vpack.c.b16 %v3053, %v3051
    %v3786 = vpack.c.b16 %v3056, %v3054
    %v3787 = vpack.c.b16 %v3057, %v3055
    %v3788 = vpack.c.b16 %v3060, %v3058
    %v3789 = vpack.c.b16 %v3061, %v3059
    %v3790 = vpack.c.b16 %v3064, %v3062
    %v3791 = vpack.c.b16 %v3065, %v3063
    %v3792 = vpack.c.b16 %v3068, %v3066
    %v3793 = vpack.c.b16 %v3069, %v3067
    %v3794 = vpack.c.b16 %v3072, %v3070
    %v3795 = vpack.c.b16 %v3073, %v3071
    %v3796 = vpack.c.b16 %v3076, %v3074
    %v3797 = vpack.c.b16 %v3077, %v3075
    %v3798 = vpack.c.b16 %v3080, %v3078
    %v3799 = vpack.c.b16 %v3081, %v3079
    %v3800 = vpack.c.b16 %v3084, %v3082
    %v3801 = vpack.c.b16 %v3085, %v3083
    %v3802 = vpack.c.b16 %v3088, %v3086
    %v3803 = vpack.c.b16 %v3089, %v3087
    %v3804 = vpack.c.b16 %v3092, %v3090
    %v3805 = vpack.c.b16 %v3093, %v3091
    %v3806 = vpack.c.b16 %v3096, %v3094
    %v3807 = vpack.c.b16 %v3097, %v3095
    %v3808 = vpack.c.b16 %v3100, %v3098
    %v3809 = vpack.c.b16 %v3101, %v3099
    %v3810 = vpack.c.b16 %v3104, %v3102
    %v3811 = vpack.c.b16 %v3105, %v3103
    %v3812 = vpack.c.b16 %v3108, %v3106
    %v3813 = vpack.c.b16 %v3109, %v3107
    %v3814 = vpack.c.b16 %v3112, %v3110
    %v3815 = vpack.c.b16 %v3113, %v3111
    %v3816 = vpack.c.b16 %v3116, %v3114
    %v3817 = vpack.c.b16 %v3117, %v3115
    %v3818 = vpack.c.b16 %v3120, %v3118
    %v3819 = vpack.c.b16 %v3121, %v3119
    %v3820 = vpack.c.b16 %v3124, %v3122
    %v3821 = vpack.c.b16 %v3125, %v3123
    %v3822 = vpack.c.b16 %v3128, %v3126
    %v3823 = vpack.c.b16 %v3129, %v3127
    %v3824 = vpack.c.b16 %v3132, %v3130
    %v3825 = vpack.c.b16 %v3133, %v3131
    %v3826 = vpack.c.b16 %v3136, %v3134
    %v3827 = vpack.c.b16 %v3137, %v3135
    %v3828 = vpack.c.b16 %v3140, %v3138
    %v3829 = vpack.c.b16 %v3141, %v3139
    %v3830 = vpack.c.b16 %v3144, %v3142
    %v3831 = vpack.c.b16 %v3145, %v3143
    %v3832 = vpack.c.b16 %v3148, %v3146
    %v3833 = vpack.c.b16 %v3149, %v3147
    %v3834 = vpack.c.b16 %v3152, %v3150
    %v3835 = vpack.c.b16 %v3153, %v3151
    %v3836 = vpack.c.b16 %v3156, %v3154
    %v3837 = vpack.c.b16 %v3157, %v3155
    %v3838 = vpack.c.b16 %v3160, %v3158
    %v3839 = vpack.c.b16 %v3161, %v3159
    %v3840 = vpack.c.b16 %v3164, %v3162
    %v3841 = vpack.c.b16 %v3165, %v3163
    %v3842 = vpack.c.b16 %v3168, %v3166
    %v3843 = vpack.c.b16 %v3169, %v3167
    %v3844 = vpack.c.b16 %v3172, %v3170
    %v3845 = vpack.c.b16 %v3173, %v3171
    %4518 = vmatprep.subr.bf16.mxu0 %v3175
    %4519 = vmatpush1.bf16.msra.mxu0 %v3174
    %4520 = vmatprep.subr.bf16.mxu0 %v3177
    %4521 = vmatpush1.bf16.msra.mxu0 %v3176
    %4522 = vmatprep.subr.bf16.mxu0 %v3179
    %4523 = vmatpush1.bf16.msra.mxu0 %v3178
    %4524 = vmatprep.subr.bf16.mxu0 %v3181
    %4525 = vmatpush1.bf16.msra.mxu0 %v3180
    %4526 = vmatprep.subr.bf16.mxu0 %v3183
    %4527 = vmatpush1.bf16.msra.mxu0 %v3182
    %4528 = vmatprep.subr.bf16.mxu0 %v3185
    %4529 = vmatpush1.bf16.msra.mxu0 %v3184
    %4530 = vmatprep.subr.bf16.mxu0 %v3187
    %4531 = vmatpush1.bf16.msra.mxu0 %v3186
    %4532 = vmatprep.subr.bf16.mxu0 %v3189
    %4533 = vmatpush1.bf16.msra.mxu0 %v3188
    %4534 = vmatprep.subr.bf16.mxu0 %v3191
    %4535 = vmatpush1.bf16.msra.mxu0 %v3190
    %4536 = vmatprep.subr.bf16.mxu0 %v3193
    %4537 = vmatpush1.bf16.msra.mxu0 %v3192
    %4538 = vmatprep.subr.bf16.mxu0 %v3195
    %4539 = vmatpush1.bf16.msra.mxu0 %v3194
    %4540 = vmatprep.subr.bf16.mxu0 %v3197
    %4541 = vmatpush1.bf16.msra.mxu0 %v3196
    %4542 = vmatprep.subr.bf16.mxu0 %v3199
    %4543 = vmatpush1.bf16.msra.mxu0 %v3198
    %4544 = vmatprep.subr.bf16.mxu0 %v3201
    %4545 = vmatpush1.bf16.msra.mxu0 %v3200
    %4546 = vmatprep.subr.bf16.mxu0 %v3203
    %4547 = vmatpush1.bf16.msra.mxu0 %v3202
    %4548 = vmatprep.subr.bf16.mxu0 %v3205
    %4549 = vmatpush1.bf16.msra.mxu0 %v3204
    %4550 = vmatprep.mubr.bf16.mxu0 %v991
    %4551 = vmatmul.mubr.bf16.gmra.mrb[0].mxu0 %v990
    %v4552 = vpop.f32.mrb[0].mxu0
    %v4553 = vadd.f32 %v794, %v4552
    %v4554 = vpop.f32.mrb[0].mxu0
    %v4555 = vadd.f32 %v798, %v4554
    %v4556 = vpop.f32.mrb[0].mxu0
    %v4557 = vadd.f32 %v794, %v4556
    %v4558 = vpop.f32.mrb[0].mxu0
    %v4559 = vadd.f32 %v798, %v4558
    %4560 = vmatprep.mubr.bf16.mxu0 %v1033
    %4561 = vmatmul.mubr.bf16.gmra.mrb[0].mxu0 %v1032
    %v4562 = vpop.f32.mrb[0].mxu0
    %v4563 = vadd.f32 %v794, %v4562
    %v4564 = vpop.f32.mrb[0].mxu0
    %v4565 = vadd.f32 %v798, %v4564
    %v4566 = vpop.f32.mrb[0].mxu0
    %v4567 = vpop.f32.mrb[0].mxu0
    %4568 = vdwg.mxu0
    %4569 = vmatprep.subr.bf16.mxu0 %v3207
    %4570 = vmatpush1.bf16.msra.mxu0 %v3206
    %4571 = vmatprep.subr.bf16.mxu0 %v3209
    %4572 = vmatpush1.bf16.msra.mxu0 %v3208
    %4573 = vmatprep.subr.bf16.mxu0 %v3211
    %4574 = vmatpush1.bf16.msra.mxu0 %v3210
    %4575 = vmatprep.subr.bf16.mxu0 %v3213
    %4576 = vmatpush1.bf16.msra.mxu0 %v3212
    %4577 = vmatprep.subr.bf16.mxu0 %v3215
    %4578 = vmatpush1.bf16.msra.mxu0 %v3214
    %4579 = vmatprep.subr.bf16.mxu0 %v3217
    %4580 = vmatpush1.bf16.msra.mxu0 %v3216
    %4581 = vmatprep.subr.bf16.mxu0 %v3219
    %4582 = vmatpush1.bf16.msra.mxu0 %v3218
    %4583 = vmatprep.subr.bf16.mxu0 %v3221
    %4584 = vmatpush1.bf16.msra.mxu0 %v3220
    %4585 = vmatprep.subr.bf16.mxu0 %v3223
    %4586 = vmatpush1.bf16.msra.mxu0 %v3222
    %4587 = vmatprep.subr.bf16.mxu0 %v3225
    %4588 = vmatpush1.bf16.msra.mxu0 %v3224
    %4589 = vmatprep.subr.bf16.mxu0 %v3227
    %4590 = vmatpush1.bf16.msra.mxu0 %v3226
    %4591 = vmatprep.subr.bf16.mxu0 %v3229
    %4592 = vmatpush1.bf16.msra.mxu0 %v3228
    %4593 = vmatprep.subr.bf16.mxu0 %v3231
    %4594 = vmatpush1.bf16.msra.mxu0 %v3230
    %4595 = vmatprep.subr.bf16.mxu0 %v3233
    %4596 = vmatpush1.bf16.msra.mxu0 %v3232
    %4597 = vmatprep.subr.bf16.mxu0 %v3235
    %4598 = vmatpush1.bf16.msra.mxu0 %v3234
    %4599 = vmatprep.subr.bf16.mxu0 %v3237
    %4600 = vmatpush1.bf16.msra.mxu0 %v3236
    %4601 = vmatprep.mubr.bf16.mxu0 %v993
    %4602 = vmatmul.mubr.bf16.gmra.mrb[0].mxu0 %v992
    %v4603 = vpop.f32.mrb[0].mxu0
    %v4604 = vadd.f32 %v4553, %v4603
    %v4605 = vpop.f32.mrb[0].mxu0
    %v4606 = vadd.f32 %v4555, %v4605
    %v4607 = vpop.f32.mrb[0].mxu0
    %v4608 = vadd.f32 %v4557, %v4607
    %v4609 = vpop.f32.mrb[0].mxu0
    %v4610 = vadd.f32 %v4559, %v4609
    %4611 = vmatprep.mubr.bf16.mxu0 %v1035
    %4612 = vmatmul.mubr.bf16.gmra.mrb[0].mxu0 %v1034
    %v4613 = vpop.f32.mrb[0].mxu0
    %v4614 = vadd.f32 %v4563, %v4613
    %v4615 = vpop.f32.mrb[0].mxu0
    %v4616 = vadd.f32 %v4565, %v4615
    %v4617 = vpop.f32.mrb[0].mxu0
    %v4618 = vpop.f32.mrb[0].mxu0
    %4619 = vdwg.mxu0
    %4620 = vmatprep.subr.bf16.mxu0 %v3239
    %4621 = vmatpush1.bf16.msra.mxu0 %v3238
    %4622 = vmatprep.subr.bf16.mxu0 %v3241
    %4623 = vmatpush1.bf16.msra.mxu0 %v3240
    %4624 = vmatprep.subr.bf16.mxu0 %v3243
    %4625 = vmatpush1.bf16.msra.mxu0 %v3242
    %4626 = vmatprep.subr.bf16.mxu0 %v3245
    %4627 = vmatpush1.bf16.msra.mxu0 %v3244
    %4628 = vmatprep.subr.bf16.mxu0 %v3247
    %4629 = vmatpush1.bf16.msra.mxu0 %v3246
    %4630 = vmatprep.subr.bf16.mxu0 %v3249
    %4631 = vmatpush1.bf16.msra.mxu0 %v3248
    %4632 = vmatprep.subr.bf16.mxu0 %v3251
    %4633 = vmatpush1.bf16.msra.mxu0 %v3250
    %4634 = vmatprep.subr.bf16.mxu0 %v3253
    %4635 = vmatpush1.bf16.msra.mxu0 %v3252
    %4636 = vmatprep.subr.bf16.mxu0 %v3255
    %4637 = vmatpush1.bf16.msra.mxu0 %v3254
    %4638 = vmatprep.subr.bf16.mxu0 %v3257
    %4639 = vmatpush1.bf16.msra.mxu0 %v3256
    %4640 = vmatprep.subr.bf16.mxu0 %v3259
    %4641 = vmatpush1.bf16.msra.mxu0 %v3258
    %4642 = vmatprep.subr.bf16.mxu0 %v3261
    %4643 = vmatpush1.bf16.msra.mxu0 %v3260
    %4644 = vmatprep.subr.bf16.mxu0 %v3263
    %4645 = vmatpush1.bf16.msra.mxu0 %v3262
    %4646 = vmatprep.subr.bf16.mxu0 %v3265
    %4647 = vmatpush1.bf16.msra.mxu0 %v3264
    %4648 = vmatprep.subr.bf16.mxu0 %v3267
    %4649 = vmatpush1.bf16.msra.mxu0 %v3266
    %4650 = vmatprep.subr.bf16.mxu0 %v3269
    %4651 = vmatpush1.bf16.msra.mxu0 %v3268
    %4652 = vmatprep.mubr.bf16.mxu0 %v995
    %4653 = vmatmul.mubr.bf16.gmra.mrb[0].mxu0 %v994
    %v4654 = vpop.f32.mrb[0].mxu0
    %v4655 = vadd.f32 %v4604, %v4654
    %v4656 = vpop.f32.mrb[0].mxu0
    %v4657 = vadd.f32 %v4606, %v4656
    %v4658 = vpop.f32.mrb[0].mxu0
    %v4659 = vadd.f32 %v4608, %v4658
    %v4660 = vpop.f32.mrb[0].mxu0
    %v4661 = vadd.f32 %v4610, %v4660
    %4662 = vmatprep.mubr.bf16.mxu0 %v1037
    %4663 = vmatmul.mubr.bf16.gmra.mrb[0].mxu0 %v1036
    %v4664 = vpop.f32.mrb[0].mxu0
    %v4665 = vadd.f32 %v4614, %v4664
    %v4666 = vpop.f32.mrb[0].mxu0
    %v4667 = vadd.f32 %v4616, %v4666
    %v4668 = vpop.f32.mrb[0].mxu0
    %v4669 = vpop.f32.mrb[0].mxu0
    %4670 = vdwg.mxu0
    %4671 = vmatprep.subr.bf16.mxu0 %v3271
    %4672 = vmatpush1.bf16.msra.mxu0 %v3270
    %4673 = vmatprep.subr.bf16.mxu0 %v3273
    %4674 = vmatpush1.bf16.msra.mxu0 %v3272
    %4675 = vmatprep.subr.bf16.mxu0 %v3275
    %4676 = vmatpush1.bf16.msra.mxu0 %v3274
    %4677 = vmatprep.subr.bf16.mxu0 %v3277
    %4678 = vmatpush1.bf16.msra.mxu0 %v3276
    %4679 = vmatprep.subr.bf16.mxu0 %v3279
    %4680 = vmatpush1.bf16.msra.mxu0 %v3278
    %4681 = vmatprep.subr.bf16.mxu0 %v3281
    %4682 = vmatpush1.bf16.msra.mxu0 %v3280
    %4683 = vmatprep.subr.bf16.mxu0 %v3283
    %4684 = vmatpush1.bf16.msra.mxu0 %v3282
    %4685 = vmatprep.subr.bf16.mxu0 %v3285
    %4686 = vmatpush1.bf16.msra.mxu0 %v3284
    %4687 = vmatprep.subr.bf16.mxu0 %v3287
    %4688 = vmatpush1.bf16.msra.mxu0 %v3286
    %4689 = vmatprep.subr.bf16.mxu0 %v3289
    %4690 = vmatpush1.bf16.msra.mxu0 %v3288
    %4691 = vmatprep.subr.bf16.mxu0 %v3291
    %4692 = vmatpush1.bf16.msra.mxu0 %v3290
    %4693 = vmatprep.subr.bf16.mxu0 %v3293
    %4694 = vmatpush1.bf16.msra.mxu0 %v3292
    %4695 = vmatprep.subr.bf16.mxu0 %v3295
    %4696 = vmatpush1.bf16.msra.mxu0 %v3294
    %4697 = vmatprep.subr.bf16.mxu0 %v3297
    %4698 = vmatpush1.bf16.msra.mxu0 %v3296
    %4699 = vmatprep.subr.bf16.mxu0 %v3299
    %4700 = vmatpush1.bf16.msra.mxu0 %v3298
    %4701 = vmatprep.subr.bf16.mxu0 %v3301
    %4702 = vmatpush1.bf16.msra.mxu0 %v3300
    %4703 = vmatprep.mubr.bf16.mxu0 %v997
    %4704 = vmatmul.mubr.bf16.gmra.mrb[0].mxu0 %v996
    %v4705 = vpop.f32.mrb[0].mxu0
    %v4706 = vadd.f32 %v4655, %v4705
    %v4707 = vpop.f32.mrb[0].mxu0
    %v4708 = vadd.f32 %v4657, %v4707
    %v4709 = vpop.f32.mrb[0].mxu0
    %v4710 = vadd.f32 %v4659, %v4709
    %v4711 = vpop.f32.mrb[0].mxu0
    %v4712 = vadd.f32 %v4661, %v4711
    %4713 = vmatprep.mubr.bf16.mxu0 %v1039
    %4714 = vmatmul.mubr.bf16.gmra.mrb[0].mxu0 %v1038
    %v4715 = vpop.f32.mrb[0].mxu0
    %v4716 = vadd.f32 %v4665, %v4715
    %v4717 = vpop.f32.mrb[0].mxu0
    %v4718 = vadd.f32 %v4667, %v4717
    %v4719 = vpop.f32.mrb[0].mxu0
    %v4720 = vpop.f32.mrb[0].mxu0
    %4721 = vdwg.mxu0
    %4722 = vmatprep.subr.bf16.mxu0 %v3303
    %4723 = vmatpush1.bf16.msra.mxu0 %v3302
    %4724 = vmatprep.subr.bf16.mxu0 %v3305
    %4725 = vmatpush1.bf16.msra.mxu0 %v3304
    %4726 = vmatprep.subr.bf16.mxu0 %v3307
    %4727 = vmatpush1.bf16.msra.mxu0 %v3306
    %4728 = vmatprep.subr.bf16.mxu0 %v3309
    %4729 = vmatpush1.bf16.msra.mxu0 %v3308
    %4730 = vmatprep.subr.bf16.mxu0 %v3311
    %4731 = vmatpush1.bf16.msra.mxu0 %v3310
    %4732 = vmatprep.subr.bf16.mxu0 %v3313
    %4733 = vmatpush1.bf16.msra.mxu0 %v3312
    %4734 = vmatprep.subr.bf16.mxu0 %v3315
    %4735 = vmatpush1.bf16.msra.mxu0 %v3314
    %4736 = vmatprep.subr.bf16.mxu0 %v3317
    %4737 = vmatpush1.bf16.msra.mxu0 %v3316
    %4738 = vmatprep.subr.bf16.mxu0 %v3319
    %4739 = vmatpush1.bf16.msra.mxu0 %v3318
    %4740 = vmatprep.subr.bf16.mxu0 %v3321
    %4741 = vmatpush1.bf16.msra.mxu0 %v3320
    %4742 = vmatprep.subr.bf16.mxu0 %v3323
    %4743 = vmatpush1.bf16.msra.mxu0 %v3322
    %4744 = vmatprep.subr.bf16.mxu0 %v3325
    %4745 = vmatpush1.bf16.msra.mxu0 %v3324
    %4746 = vmatprep.subr.bf16.mxu0 %v3327
    %4747 = vmatpush1.bf16.msra.mxu0 %v3326
    %4748 = vmatprep.subr.bf16.mxu0 %v3329
    %4749 = vmatpush1.bf16.msra.mxu0 %v3328
    %4750 = vmatprep.subr.bf16.mxu0 %v3331
    %4751 = vmatpush1.bf16.msra.mxu0 %v3330
    %4752 = vmatprep.subr.bf16.mxu0 %v3333
    %4753 = vmatpush1.bf16.msra.mxu0 %v3332
    %4754 = vmatprep.mubr.bf16.mxu0 %v999
    %4755 = vmatmul.mubr.bf16.gmra.mrb[0].mxu0 %v998
    %v4756 = vpop.f32.mrb[0].mxu0
    %v4757 = vadd.f32 %v4706, %v4756
    %v4758 = vpop.f32.mrb[0].mxu0
    %v4759 = vadd.f32 %v4708, %v4758
    %v4760 = vpop.f32.mrb[0].mxu0
    %v4761 = vadd.f32 %v4710, %v4760
    %v4762 = vpop.f32.mrb[0].mxu0
    %v4763 = vadd.f32 %v4712, %v4762
    %4764 = vmatprep.mubr.bf16.mxu0 %v1041
    %4765 = vmatmul.mubr.bf16.gmra.mrb[0].mxu0 %v1040
    %v4766 = vpop.f32.mrb[0].mxu0
    %v4767 = vadd.f32 %v4716, %v4766
    %v4768 = vpop.f32.mrb[0].mxu0
    %v4769 = vadd.f32 %v4718, %v4768
    %v4770 = vpop.f32.mrb[0].mxu0
    %v4771 = vpop.f32.mrb[0].mxu0
    %4772 = vdwg.mxu0
    %4773 = vmatprep.subr.bf16.mxu0 %v3335
    %4774 = vmatpush1.bf16.msra.mxu0 %v3334
    %4775 = vmatprep.subr.bf16.mxu0 %v3337
    %4776 = vmatpush1.bf16.msra.mxu0 %v3336
    %4777 = vmatprep.subr.bf16.mxu0 %v3339
    %4778 = vmatpush1.bf16.msra.mxu0 %v3338
    %4779 = vmatprep.subr.bf16.mxu0 %v3341
    %4780 = vmatpush1.bf16.msra.mxu0 %v3340
    %4781 = vmatprep.subr.bf16.mxu0 %v3343
    %4782 = vmatpush1.bf16.msra.mxu0 %v3342
    %4783 = vmatprep.subr.bf16.mxu0 %v3345
    %4784 = vmatpush1.bf16.msra.mxu0 %v3344
    %4785 = vmatprep.subr.bf16.mxu0 %v3347
    %4786 = vmatpush1.bf16.msra.mxu0 %v3346
    %4787 = vmatprep.subr.bf16.mxu0 %v3349
    %4788 = vmatpush1.bf16.msra.mxu0 %v3348
    %4789 = vmatprep.subr.bf16.mxu0 %v3351
    %4790 = vmatpush1.bf16.msra.mxu0 %v3350
    %4791 = vmatprep.subr.bf16.mxu0 %v3353
    %4792 = vmatpush1.bf16.msra.mxu0 %v3352
    %4793 = vmatprep.subr.bf16.mxu0 %v3355
    %4794 = vmatpush1.bf16.msra.mxu0 %v3354
    %4795 = vmatprep.subr.bf16.mxu0 %v3357
    %4796 = vmatpush1.bf16.msra.mxu0 %v3356
    %4797 = vmatprep.subr.bf16.mxu0 %v3359
    %4798 = vmatpush1.bf16.msra.mxu0 %v3358
    %4799 = vmatprep.subr.bf16.mxu0 %v3361
    %4800 = vmatpush1.bf16.msra.mxu0 %v3360
    %4801 = vmatprep.subr.bf16.mxu0 %v3363
    %4802 = vmatpush1.bf16.msra.mxu0 %v3362
    %4803 = vmatprep.subr.bf16.mxu0 %v3365
    %4804 = vmatpush1.bf16.msra.mxu0 %v3364
    %4805 = vmatprep.mubr.bf16.mxu0 %v1001
    %4806 = vmatmul.mubr.bf16.gmra.mrb[0].mxu0 %v1000
    %v4807 = vpop.f32.mrb[0].mxu0
    %v4808 = vadd.f32 %v4757, %v4807
    %v4809 = vpop.f32.mrb[0].mxu0
    %v4810 = vadd.f32 %v4759, %v4809
    %v4811 = vpop.f32.mrb[0].mxu0
    %v4812 = vadd.f32 %v4761, %v4811
    %v4813 = vpop.f32.mrb[0].mxu0
    %v4814 = vadd.f32 %v4763, %v4813
    %4815 = vmatprep.mubr.bf16.mxu0 %v1043
    %4816 = vmatmul.mubr.bf16.gmra.mrb[0].mxu0 %v1042
    %v4817 = vpop.f32.mrb[0].mxu0
    %v4818 = vadd.f32 %v4767, %v4817
    %v4819 = vpop.f32.mrb[0].mxu0
    %v4820 = vadd.f32 %v4769, %v4819
    %v4821 = vpop.f32.mrb[0].mxu0
    %v4822 = vpop.f32.mrb[0].mxu0
    %4823 = vdwg.mxu0
    %4824 = vmatprep.subr.bf16.mxu0 %v3367
    %4825 = vmatpush1.bf16.msra.mxu0 %v3366
    %4826 = vmatprep.subr.bf16.mxu0 %v3369
    %4827 = vmatpush1.bf16.msra.mxu0 %v3368
    %4828 = vmatprep.subr.bf16.mxu0 %v3371
    %4829 = vmatpush1.bf16.msra.mxu0 %v3370
    %4830 = vmatprep.subr.bf16.mxu0 %v3373
    %4831 = vmatpush1.bf16.msra.mxu0 %v3372
    %4832 = vmatprep.subr.bf16.mxu0 %v3375
    %4833 = vmatpush1.bf16.msra.mxu0 %v3374
    %4834 = vmatprep.subr.bf16.mxu0 %v3377
    %4835 = vmatpush1.bf16.msra.mxu0 %v3376
    %4836 = vmatprep.subr.bf16.mxu0 %v3379
    %4837 = vmatpush1.bf16.msra.mxu0 %v3378
    %4838 = vmatprep.subr.bf16.mxu0 %v3381
    %4839 = vmatpush1.bf16.msra.mxu0 %v3380
    %4840 = vmatprep.subr.bf16.mxu0 %v3383
    %4841 = vmatpush1.bf16.msra.mxu0 %v3382
    %4842 = vmatprep.subr.bf16.mxu0 %v3385
    %4843 = vmatpush1.bf16.msra.mxu0 %v3384
    %4844 = vmatprep.subr.bf16.mxu0 %v3387
    %4845 = vmatpush1.bf16.msra.mxu0 %v3386
    %4846 = vmatprep.subr.bf16.mxu0 %v3389
    %4847 = vmatpush1.bf16.msra.mxu0 %v3388
    %4848 = vmatprep.subr.bf16.mxu0 %v3391
    %4849 = vmatpush1.bf16.msra.mxu0 %v3390
    %4850 = vmatprep.subr.bf16.mxu0 %v3393
    %4851 = vmatpush1.bf16.msra.mxu0 %v3392
    %4852 = vmatprep.subr.bf16.mxu0 %v3395
    %4853 = vmatpush1.bf16.msra.mxu0 %v3394
    %4854 = vmatprep.subr.bf16.mxu0 %v3397
    %4855 = vmatpush1.bf16.msra.mxu0 %v3396
    %4856 = vmatprep.mubr.bf16.mxu0 %v1003
    %4857 = vmatmul.mubr.bf16.gmra.mrb[0].mxu0 %v1002
    %v4858 = vpop.f32.mrb[0].mxu0
    %v4859 = vadd.f32 %v4808, %v4858
    %v4860 = vpop.f32.mrb[0].mxu0
    %v4861 = vadd.f32 %v4810, %v4860
    %v4862 = vpop.f32.mrb[0].mxu0
    %v4863 = vadd.f32 %v4812, %v4862
    %v4864 = vpop.f32.mrb[0].mxu0
    %v4865 = vadd.f32 %v4814, %v4864
    %4866 = vmatprep.mubr.bf16.mxu0 %v1045
    %4867 = vmatmul.mubr.bf16.gmra.mrb[0].mxu0 %v1044
    %v4868 = vpop.f32.mrb[0].mxu0
    %v4869 = vadd.f32 %v4818, %v4868
    %v4870 = vpop.f32.mrb[0].mxu0
    %v4871 = vadd.f32 %v4820, %v4870
    %v4872 = vpop.f32.mrb[0].mxu0
    %v4873 = vpop.f32.mrb[0].mxu0
    %4874 = vdwg.mxu0
    %4875 = vmatprep.subr.bf16.mxu0 %v3399
    %4876 = vmatpush1.bf16.msra.mxu0 %v3398
    %4877 = vmatprep.subr.bf16.mxu0 %v3401
    %4878 = vmatpush1.bf16.msra.mxu0 %v3400
    %4879 = vmatprep.subr.bf16.mxu0 %v3403
    %4880 = vmatpush1.bf16.msra.mxu0 %v3402
    %4881 = vmatprep.subr.bf16.mxu0 %v3405
    %4882 = vmatpush1.bf16.msra.mxu0 %v3404
    %4883 = vmatprep.subr.bf16.mxu0 %v3407
    %4884 = vmatpush1.bf16.msra.mxu0 %v3406
    %4885 = vmatprep.subr.bf16.mxu0 %v3409
    %4886 = vmatpush1.bf16.msra.mxu0 %v3408
    %4887 = vmatprep.subr.bf16.mxu0 %v3411
    %4888 = vmatpush1.bf16.msra.mxu0 %v3410
    %4889 = vmatprep.subr.bf16.mxu0 %v3413
    %4890 = vmatpush1.bf16.msra.mxu0 %v3412
    %4891 = vmatprep.subr.bf16.mxu0 %v3415
    %4892 = vmatpush1.bf16.msra.mxu0 %v3414
    %4893 = vmatprep.subr.bf16.mxu0 %v3417
    %4894 = vmatpush1.bf16.msra.mxu0 %v3416
    %4895 = vmatprep.subr.bf16.mxu0 %v3419
    %4896 = vmatpush1.bf16.msra.mxu0 %v3418
    %4897 = vmatprep.subr.bf16.mxu0 %v3421
    %4898 = vmatpush1.bf16.msra.mxu0 %v3420
    %4899 = vmatprep.subr.bf16.mxu0 %v3423
    %4900 = vmatpush1.bf16.msra.mxu0 %v3422
    %4901 = vmatprep.subr.bf16.mxu0 %v3425
    %4902 = vmatpush1.bf16.msra.mxu0 %v3424
    %4903 = vmatprep.subr.bf16.mxu0 %v3427
    %4904 = vmatpush1.bf16.msra.mxu0 %v3426
    %4905 = vmatprep.subr.bf16.mxu0 %v3429
    %4906 = vmatpush1.bf16.msra.mxu0 %v3428
    %4907 = vmatprep.mubr.bf16.mxu0 %v1005
    %4908 = vmatmul.mubr.bf16.gmra.mrb[0].mxu0 %v1004
    %v4909 = vpop.f32.mrb[0].mxu0
    %v4910 = vadd.f32 %v4859, %v4909
    %v4911 = vpop.f32.mrb[0].mxu0
    %v4912 = vadd.f32 %v4861, %v4911
    %v4913 = vpop.f32.mrb[0].mxu0
    %v4914 = vadd.f32 %v4863, %v4913
    %v4915 = vpop.f32.mrb[0].mxu0
    %v4916 = vadd.f32 %v4865, %v4915
    %4917 = vmatprep.mubr.bf16.mxu0 %v1047
    %4918 = vmatmul.mubr.bf16.gmra.mrb[0].mxu0 %v1046
    %v4919 = vpop.f32.mrb[0].mxu0
    %v4920 = vadd.f32 %v4869, %v4919
    %v4921 = vpop.f32.mrb[0].mxu0
    %v4922 = vadd.f32 %v4871, %v4921
    %v4923 = vpop.f32.mrb[0].mxu0
    %v4924 = vpop.f32.mrb[0].mxu0
    %4925 = vdwg.mxu0
    %4926 = vmatprep.subr.bf16.mxu0 %v3431
    %4927 = vmatpush1.bf16.msra.mxu0 %v3430
    %4928 = vmatprep.subr.bf16.mxu0 %v3433
    %4929 = vmatpush1.bf16.msra.mxu0 %v3432
    %4930 = vmatprep.subr.bf16.mxu0 %v3435
    %4931 = vmatpush1.bf16.msra.mxu0 %v3434
    %4932 = vmatprep.subr.bf16.mxu0 %v3437
    %4933 = vmatpush1.bf16.msra.mxu0 %v3436
    %4934 = vmatprep.subr.bf16.mxu0 %v3439
    %4935 = vmatpush1.bf16.msra.mxu0 %v3438
    %4936 = vmatprep.subr.bf16.mxu0 %v3441
    %4937 = vmatpush1.bf16.msra.mxu0 %v3440
    %4938 = vmatprep.subr.bf16.mxu0 %v3443
    %4939 = vmatpush1.bf16.msra.mxu0 %v3442
    %4940 = vmatprep.subr.bf16.mxu0 %v3445
    %4941 = vmatpush1.bf16.msra.mxu0 %v3444
    %4942 = vmatprep.subr.bf16.mxu0 %v3447
    %4943 = vmatpush1.bf16.msra.mxu0 %v3446
    %4944 = vmatprep.subr.bf16.mxu0 %v3449
    %4945 = vmatpush1.bf16.msra.mxu0 %v3448
    %4946 = vmatprep.subr.bf16.mxu0 %v3451
    %4947 = vmatpush1.bf16.msra.mxu0 %v3450
    %4948 = vmatprep.subr.bf16.mxu0 %v3453
    %4949 = vmatpush1.bf16.msra.mxu0 %v3452
    %4950 = vmatprep.subr.bf16.mxu0 %v3455
    %4951 = vmatpush1.bf16.msra.mxu0 %v3454
    %4952 = vmatprep.subr.bf16.mxu0 %v3457
    %4953 = vmatpush1.bf16.msra.mxu0 %v3456
    %4954 = vmatprep.subr.bf16.mxu0 %v3459
    %4955 = vmatpush1.bf16.msra.mxu0 %v3458
    %4956 = vmatprep.subr.bf16.mxu0 %v3461
    %4957 = vmatpush1.bf16.msra.mxu0 %v3460
    %4958 = vmatprep.mubr.bf16.mxu0 %v1007
    %4959 = vmatmul.mubr.bf16.gmra.mrb[0].mxu0 %v1006
    %v4960 = vpop.f32.mrb[0].mxu0
    %v4961 = vadd.f32 %v4910, %v4960
    %v4962 = vpop.f32.mrb[0].mxu0
    %v4963 = vadd.f32 %v4912, %v4962
    %v4964 = vpop.f32.mrb[0].mxu0
    %v4965 = vadd.f32 %v4914, %v4964
    %v4966 = vpop.f32.mrb[0].mxu0
    %v4967 = vadd.f32 %v4916, %v4966
    %4968 = vmatprep.mubr.bf16.mxu0 %v1049
    %4969 = vmatmul.mubr.bf16.gmra.mrb[0].mxu0 %v1048
    %v4970 = vpop.f32.mrb[0].mxu0
    %v4971 = vadd.f32 %v4920, %v4970
    %v4972 = vpop.f32.mrb[0].mxu0
    %v4973 = vadd.f32 %v4922, %v4972
    %v4974 = vpop.f32.mrb[0].mxu0
    %v4975 = vpop.f32.mrb[0].mxu0
    %4976 = vdwg.mxu0
    %4977 = vmatprep.subr.bf16.mxu0 %v3463
    %4978 = vmatpush1.bf16.msra.mxu0 %v3462
    %4979 = vmatprep.subr.bf16.mxu0 %v3465
    %4980 = vmatpush1.bf16.msra.mxu0 %v3464
    %4981 = vmatprep.subr.bf16.mxu0 %v3467
    %4982 = vmatpush1.bf16.msra.mxu0 %v3466
    %4983 = vmatprep.subr.bf16.mxu0 %v3469
    %4984 = vmatpush1.bf16.msra.mxu0 %v3468
    %4985 = vmatprep.subr.bf16.mxu0 %v3471
    %4986 = vmatpush1.bf16.msra.mxu0 %v3470
    %4987 = vmatprep.subr.bf16.mxu0 %v3473
    %4988 = vmatpush1.bf16.msra.mxu0 %v3472
    %4989 = vmatprep.subr.bf16.mxu0 %v3475
    %4990 = vmatpush1.bf16.msra.mxu0 %v3474
    %4991 = vmatprep.subr.bf16.mxu0 %v3477
    %4992 = vmatpush1.bf16.msra.mxu0 %v3476
    %4993 = vmatprep.subr.bf16.mxu0 %v3479
    %4994 = vmatpush1.bf16.msra.mxu0 %v3478
    %4995 = vmatprep.subr.bf16.mxu0 %v3481
    %4996 = vmatpush1.bf16.msra.mxu0 %v3480
    %4997 = vmatprep.subr.bf16.mxu0 %v3483
    %4998 = vmatpush1.bf16.msra.mxu0 %v3482
    %4999 = vmatprep.subr.bf16.mxu0 %v3485
    %5000 = vmatpush1.bf16.msra.mxu0 %v3484
    %5001 = vmatprep.subr.bf16.mxu0 %v3487
    %5002 = vmatpush1.bf16.msra.mxu0 %v3486
    %5003 = vmatprep.subr.bf16.mxu0 %v3489
    %5004 = vmatpush1.bf16.msra.mxu0 %v3488
    %5005 = vmatprep.subr.bf16.mxu0 %v3491
    %5006 = vmatpush1.bf16.msra.mxu0 %v3490
    %5007 = vmatprep.subr.bf16.mxu0 %v3493
    %5008 = vmatpush1.bf16.msra.mxu0 %v3492
    %5009 = vmatprep.mubr.bf16.mxu0 %v1009
    %5010 = vmatmul.mubr.bf16.gmra.mrb[0].mxu0 %v1008
    %v5011 = vpop.f32.mrb[0].mxu0
    %v5012 = vadd.f32 %v4961, %v5011
    %v5013 = vpop.f32.mrb[0].mxu0
    %v5014 = vadd.f32 %v4963, %v5013
    %v5015 = vpop.f32.mrb[0].mxu0
    %v5016 = vadd.f32 %v4965, %v5015
    %v5017 = vpop.f32.mrb[0].mxu0
    %v5018 = vadd.f32 %v4967, %v5017
    %5019 = vmatprep.mubr.bf16.mxu0 %v1051
    %5020 = vmatmul.mubr.bf16.gmra.mrb[0].mxu0 %v1050
    %v5021 = vpop.f32.mrb[0].mxu0
    %v5022 = vadd.f32 %v4971, %v5021
    %v5023 = vpop.f32.mrb[0].mxu0
    %v5024 = vadd.f32 %v4973, %v5023
    %v5025 = vpop.f32.mrb[0].mxu0
    %v5026 = vpop.f32.mrb[0].mxu0
    %5027 = vdwg.mxu0
    %5028 = vmatprep.subr.bf16.mxu0 %v3495
    %5029 = vmatpush1.bf16.msra.mxu0 %v3494
    %5030 = vmatprep.subr.bf16.mxu0 %v3497
    %5031 = vmatpush1.bf16.msra.mxu0 %v3496
    %5032 = vmatprep.subr.bf16.mxu0 %v3499
    %5033 = vmatpush1.bf16.msra.mxu0 %v3498
    %5034 = vmatprep.subr.bf16.mxu0 %v3501
    %5035 = vmatpush1.bf16.msra.mxu0 %v3500
    %5036 = vmatprep.subr.bf16.mxu0 %v3503
    %5037 = vmatpush1.bf16.msra.mxu0 %v3502
    %5038 = vmatprep.subr.bf16.mxu0 %v3505
    %5039 = vmatpush1.bf16.msra.mxu0 %v3504
    %5040 = vmatprep.subr.bf16.mxu0 %v3507
    %5041 = vmatpush1.bf16.msra.mxu0 %v3506
    %5042 = vmatprep.subr.bf16.mxu0 %v3509
    %5043 = vmatpush1.bf16.msra.mxu0 %v3508
    %5044 = vmatprep.subr.bf16.mxu0 %v3511
    %5045 = vmatpush1.bf16.msra.mxu0 %v3510
    %5046 = vmatprep.subr.bf16.mxu0 %v3513
    %5047 = vmatpush1.bf16.msra.mxu0 %v3512
    %5048 = vmatprep.subr.bf16.mxu0 %v3515
    %5049 = vmatpush1.bf16.msra.mxu0 %v3514
    %5050 = vmatprep.subr.bf16.mxu0 %v3517
    %5051 = vmatpush1.bf16.msra.mxu0 %v3516
    %5052 = vmatprep.subr.bf16.mxu0 %v3519
    %5053 = vmatpush1.bf16.msra.mxu0 %v3518
    %5054 = vmatprep.subr.bf16.mxu0 %v3521
    %5055 = vmatpush1.bf16.msra.mxu0 %v3520
    %5056 = vmatprep.subr.bf16.mxu0 %v3523
    %5057 = vmatpush1.bf16.msra.mxu0 %v3522
    %5058 = vmatprep.subr.bf16.mxu0 %v3525
    %5059 = vmatpush1.bf16.msra.mxu0 %v3524
    %5060 = vmatprep.mubr.bf16.mxu0 %v1011
    %5061 = vmatmul.mubr.bf16.gmra.mrb[0].mxu0 %v1010
    %v5062 = vpop.f32.mrb[0].mxu0
    %v5063 = vadd.f32 %v5012, %v5062
    %v5064 = vpop.f32.mrb[0].mxu0
    %v5065 = vadd.f32 %v5014, %v5064
    %v5066 = vpop.f32.mrb[0].mxu0
    %v5067 = vadd.f32 %v5016, %v5066
    %v5068 = vpop.f32.mrb[0].mxu0
    %v5069 = vadd.f32 %v5018, %v5068
    %5070 = vmatprep.mubr.bf16.mxu0 %v1053
    %5071 = vmatmul.mubr.bf16.gmra.mrb[0].mxu0 %v1052
    %v5072 = vpop.f32.mrb[0].mxu0
    %v5073 = vadd.f32 %v5022, %v5072
    %v5074 = vpop.f32.mrb[0].mxu0
    %v5075 = vadd.f32 %v5024, %v5074
    %v5076 = vpop.f32.mrb[0].mxu0
    %v5077 = vpop.f32.mrb[0].mxu0
    %5078 = vdwg.mxu0
    %5079 = vmatprep.subr.bf16.mxu0 %v3527
    %5080 = vmatpush1.bf16.msra.mxu0 %v3526
    %5081 = vmatprep.subr.bf16.mxu0 %v3529
    %5082 = vmatpush1.bf16.msra.mxu0 %v3528
    %5083 = vmatprep.subr.bf16.mxu0 %v3531
    %5084 = vmatpush1.bf16.msra.mxu0 %v3530
    %5085 = vmatprep.subr.bf16.mxu0 %v3533
    %5086 = vmatpush1.bf16.msra.mxu0 %v3532
    %5087 = vmatprep.subr.bf16.mxu0 %v3535
    %5088 = vmatpush1.bf16.msra.mxu0 %v3534
    %5089 = vmatprep.subr.bf16.mxu0 %v3537
    %5090 = vmatpush1.bf16.msra.mxu0 %v3536
    %5091 = vmatprep.subr.bf16.mxu0 %v3539
    %5092 = vmatpush1.bf16.msra.mxu0 %v3538
    %5093 = vmatprep.subr.bf16.mxu0 %v3541
    %5094 = vmatpush1.bf16.msra.mxu0 %v3540
    %5095 = vmatprep.subr.bf16.mxu0 %v3543
    %5096 = vmatpush1.bf16.msra.mxu0 %v3542
    %5097 = vmatprep.subr.bf16.mxu0 %v3545
    %5098 = vmatpush1.bf16.msra.mxu0 %v3544
    %5099 = vmatprep.subr.bf16.mxu0 %v3547
    %5100 = vmatpush1.bf16.msra.mxu0 %v3546
    %5101 = vmatprep.subr.bf16.mxu0 %v3549
    %5102 = vmatpush1.bf16.msra.mxu0 %v3548
    %5103 = vmatprep.subr.bf16.mxu0 %v3551
    %5104 = vmatpush1.bf16.msra.mxu0 %v3550
    %5105 = vmatprep.subr.bf16.mxu0 %v3553
    %5106 = vmatpush1.bf16.msra.mxu0 %v3552
    %5107 = vmatprep.subr.bf16.mxu0 %v3555
    %5108 = vmatpush1.bf16.msra.mxu0 %v3554
    %5109 = vmatprep.subr.bf16.mxu0 %v3557
    %5110 = vmatpush1.bf16.msra.mxu0 %v3556
    %5111 = vmatprep.mubr.bf16.mxu0 %v1013
    %5112 = vmatmul.mubr.bf16.gmra.mrb[0].mxu0 %v1012
    %v5113 = vpop.f32.mrb[0].mxu0
    %v5114 = vadd.f32 %v5063, %v5113
    %v5115 = vpop.f32.mrb[0].mxu0
    %v5116 = vadd.f32 %v5065, %v5115
    %v5117 = vpop.f32.mrb[0].mxu0
    %v5118 = vadd.f32 %v5067, %v5117
    %v5119 = vpop.f32.mrb[0].mxu0
    %v5120 = vadd.f32 %v5069, %v5119
    %5121 = vmatprep.mubr.bf16.mxu0 %v1055
    %5122 = vmatmul.mubr.bf16.gmra.mrb[0].mxu0 %v1054
    %v5123 = vpop.f32.mrb[0].mxu0
    %v5124 = vadd.f32 %v5073, %v5123
    %v5125 = vpop.f32.mrb[0].mxu0
    %v5126 = vadd.f32 %v5075, %v5125
    %v5127 = vpop.f32.mrb[0].mxu0
    %v5128 = vpop.f32.mrb[0].mxu0
    %5129 = vdwg.mxu0
    %5130 = vmatprep.subr.bf16.mxu0 %v3559
    %5131 = vmatpush1.bf16.msra.mxu0 %v3558
    %5132 = vmatprep.subr.bf16.mxu0 %v3561
    %5133 = vmatpush1.bf16.msra.mxu0 %v3560
    %5134 = vmatprep.subr.bf16.mxu0 %v3563
    %5135 = vmatpush1.bf16.msra.mxu0 %v3562
    %5136 = vmatprep.subr.bf16.mxu0 %v3565
    %5137 = vmatpush1.bf16.msra.mxu0 %v3564
    %5138 = vmatprep.subr.bf16.mxu0 %v3567
    %5139 = vmatpush1.bf16.msra.mxu0 %v3566
    %5140 = vmatprep.subr.bf16.mxu0 %v3569
    %5141 = vmatpush1.bf16.msra.mxu0 %v3568
    %5142 = vmatprep.subr.bf16.mxu0 %v3571
    %5143 = vmatpush1.bf16.msra.mxu0 %v3570
    %5144 = vmatprep.subr.bf16.mxu0 %v3573
    %5145 = vmatpush1.bf16.msra.mxu0 %v3572
    %5146 = vmatprep.subr.bf16.mxu0 %v3575
    %5147 = vmatpush1.bf16.msra.mxu0 %v3574
    %5148 = vmatprep.subr.bf16.mxu0 %v3577
    %5149 = vmatpush1.bf16.msra.mxu0 %v3576
    %5150 = vmatprep.subr.bf16.mxu0 %v3579
    %5151 = vmatpush1.bf16.msra.mxu0 %v3578
    %5152 = vmatprep.subr.bf16.mxu0 %v3581
    %5153 = vmatpush1.bf16.msra.mxu0 %v3580
    %5154 = vmatprep.subr.bf16.mxu0 %v3583
    %5155 = vmatpush1.bf16.msra.mxu0 %v3582
    %5156 = vmatprep.subr.bf16.mxu0 %v3585
    %5157 = vmatpush1.bf16.msra.mxu0 %v3584
    %5158 = vmatprep.subr.bf16.mxu0 %v3587
    %5159 = vmatpush1.bf16.msra.mxu0 %v3586
    %5160 = vmatprep.subr.bf16.mxu0 %v3589
    %5161 = vmatpush1.bf16.msra.mxu0 %v3588
    %5162 = vmatprep.mubr.bf16.mxu0 %v1015
    %5163 = vmatmul.mubr.bf16.gmra.mrb[0].mxu0 %v1014
    %v5164 = vpop.f32.mrb[0].mxu0
    %v5165 = vadd.f32 %v5114, %v5164
    %v5166 = vpop.f32.mrb[0].mxu0
    %v5167 = vadd.f32 %v5116, %v5166
    %v5168 = vpop.f32.mrb[0].mxu0
    %v5169 = vadd.f32 %v5118, %v5168
    %v5170 = vpop.f32.mrb[0].mxu0
    %v5171 = vadd.f32 %v5120, %v5170
    %5172 = vmatprep.mubr.bf16.mxu0 %v1057
    %5173 = vmatmul.mubr.bf16.gmra.mrb[0].mxu0 %v1056
    %v5174 = vpop.f32.mrb[0].mxu0
    %v5175 = vadd.f32 %v5124, %v5174
    %v5176 = vpop.f32.mrb[0].mxu0
    %v5177 = vadd.f32 %v5126, %v5176
    %v5178 = vpop.f32.mrb[0].mxu0
    %v5179 = vpop.f32.mrb[0].mxu0
    %5180 = vdwg.mxu0
    %5181 = vmatprep.subr.bf16.mxu0 %v3591
    %5182 = vmatpush1.bf16.msra.mxu0 %v3590
    %5183 = vmatprep.subr.bf16.mxu0 %v3593
    %5184 = vmatpush1.bf16.msra.mxu0 %v3592
    %5185 = vmatprep.subr.bf16.mxu0 %v3595
    %5186 = vmatpush1.bf16.msra.mxu0 %v3594
    %5187 = vmatprep.subr.bf16.mxu0 %v3597
    %5188 = vmatpush1.bf16.msra.mxu0 %v3596
    %5189 = vmatprep.subr.bf16.mxu0 %v3599
    %5190 = vmatpush1.bf16.msra.mxu0 %v3598
    %5191 = vmatprep.subr.bf16.mxu0 %v3601
    %5192 = vmatpush1.bf16.msra.mxu0 %v3600
    %5193 = vmatprep.subr.bf16.mxu0 %v3603
    %5194 = vmatpush1.bf16.msra.mxu0 %v3602
    %5195 = vmatprep.subr.bf16.mxu0 %v3605
    %5196 = vmatpush1.bf16.msra.mxu0 %v3604
    %5197 = vmatprep.subr.bf16.mxu0 %v3607
    %5198 = vmatpush1.bf16.msra.mxu0 %v3606
    %5199 = vmatprep.subr.bf16.mxu0 %v3609
    %5200 = vmatpush1.bf16.msra.mxu0 %v3608
    %5201 = vmatprep.subr.bf16.mxu0 %v3611
    %5202 = vmatpush1.bf16.msra.mxu0 %v3610
    %5203 = vmatprep.subr.bf16.mxu0 %v3613
    %5204 = vmatpush1.bf16.msra.mxu0 %v3612
    %5205 = vmatprep.subr.bf16.mxu0 %v3615
    %5206 = vmatpush1.bf16.msra.mxu0 %v3614
    %5207 = vmatprep.subr.bf16.mxu0 %v3617
    %5208 = vmatpush1.bf16.msra.mxu0 %v3616
    %5209 = vmatprep.subr.bf16.mxu0 %v3619
    %5210 = vmatpush1.bf16.msra.mxu0 %v3618
    %5211 = vmatprep.subr.bf16.mxu0 %v3621
    %5212 = vmatpush1.bf16.msra.mxu0 %v3620
    %5213 = vmatprep.mubr.bf16.mxu0 %v1017
    %5214 = vmatmul.mubr.bf16.gmra.mrb[0].mxu0 %v1016
    %v5215 = vpop.f32.mrb[0].mxu0
    %v5216 = vadd.f32 %v5165, %v5215
    %v5217 = vpop.f32.mrb[0].mxu0
    %v5218 = vadd.f32 %v5167, %v5217
    %v5219 = vpop.f32.mrb[0].mxu0
    %v5220 = vadd.f32 %v5169, %v5219
    %v5221 = vpop.f32.mrb[0].mxu0
    %v5222 = vadd.f32 %v5171, %v5221
    %5223 = vmatprep.mubr.bf16.mxu0 %v1059
    %5224 = vmatmul.mubr.bf16.gmra.mrb[0].mxu0 %v1058
    %v5225 = vpop.f32.mrb[0].mxu0
    %v5226 = vadd.f32 %v5175, %v5225
    %v5227 = vpop.f32.mrb[0].mxu0
    %v5228 = vadd.f32 %v5177, %v5227
    %v5229 = vpop.f32.mrb[0].mxu0
    %v5230 = vpop.f32.mrb[0].mxu0
    %5231 = vdwg.mxu0
    %5232 = vmatprep.subr.bf16.mxu0 %v3623
    %5233 = vmatpush1.bf16.msra.mxu0 %v3622
    %5234 = vmatprep.subr.bf16.mxu0 %v3625
    %5235 = vmatpush1.bf16.msra.mxu0 %v3624
    %5236 = vmatprep.subr.bf16.mxu0 %v3627
    %5237 = vmatpush1.bf16.msra.mxu0 %v3626
    %5238 = vmatprep.subr.bf16.mxu0 %v3629
    %5239 = vmatpush1.bf16.msra.mxu0 %v3628
    %5240 = vmatprep.subr.bf16.mxu0 %v3631
    %5241 = vmatpush1.bf16.msra.mxu0 %v3630
    %5242 = vmatprep.subr.bf16.mxu0 %v3633
    %5243 = vmatpush1.bf16.msra.mxu0 %v3632
    %5244 = vmatprep.subr.bf16.mxu0 %v3635
    %5245 = vmatpush1.bf16.msra.mxu0 %v3634
    %5246 = vmatprep.subr.bf16.mxu0 %v3637
    %5247 = vmatpush1.bf16.msra.mxu0 %v3636
    %5248 = vmatprep.subr.bf16.mxu0 %v3639
    %5249 = vmatpush1.bf16.msra.mxu0 %v3638
    %5250 = vmatprep.subr.bf16.mxu0 %v3641
    %5251 = vmatpush1.bf16.msra.mxu0 %v3640
    %5252 = vmatprep.subr.bf16.mxu0 %v3643
    %5253 = vmatpush1.bf16.msra.mxu0 %v3642
    %5254 = vmatprep.subr.bf16.mxu0 %v3645
    %5255 = vmatpush1.bf16.msra.mxu0 %v3644
    %5256 = vmatprep.subr.bf16.mxu0 %v3647
    %5257 = vmatpush1.bf16.msra.mxu0 %v3646
    %5258 = vmatprep.subr.bf16.mxu0 %v3649
    %5259 = vmatpush1.bf16.msra.mxu0 %v3648
    %5260 = vmatprep.subr.bf16.mxu0 %v3651
    %5261 = vmatpush1.bf16.msra.mxu0 %v3650
    %5262 = vmatprep.subr.bf16.mxu0 %v3653
    %5263 = vmatpush1.bf16.msra.mxu0 %v3652
    %5264 = vmatprep.mubr.bf16.mxu0 %v1019
    %5265 = vmatmul.mubr.bf16.gmra.mrb[0].mxu0 %v1018
    %v5266 = vpop.f32.mrb[0].mxu0
    %v5267 = vadd.f32 %v5216, %v5266
    %v5268 = vpop.f32.mrb[0].mxu0
    %v5269 = vadd.f32 %v5218, %v5268
    %v5270 = vpop.f32.mrb[0].mxu0
    %v5271 = vadd.f32 %v5220, %v5270
    %v5272 = vpop.f32.mrb[0].mxu0
    %v5273 = vadd.f32 %v5222, %v5272
    %5274 = vmatprep.mubr.bf16.mxu0 %v1061
    %5275 = vmatmul.mubr.bf16.gmra.mrb[0].mxu0 %v1060
    %v5276 = vpop.f32.mrb[0].mxu0
    %v5277 = vadd.f32 %v5226, %v5276
    %v5278 = vpop.f32.mrb[0].mxu0
    %v5279 = vadd.f32 %v5228, %v5278
    %v5280 = vpop.f32.mrb[0].mxu0
    %v5281 = vpop.f32.mrb[0].mxu0
    %5282 = vdwg.mxu0
    %5283 = vmatprep.subr.bf16.mxu0 %v3655
    %5284 = vmatpush1.bf16.msra.mxu0 %v3654
    %5285 = vmatprep.subr.bf16.mxu0 %v3657
    %5286 = vmatpush1.bf16.msra.mxu0 %v3656
    %5287 = vmatprep.subr.bf16.mxu0 %v3659
    %5288 = vmatpush1.bf16.msra.mxu0 %v3658
    %5289 = vmatprep.subr.bf16.mxu0 %v3661
    %5290 = vmatpush1.bf16.msra.mxu0 %v3660
    %5291 = vmatprep.subr.bf16.mxu0 %v3663
    %5292 = vmatpush1.bf16.msra.mxu0 %v3662
    %5293 = vmatprep.subr.bf16.mxu0 %v3665
    %5294 = vmatpush1.bf16.msra.mxu0 %v3664
    %5295 = vmatprep.subr.bf16.mxu0 %v3667
    %5296 = vmatpush1.bf16.msra.mxu0 %v3666
    %5297 = vmatprep.subr.bf16.mxu0 %v3669
    %5298 = vmatpush1.bf16.msra.mxu0 %v3668
    %5299 = vmatprep.subr.bf16.mxu0 %v3671
    %5300 = vmatpush1.bf16.msra.mxu0 %v3670
    %5301 = vmatprep.subr.bf16.mxu0 %v3673
    %5302 = vmatpush1.bf16.msra.mxu0 %v3672
    %5303 = vmatprep.subr.bf16.mxu0 %v3675
    %5304 = vmatpush1.bf16.msra.mxu0 %v3674
    %5305 = vmatprep.subr.bf16.mxu0 %v3677
    %5306 = vmatpush1.bf16.msra.mxu0 %v3676
    %5307 = vmatprep.subr.bf16.mxu0 %v3679
    %5308 = vmatpush1.bf16.msra.mxu0 %v3678
    %5309 = vmatprep.subr.bf16.mxu0 %v3681
    %5310 = vmatpush1.bf16.msra.mxu0 %v3680
    %5311 = vmatprep.subr.bf16.mxu0 %v3683
    %5312 = vmatpush1.bf16.msra.mxu0 %v3682
    %5313 = vmatprep.subr.bf16.mxu0 %v3685
    %5314 = vmatpush1.bf16.msra.mxu0 %v3684
    %5315 = vmatprep.mubr.bf16.mxu0 %v1021
    %5316 = vmatmul.mubr.bf16.gmra.mrb[0].mxu0 %v1020
    %v5317 = vpop.f32.mrb[0].mxu0
    %v5318 = vadd.f32 %v5267, %v5317
    %v5319 = vpop.f32.mrb[0].mxu0
    %v5320 = vadd.f32 %v5269, %v5319
    %v5321 = vpop.f32.mrb[0].mxu0
    %v5322 = vadd.f32 %v5271, %v5321
    %v5323 = vpop.f32.mrb[0].mxu0
    %v5324 = vadd.f32 %v5273, %v5323
    %5325 = vmatprep.mubr.bf16.mxu0 %v1063
    %5326 = vmatmul.mubr.bf16.gmra.mrb[0].mxu0 %v1062
    %v5327 = vpop.f32.mrb[0].mxu0
    %v5328 = vadd.f32 %v5277, %v5327
    %v5329 = vpop.f32.mrb[0].mxu0
    %v5330 = vadd.f32 %v5279, %v5329
    %v5331 = vpop.f32.mrb[0].mxu0
    %v5332 = vpop.f32.mrb[0].mxu0
    %5333 = vdwg.mxu0
    %5334 = vmatprep.subr.bf16.mxu0 %v3687
    %5335 = vmatpush1.bf16.msra.mxu0 %v3686
    %5336 = vmatprep.subr.bf16.mxu0 %v3689
    %5337 = vmatpush1.bf16.msra.mxu0 %v3688
    %5338 = vmatprep.subr.bf16.mxu0 %v3691
    %5339 = vmatpush1.bf16.msra.mxu0 %v3690
    %5340 = vmatprep.subr.bf16.mxu0 %v3693
    %5341 = vmatpush1.bf16.msra.mxu0 %v3692
    %5342 = vmatprep.subr.bf16.mxu0 %v3695
    %5343 = vmatpush1.bf16.msra.mxu0 %v3694
    %5344 = vmatprep.subr.bf16.mxu0 %v3697
    %5345 = vmatpush1.bf16.msra.mxu0 %v3696
    %5346 = vmatprep.subr.bf16.mxu0 %v3699
    %5347 = vmatpush1.bf16.msra.mxu0 %v3698
    %5348 = vmatprep.subr.bf16.mxu0 %v3701
    %5349 = vmatpush1.bf16.msra.mxu0 %v3700
    %5350 = vmatprep.subr.bf16.mxu0 %v3703
    %5351 = vmatpush1.bf16.msra.mxu0 %v3702
    %5352 = vmatprep.subr.bf16.mxu0 %v3705
    %5353 = vmatpush1.bf16.msra.mxu0 %v3704
    %5354 = vmatprep.subr.bf16.mxu0 %v3707
    %5355 = vmatpush1.bf16.msra.mxu0 %v3706
    %5356 = vmatprep.subr.bf16.mxu0 %v3709
    %5357 = vmatpush1.bf16.msra.mxu0 %v3708
    %5358 = vmatprep.subr.bf16.mxu0 %v3711
    %5359 = vmatpush1.bf16.msra.mxu0 %v3710
    %5360 = vmatprep.subr.bf16.mxu0 %v3713
    %5361 = vmatpush1.bf16.msra.mxu0 %v3712
    %5362 = vmatprep.subr.bf16.mxu0 %v3715
    %5363 = vmatpush1.bf16.msra.mxu0 %v3714
    %5364 = vmatprep.subr.bf16.mxu0 %v3717
    %5365 = vmatpush1.bf16.msra.mxu0 %v3716
    %5366 = vmatprep.mubr.bf16.mxu0 %v1023
    %5367 = vmatmul.mubr.bf16.gmra.mrb[0].mxu0 %v1022
    %v5368 = vpop.f32.mrb[0].mxu0
    %v5369 = vadd.f32 %v5318, %v5368
    %v5370 = vpop.f32.mrb[0].mxu0
    %v5371 = vadd.f32 %v5320, %v5370
    %v5372 = vpop.f32.mrb[0].mxu0
    %v5373 = vadd.f32 %v5322, %v5372
    %v5374 = vpop.f32.mrb[0].mxu0
    %v5375 = vadd.f32 %v5324, %v5374
    %5376 = vmatprep.mubr.bf16.mxu0 %v1065
    %5377 = vmatmul.mubr.bf16.gmra.mrb[0].mxu0 %v1064
    %v5378 = vpop.f32.mrb[0].mxu0
    %v5379 = vadd.f32 %v5328, %v5378
    %v5380 = vpop.f32.mrb[0].mxu0
    %v5381 = vadd.f32 %v5330, %v5380
    %v5382 = vpop.f32.mrb[0].mxu0
    %v5383 = vpop.f32.mrb[0].mxu0
    %5384 = vdwg.mxu0
    %5385 = vmatprep.subr.bf16.mxu0 %v3719
    %5386 = vmatpush1.bf16.msra.mxu0 %v3718
    %5387 = vmatprep.subr.bf16.mxu0 %v3721
    %5388 = vmatpush1.bf16.msra.mxu0 %v3720
    %5389 = vmatprep.subr.bf16.mxu0 %v3723
    %5390 = vmatpush1.bf16.msra.mxu0 %v3722
    %5391 = vmatprep.subr.bf16.mxu0 %v3725
    %5392 = vmatpush1.bf16.msra.mxu0 %v3724
    %5393 = vmatprep.subr.bf16.mxu0 %v3727
    %5394 = vmatpush1.bf16.msra.mxu0 %v3726
    %5395 = vmatprep.subr.bf16.mxu0 %v3729
    %5396 = vmatpush1.bf16.msra.mxu0 %v3728
    %5397 = vmatprep.subr.bf16.mxu0 %v3731
    %5398 = vmatpush1.bf16.msra.mxu0 %v3730
    %5399 = vmatprep.subr.bf16.mxu0 %v3733
    %5400 = vmatpush1.bf16.msra.mxu0 %v3732
    %5401 = vmatprep.subr.bf16.mxu0 %v3735
    %5402 = vmatpush1.bf16.msra.mxu0 %v3734
    %5403 = vmatprep.subr.bf16.mxu0 %v3737
    %5404 = vmatpush1.bf16.msra.mxu0 %v3736
    %5405 = vmatprep.subr.bf16.mxu0 %v3739
    %5406 = vmatpush1.bf16.msra.mxu0 %v3738
    %5407 = vmatprep.subr.bf16.mxu0 %v3741
    %5408 = vmatpush1.bf16.msra.mxu0 %v3740
    %5409 = vmatprep.subr.bf16.mxu0 %v3743
    %5410 = vmatpush1.bf16.msra.mxu0 %v3742
    %5411 = vmatprep.subr.bf16.mxu0 %v3745
    %5412 = vmatpush1.bf16.msra.mxu0 %v3744
    %5413 = vmatprep.subr.bf16.mxu0 %v3747
    %5414 = vmatpush1.bf16.msra.mxu0 %v3746
    %5415 = vmatprep.subr.bf16.mxu0 %v3749
    %5416 = vmatpush1.bf16.msra.mxu0 %v3748
    %5417 = vmatprep.mubr.bf16.mxu0 %v1025
    %5418 = vmatmul.mubr.bf16.gmra.mrb[0].mxu0 %v1024
    %v5419 = vpop.f32.mrb[0].mxu0
    %v5420 = vadd.f32 %v5369, %v5419
    %v5421 = vpop.f32.mrb[0].mxu0
    %v5422 = vadd.f32 %v5371, %v5421
    %v5423 = vpop.f32.mrb[0].mxu0
    %v5424 = vadd.f32 %v5373, %v5423
    %v5425 = vpop.f32.mrb[0].mxu0
    %v5426 = vadd.f32 %v5375, %v5425
    %5427 = vmatprep.mubr.bf16.mxu0 %v1067
    %5428 = vmatmul.mubr.bf16.gmra.mrb[0].mxu0 %v1066
    %v5429 = vpop.f32.mrb[0].mxu0
    %v5430 = vadd.f32 %v5379, %v5429
    %v5431 = vpop.f32.mrb[0].mxu0
    %v5432 = vadd.f32 %v5381, %v5431
    %v5433 = vpop.f32.mrb[0].mxu0
    %v5434 = vpop.f32.mrb[0].mxu0
    %5435 = vdwg.mxu0
    %5436 = vmatprep.subr.bf16.mxu0 %v3751
    %5437 = vmatpush1.bf16.msra.mxu0 %v3750
    %5438 = vmatprep.subr.bf16.mxu0 %v3753
    %5439 = vmatpush1.bf16.msra.mxu0 %v3752
    %5440 = vmatprep.subr.bf16.mxu0 %v3755
    %5441 = vmatpush1.bf16.msra.mxu0 %v3754
    %5442 = vmatprep.subr.bf16.mxu0 %v3757
    %5443 = vmatpush1.bf16.msra.mxu0 %v3756
    %5444 = vmatprep.subr.bf16.mxu0 %v3759
    %5445 = vmatpush1.bf16.msra.mxu0 %v3758
    %5446 = vmatprep.subr.bf16.mxu0 %v3761
    %5447 = vmatpush1.bf16.msra.mxu0 %v3760
    %5448 = vmatprep.subr.bf16.mxu0 %v3763
    %5449 = vmatpush1.bf16.msra.mxu0 %v3762
    %5450 = vmatprep.subr.bf16.mxu0 %v3765
    %5451 = vmatpush1.bf16.msra.mxu0 %v3764
    %5452 = vmatprep.subr.bf16.mxu0 %v3767
    %5453 = vmatpush1.bf16.msra.mxu0 %v3766
    %5454 = vmatprep.subr.bf16.mxu0 %v3769
    %5455 = vmatpush1.bf16.msra.mxu0 %v3768
    %5456 = vmatprep.subr.bf16.mxu0 %v3771
    %5457 = vmatpush1.bf16.msra.mxu0 %v3770
    %5458 = vmatprep.subr.bf16.mxu0 %v3773
    %5459 = vmatpush1.bf16.msra.mxu0 %v3772
    %5460 = vmatprep.subr.bf16.mxu0 %v3775
    %5461 = vmatpush1.bf16.msra.mxu0 %v3774
    %5462 = vmatprep.subr.bf16.mxu0 %v3777
    %5463 = vmatpush1.bf16.msra.mxu0 %v3776
    %5464 = vmatprep.subr.bf16.mxu0 %v3779
    %5465 = vmatpush1.bf16.msra.mxu0 %v3778
    %5466 = vmatprep.subr.bf16.mxu0 %v3781
    %5467 = vmatpush1.bf16.msra.mxu0 %v3780
    %5468 = vmatprep.mubr.bf16.mxu0 %v1027
    %5469 = vmatmul.mubr.bf16.gmra.mrb[0].mxu0 %v1026
    %v5470 = vpop.f32.mrb[0].mxu0
    %v5471 = vadd.f32 %v5420, %v5470
    %v5472 = vpop.f32.mrb[0].mxu0
    %v5473 = vadd.f32 %v5422, %v5472
    %v5474 = vpop.f32.mrb[0].mxu0
    %v5475 = vadd.f32 %v5424, %v5474
    %v5476 = vpop.f32.mrb[0].mxu0
    %v5477 = vadd.f32 %v5426, %v5476
    %5478 = vmatprep.mubr.bf16.mxu0 %v1069
    %5479 = vmatmul.mubr.bf16.gmra.mrb[0].mxu0 %v1068
    %v5480 = vpop.f32.mrb[0].mxu0
    %v5481 = vadd.f32 %v5430, %v5480
    %v5482 = vpop.f32.mrb[0].mxu0
    %v5483 = vadd.f32 %v5432, %v5482
    %v5484 = vpop.f32.mrb[0].mxu0
    %v5485 = vpop.f32.mrb[0].mxu0
    %5486 = vdwg.mxu0
    %5487 = vmatprep.subr.bf16.mxu0 %v3783
    %5488 = vmatpush1.bf16.msra.mxu0 %v3782
    %5489 = vmatprep.subr.bf16.mxu0 %v3785
    %5490 = vmatpush1.bf16.msra.mxu0 %v3784
    %5491 = vmatprep.subr.bf16.mxu0 %v3787
    %5492 = vmatpush1.bf16.msra.mxu0 %v3786
    %5493 = vmatprep.subr.bf16.mxu0 %v3789
    %5494 = vmatpush1.bf16.msra.mxu0 %v3788
    %5495 = vmatprep.subr.bf16.mxu0 %v3791
    %5496 = vmatpush1.bf16.msra.mxu0 %v3790
    %5497 = vmatprep.subr.bf16.mxu0 %v3793
    %5498 = vmatpush1.bf16.msra.mxu0 %v3792
    %5499 = vmatprep.subr.bf16.mxu0 %v3795
    %5500 = vmatpush1.bf16.msra.mxu0 %v3794
    %5501 = vmatprep.subr.bf16.mxu0 %v3797
    %5502 = vmatpush1.bf16.msra.mxu0 %v3796
    %5503 = vmatprep.subr.bf16.mxu0 %v3799
    %5504 = vmatpush1.bf16.msra.mxu0 %v3798
    %5505 = vmatprep.subr.bf16.mxu0 %v3801
    %5506 = vmatpush1.bf16.msra.mxu0 %v3800
    %5507 = vmatprep.subr.bf16.mxu0 %v3803
    %5508 = vmatpush1.bf16.msra.mxu0 %v3802
    %5509 = vmatprep.subr.bf16.mxu0 %v3805
    %5510 = vmatpush1.bf16.msra.mxu0 %v3804
    %5511 = vmatprep.subr.bf16.mxu0 %v3807
    %5512 = vmatpush1.bf16.msra.mxu0 %v3806
    %5513 = vmatprep.subr.bf16.mxu0 %v3809
    %5514 = vmatpush1.bf16.msra.mxu0 %v3808
    %5515 = vmatprep.subr.bf16.mxu0 %v3811
    %5516 = vmatpush1.bf16.msra.mxu0 %v3810
    %5517 = vmatprep.subr.bf16.mxu0 %v3813
    %5518 = vmatpush1.bf16.msra.mxu0 %v3812
    %5519 = vmatprep.mubr.bf16.mxu0 %v1029
    %5520 = vmatmul.mubr.bf16.gmra.mrb[0].mxu0 %v1028
    %v5521 = vpop.f32.mrb[0].mxu0
    %v5522 = vadd.f32 %v5471, %v5521
    %v5523 = vpop.f32.mrb[0].mxu0
    %v5524 = vadd.f32 %v5473, %v5523
    %v5525 = vpop.f32.mrb[0].mxu0
    %v5526 = vadd.f32 %v5475, %v5525
    %v5527 = vpop.f32.mrb[0].mxu0
    %v5528 = vadd.f32 %v5477, %v5527
    %5529 = vmatprep.mubr.bf16.mxu0 %v1071
    %5530 = vmatmul.mubr.bf16.gmra.mrb[0].mxu0 %v1070
    %v5531 = vpop.f32.mrb[0].mxu0
    %v5532 = vadd.f32 %v5481, %v5531
    %v5533 = vpop.f32.mrb[0].mxu0
    %v5534 = vadd.f32 %v5483, %v5533
    %v5535 = vpop.f32.mrb[0].mxu0
    %v5536 = vpop.f32.mrb[0].mxu0
    %5537 = vdwg.mxu0
    %5538 = vmatprep.subr.bf16.mxu0 %v3815
    %5539 = vmatpush1.bf16.msra.mxu0 %v3814
    %5540 = vmatprep.subr.bf16.mxu0 %v3817
    %5541 = vmatpush1.bf16.msra.mxu0 %v3816
    %5542 = vmatprep.subr.bf16.mxu0 %v3819
    %5543 = vmatpush1.bf16.msra.mxu0 %v3818
    %5544 = vmatprep.subr.bf16.mxu0 %v3821
    %5545 = vmatpush1.bf16.msra.mxu0 %v3820
    %5546 = vmatprep.subr.bf16.mxu0 %v3823
    %5547 = vmatpush1.bf16.msra.mxu0 %v3822
    %5548 = vmatprep.subr.bf16.mxu0 %v3825
    %5549 = vmatpush1.bf16.msra.mxu0 %v3824
    %5550 = vmatprep.subr.bf16.mxu0 %v3827
    %5551 = vmatpush1.bf16.msra.mxu0 %v3826
    %5552 = vmatprep.subr.bf16.mxu0 %v3829
    %5553 = vmatpush1.bf16.msra.mxu0 %v3828
    %5554 = vmatprep.subr.bf16.mxu0 %v3831
    %5555 = vmatpush1.bf16.msra.mxu0 %v3830
    %5556 = vmatprep.subr.bf16.mxu0 %v3833
    %5557 = vmatpush1.bf16.msra.mxu0 %v3832
    %5558 = vmatprep.subr.bf16.mxu0 %v3835
    %5559 = vmatpush1.bf16.msra.mxu0 %v3834
    %5560 = vmatprep.subr.bf16.mxu0 %v3837
    %5561 = vmatpush1.bf16.msra.mxu0 %v3836
    %5562 = vmatprep.subr.bf16.mxu0 %v3839
    %5563 = vmatpush1.bf16.msra.mxu0 %v3838
    %5564 = vmatprep.subr.bf16.mxu0 %v3841
    %5565 = vmatpush1.bf16.msra.mxu0 %v3840
    %5566 = vmatprep.subr.bf16.mxu0 %v3843
    %5567 = vmatpush1.bf16.msra.mxu0 %v3842
    %5568 = vmatprep.subr.bf16.mxu0 %v3845
    %5569 = vmatpush1.bf16.msra.mxu0 %v3844
    %5570 = vmatprep.mubr.bf16.mxu0 %v1031
    %5571 = vmatmul.mubr.bf16.gmra.mrb[0].mxu0 %v1030
    %v5572 = vpop.f32.mrb[0].mxu0
    %v5573 = vadd.f32 %v5522, %v5572
    %v5574 = vpop.f32.mrb[0].mxu0
    %v5575 = vadd.f32 %v5524, %v5574
    %v5576 = vpop.f32.mrb[0].mxu0
    %v5577 = vadd.f32 %v5526, %v5576
    %v5578 = vpop.f32.mrb[0].mxu0
    %v5579 = vadd.f32 %v5528, %v5578
    %5580 = vmatprep.mubr.bf16.mxu0 %v1073
    %5581 = vmatmul.mubr.bf16.gmra.mrb[0].mxu0 %v1072
    %v5582 = vpop.f32.mrb[0].mxu0
    %v5583 = vadd.f32 %v5532, %v5582
    %v5584 = vpop.f32.mrb[0].mxu0
    %v5585 = vadd.f32 %v5534, %v5584
    %v5586 = vpop.f32.mrb[0].mxu0
    %v5587 = vpop.f32.mrb[0].mxu0
    %5588 = vdwg.mxu0
    %v5589 = vpack.c.bf16 %v5577, %v5573
    %v5590 = vpack.c.bf16 %v5579, %v5575
    %v5591 = vpack.c.bf16 %v5583, %v5583
    %v5592 = vpack.c.bf16 %v5585, %v5585
    %v5597 = vunpack.c.l.b16 %v5589
    %v5598 = vunpack.c.l.b16 %v5590
    %v5599 = vunpack.c.h.b16 %v5589
    %v5600 = vunpack.c.h.b16 %v5590
    %v5601 = vunpack.c.l.b16 %v5591
    %v5602 = vunpack.c.l.b16 %v5592
    %v5603 = vpack.c.b16 %v5598, %v5597
    %v5604 = vpack.c.b16 %v5600, %v5599
    %v5605 = vpack.c.b16 %v5602, %v5601
    %5609 = vst [vmem:[#allocation8] sm:$0xff] %v5603
    %5610 = vst [vmem:[#allocation8 + $0x8] sm:$0xff] %v5604
    %5611 = vst [vmem:[#allocation8 + $0x10] sm:$0xff] %v5605
    // Predicated region
    $region26: #{tpu_custom_call.1} parent=1 // pred_check
      _
    $region27: #{tpu_custom_call.1} parent=1 // pred_check_branch
      %5613 = sbr.rel (0) target = $region29
    $region28: #{tpu_custom_call.1} parent=1 // pred_region
      %s5615 = ssub.s32 384, 384
      %5616 = vsyncadd [#allocation4], %s5615
      %s5617 = sshll.u32 [#allocation8], 4
      %s5618 = int_to_ptr.vmem [resolvable:$true] %s5617
      %5623 = dma.vmem_to_hbm [thread:$0]  %s5618, 384, %s3, [#allocation4], 128, 128, 8
    $region29: #{tpu_custom_call.1} parent=1 // pred_fallthru
      _
    // Predicated region
    $region30: #{tpu_custom_call.1} parent=1 // pred_check
      _
    $region31: #{tpu_custom_call.1} parent=1 // pred_check_branch
      %5625 = sbr.rel (0) target = $region33
    $region32: #{tpu_custom_call.1} parent=1 // pred_region
      %5626 = dma.done [#allocation4], 384
    $region33: #{tpu_custom_call.1} parent=1 // pred_fallthru
      _
    %5627 = vsyncpa [#allocation3], 1
    %5628 = vsyncpa [#allocation6], 1
    %5629 = vsyncpa [#allocation4], 1

</llo_original>
